<compile_context>
chip_gen: v7x
topology: tpu7x:2x2x1
jax: 0.10.0
libtpu: 0.0.40
codegen_flags: <defaults>
</compile_context>

<pallas_src>
import jax
import jax.numpy as jnp
import numpy as np
from jax import lax
from jax.experimental import pallas as pl
from jax.experimental.pallas import tpu as pltpu


# ----------------------------------------------------------------------------
# Kernel
# ----------------------------------------------------------------------------
def _make_kernel(A2, P, Lp, has_pw, cdt):
    dn_nn = (((1,), (0,)), ((), ()))   # (M, K) @ (K, N)
    dn_nt = (((1,), (1,)), ((), ()))   # (M, K) @ (N, K)^T

    def kernel(*refs):
        if has_pw:
            (hfull_ref, hrows_ref, win_ref, bin_ref, wbig_ref,
             pw_ref, o_ref, nt_ref) = refs
        else:
            (hfull_ref, hrows_ref, win_ref, bin_ref, wbig_ref,
             o_ref, nt_ref) = refs
            pw_ref = None

        win_c = win_ref[...]          # (H, A2)   compute dtype (bf16)
        bin_f = bin_ref[...]          # (1, A2)   f32; col A is the constant-1 bias lane

        # ---- once per batch: build nt[a2', p*Lp + j] in the VMEM scratch --------
        @pl.when(pl.program_id(1) == 0)
        def _():
            # in_proj over the full (padded) sequence -> the "j" side
            ht_j = lax.dot_general(hfull_ref[0].astype(cdt), win_c, dn_nn,
                                   preferred_element_type=jnp.float32) + bin_f   # (Lp, A2)
            ht_j_c = ht_j.astype(cdt)
            # Fold out_proj's a1-contraction (and bout, via the bias lane) into j:
            #   big[p*A2 + a2', j] = sum_{a1'} w_big[p*A2 + a2', a1'] * ht_j[j, a1']
            big = lax.dot_general(wbig_ref[...], ht_j_c, dn_nt,
                                  preferred_element_type=jnp.float32)            # (P*A2, Lp)
            # Scatter each per-p row block into the lane-major (A2, P*Lp) scratch
            # (static, 128-aligned lane slices; done once per batch).
            for p in range(P):
                nt_ref[:, p * Lp:(p + 1) * Lp] = (
                    big[p * A2:(p + 1) * A2, :].astype(cdt))

        # ---- every step: i-side projection + ONE wide-N MXU matmul --------------
        ht_i = lax.dot_general(hrows_ref[0].astype(cdt), win_c, dn_nn,
                               preferred_element_type=jnp.float32) + bin_f       # (TL, A2)
        acc = lax.dot_general(ht_i.astype(cdt), nt_ref[...], dn_nn,
                              preferred_element_type=jnp.float32)                # (TL, P*Lp)
        if has_pw:
            acc = acc + pw_ref[0]                                                # residual
        o_ref[0] = acc.astype(o_ref.dtype)

    return kernel


# ----------------------------------------------------------------------------
# Generation-aware tiling / VMEM sizing
# ----------------------------------------------------------------------------
def _vmem_physical_bytes():
    try:
        info = pltpu.get_tpu_info()
        cap = getattr(info, "vmem_capacity_bytes", None)
        if cap:
            return int(cap)
    except Exception:
        pass
    return 64 << 20   # conservative fallback (v7x per-TC VMEM)


def _estimate_vmem_bytes(Lp, H, P, A2, TL, in_b, out_b, pw_b, cdt_b, has_pw):
    lane = 128
    pad = lambda n: -(-n // lane) * lane
    PLp = P * Lp
    e = 2 * (Lp * H + TL * H) * in_b                          # hidden blocks (double-buffered)
    e += 2 * (H * pad(A2) * cdt_b + pad(A2) * 4 + P * A2 * pad(A2) * cdt_b)   # params
    e += 2 * TL * PLp * out_b                                 # output blocks
    if has_pw:
        e += 2 * TL * PLp * pw_b                              # residual blocks
    e += A2 * PLp * cdt_b                                     # nt scratch
    e += 2 * TL * PLp * 4                                     # f32 matmul result + add/cast stream
    e += Lp * pad(A2) * 4 + P * A2 * Lp * 4 + A2 * Lp * cdt_b + TL * pad(A2) * 8
    return e


def _pick_row_tile_and_vmem(Lp, H, P, A2, in_b, out_b, pw_b, cdt_b,
                            has_pw, row_tile, row_align):
    phys = _vmem_physical_bytes()
    if row_tile is None:
        budget = int(phys * 0.38)           # ~48 MiB on 128 MiB chips, ~24 MiB on v7x
        row_tile = 32
        for cand in (512, 256, 128, 64, 32):
            if (cand <= Lp and Lp % cand == 0 and cand % row_align == 0 and
                    _estimate_vmem_bytes(Lp, H, P, A2, cand, in_b, out_b, pw_b,
                                         cdt_b, has_pw) <= budget):
                row_tile = cand
                break
    else:
        if Lp % row_tile != 0 or row_tile % row_align != 0:
            raise ValueError(
                f"row_tile={row_tile} must divide padded length {Lp} and be a "
                f"multiple of {row_align} (sublane packing for the chosen dtypes)")
    est = _estimate_vmem_bytes(Lp, H, P, A2, row_tile, in_b, out_b, pw_b, cdt_b, has_pw)
    vmem_limit = int(min(max(est * 27 // 20 + (4 << 20), 24 << 20), phys - (8 << 20)))
    vmem_limit = int(min(max(vmem_limit, est + (2 << 20)), phys))
    return row_tile, vmem_limit


# ----------------------------------------------------------------------------
# Wrappers
# ----------------------------------------------------------------------------
def ribonanzanet_triangle_projection_native(
        hidden_states, win, bin_, wout, bout, pairwise_states=None, *,
        out_dtype=None, compute_dtype=jnp.bfloat16, row_tile=None,
        alias_residual=True):
    """Triangle projection in the kernel-native layout.

    hidden_states: (B, L, H); win: (A, H); bin_: (A,); wout: (P, A*A); bout: (P,).
    pairwise_states (optional residual) and the returned tensor are (B, L, P, L)
    (i, p, j) — keep this layout through the surrounding pairwise stack to avoid
    full-size HBM transposes.  Output / residual default to bf16 (f32 accumulation
    in-kernel); the residual buffer may be donated (aliased to the output).
    """
    B, L, H = hidden_states.shape
    A = int(win.shape[0])
    P = int(wout.shape[0])
    if wout.shape[1] != A * A:
        raise ValueError(f"out_proj weight must be (P, A*A), got {wout.shape}")
    has_pw = pairwise_states is not None
    if has_pw and pairwise_states.shape != (B, L, P, L):
        raise ValueError(f"pairwise_states must be (B, L, P, L)={(B, L, P, L)}, "
                         f"got {pairwise_states.shape}")

    out_dtype = jnp.dtype(jnp.bfloat16 if out_dtype is None else out_dtype)
    cdt = jnp.dtype(compute_dtype)
    in_dtype = jnp.dtype(hidden_states.dtype)

    Lp = -(-L // 128) * 128                       # pad L -> lane-dense stores
    PLp = P * Lp
    align_a = 16 if cdt.itemsize < 4 else 8       # augmented in_proj width (A cols + bias lane)
    A2 = -(-(A + 1) // align_a) * align_a

    # ---- one-time parameter glue (tiny, plain JAX) ----
    win_aug = (jnp.zeros((H, A2), jnp.float32)
               .at[:, :A].set(jnp.asarray(win, jnp.float32).T)).astype(cdt)
    bin_aug = (jnp.zeros((1, A2), jnp.float32)
               .at[0, :A].set(jnp.asarray(bin_, jnp.float32))
               .at[0, A].set(1.0))                                     # bias lane = 1
    w3 = jnp.asarray(wout, jnp.float32).reshape(P, A, A).transpose(0, 2, 1)  # [p, a2, a1]
    w_big = (jnp.zeros((P, A2, A2), jnp.float32)
             .at[:, :A, :A].set(w3)
             .at[:, A, A].set(jnp.asarray(bout, jnp.float32))          # bout via bias lane
             ).reshape(P * A2, A2).astype(cdt)

    # ---- pad sequence / residual to Lp ----
    hs = hidden_states
    if Lp != L:
        hs = jnp.pad(hs, ((0, 0), (0, Lp - L), (0, 0)))
    pw_kernel = None
    if has_pw:
        pw = pairwise_states
        if Lp != L:
            pw = jnp.pad(pw, ((0, 0), (0, Lp - L), (0, 0), (0, Lp - L)))
        pw_kernel = pw.reshape(B, Lp, PLp).astype(out_dtype)

    row_align = max(8, 32 // min(out_dtype.itemsize, in_dtype.itemsize))
    TL, vmem_limit = _pick_row_tile_and_vmem(
        Lp, H, P, A2, in_dtype.itemsize, out_dtype.itemsize, out_dtype.itemsize,
        cdt.itemsize, has_pw, row_tile, row_align)
    n_tiles = Lp // TL

    kernel = _make_kernel(A2=A2, P=P, Lp=Lp, has_pw=has_pw, cdt=cdt)

    in_specs = [
        pl.BlockSpec((1, Lp, H), lambda b, r: (b, 0, 0)),    # full sequence (j side)
        pl.BlockSpec((1, TL, H), lambda b, r: (b, r, 0)),    # row tile (i side)
        pl.BlockSpec((H, A2), lambda b, r: (0, 0)),
        pl.BlockSpec((1, A2), lambda b, r: (0, 0)),
        pl.BlockSpec((P * A2, A2), lambda b, r: (0, 0)),
    ]
    operands = [hs, hs, win_aug, bin_aug, w_big]
    io_aliases = {}
    if has_pw:
        in_specs.append(pl.BlockSpec((1, TL, PLp), lambda b, r: (b, r, 0)))
        operands.append(pw_kernel)
        if alias_residual:
            io_aliases = {5: 0}       # residual buffer is reused for the output

    out = pl.pallas_call(
        kernel,
        grid=(B, n_tiles),
        in_specs=in_specs,
        out_specs=pl.BlockSpec((1, TL, PLp), lambda b, r: (b, r, 0)),
        out_shape=jax.ShapeDtypeStruct((B, Lp, PLp), out_dtype),
        scratch_shapes=[pltpu.VMEM((A2, PLp), cdt)],
        input_output_aliases=io_aliases,
        compiler_params=pltpu.CompilerParams(
            # row axis is "arbitrary" so the per-batch nt cache (computed at r == 0)
            # is always valid; batch stays "parallel" for megacore.
            dimension_semantics=("parallel", "arbitrary"),
            vmem_limit_bytes=vmem_limit),
    )(*operands)

    out = out.reshape(B, Lp, P, Lp)
    if Lp != L:
        out = out[:, :L, :, :L]
    return out


def ribonanzanet_triangle_projection(hidden_states, win, bin_, wout, bout,
                                     pairwise_states=None, **kwargs):
    """Drop-in (PyTorch-layout) wrapper: pairwise_states / output are (B, L, L, P).

    This compatibility path pays two layout transposes; prefer the `_native`
    entry point and keep the (B, L, P, L) layout through the surrounding model.
    """
    pw_native = (None if pairwise_states is None
                 else jnp.transpose(pairwise_states, (0, 1, 3, 2)))
    out_native = ribonanzanet_triangle_projection_native(
        hidden_states, win, bin_, wout, bout, pw_native, **kwargs)
    return jnp.transpose(out_native, (0, 1, 3, 2))


# ----------------------------------------------------------------------------
# Pure-JAX reference (mirrors the PyTorch module)
# ----------------------------------------------------------------------------
def _reference(hidden_states, win, bin_, wout, bout, pairwise_states=None):
    ht = hidden_states @ win.T + bin_                                # (B, L, A)
    tri = ht[:, None, :, :, None] * ht[:, :, None, None, :]          # (B, L, L, A, A)
    tri = tri.reshape(*tri.shape[:-2], -1)                           # (B, L, L, A*A)
    out = tri @ wout.T + bout                                        # (B, L, L, P)
    if pairwise_states is not None:
        out = out + pairwise_states
    return out


# ----------------------------------------------------------------------------
# Demo / correctness check
# ----------------------------------------------------------------------------
if __name__ == "__main__":
    key = jax.random.PRNGKey(0)
    k1, k2, k3, k4, k5, k6, k7 = jax.random.split(key, 7)

    # Module config (small): hidden_size=32, pairwise_attention_size=8, pairwise_size=16.
    H, A, P = 32, 8, 16
    win = jax.random.normal(k3, (A, H), jnp.float32) / jnp.sqrt(H)           # in_proj.weight
    bin_ = jax.random.normal(k4, (A,), jnp.float32) * 0.1                    # in_proj.bias
    wout = jax.random.normal(k5, (P, A * A), jnp.float32) / A                # out_proj.weight
    bout = jax.random.normal(k6, (P,), jnp.float32) * 0.1                    # out_proj.bias

    # Case 1: PyTorch-layout compat path, residual + aliasing, bf16 output (default),
    #         L = 16 padded to 128.
    B1, L1 = 2, 16
    hs1 = jax.random.normal(k1, (B1, L1, H), jnp.float32)
    pw1 = jax.random.normal(k2, (B1, L1, L1, P), jnp.float32)
    ref1 = np.asarray(_reference(hs1, win, bin_, wout, bout, pw1))
    out1 = jax.block_until_ready(
        ribonanzanet_triangle_projection(hs1, win, bin_, wout, bout, pw1))
    np.testing.assert_allclose(np.asarray(out1.astype(jnp.float32)), ref1,
                               rtol=5e-2, atol=1e-1)

    # Case 2: native (B, L, P, L) path, no residual, f32 output, forced 2 row tiles
    #         (exercises the per-batch nt cache across row tiles).
    B2, L2 = 1, 256
    hs2 = jax.random.normal(k7, (B2, L2, H), jnp.float32)
    ref2 = np.asarray(jnp.transpose(_reference(hs2, win, bin_, wout, bout, None),
                                    (0, 1, 3, 2)))
    out2 = jax.block_until_ready(
        ribonanzanet_triangle_projection_native(hs2, win, bin_, wout, bout, None,
                                                out_dtype=jnp.float32, row_tile=128))
    np.testing.assert_allclose(np.asarray(out2), ref2, rtol=5e-2, atol=1e-1)

    print("KERNEL_OK")
</pallas_src>

<mosaic_0001>
module attributes {stable_mosaic.version = 11 : i64} {
  func.func @kernel(%arg0: i32, %arg1: i32, %arg2: memref<1x128x32xf32, #tpu.memory_space<vmem>>, %arg3: memref<1x128x32xf32, #tpu.memory_space<vmem>>, %arg4: memref<32x16xbf16, #tpu.memory_space<vmem>>, %arg5: memref<1x16xf32, #tpu.memory_space<vmem>>, %arg6: memref<256x16xbf16, #tpu.memory_space<vmem>>, %arg7: memref<1x128x2048xbf16, #tpu.memory_space<vmem>>, %arg8: memref<1x128x2048xbf16, #tpu.memory_space<vmem>>, %arg9: memref<16x2048xbf16, #tpu.memory_space<vmem>>) attributes {dimension_semantics = [#tpu.dimension_semantics<parallel>, #tpu.dimension_semantics<arbitrary>], iteration_bounds = array<i64: 2, 1>, scalar_prefetch = 0 : i64, scratch_operands = 1 : i64, tpu.core_type = #tpu.core_type<tc>, window_params = [{transform_indices = @transform_0, window_bounds = array<i64: 1, 128, 32>}, {transform_indices = @transform_1, window_bounds = array<i64: 1, 128, 32>}, {pipeline_mode = #tpu.pipeline_mode<synchronous>, transform_indices = @transform_2, window_bounds = array<i64: 32, 16>}, {pipeline_mode = #tpu.pipeline_mode<synchronous>, transform_indices = @transform_3, window_bounds = array<i64: 1, 16>}, {pipeline_mode = #tpu.pipeline_mode<synchronous>, transform_indices = @transform_4, window_bounds = array<i64: 256, 16>}, {transform_indices = @transform_5, window_bounds = array<i64: 1, 128, 2048>}, {transform_indices = @transform_6, window_bounds = array<i64: 1, 128, 2048>}]} {
    %c0 = arith.constant 0 : index
    %c0_0 = arith.constant 0 : index
    %0 = vector.load %arg4[%c0, %c0_0] : memref<32x16xbf16, #tpu.memory_space<vmem>>, vector<32x16xbf16>
    %c0_1 = arith.constant 0 : index
    %c0_2 = arith.constant 0 : index
    %1 = vector.load %arg5[%c0_1, %c0_2] : memref<1x16xf32, #tpu.memory_space<vmem>>, vector<1x16xf32>
    %c0_i32 = arith.constant 0 : i32
    %2 = arith.cmpi eq, %arg1, %c0_i32 : i32
    %3 = arith.extui %2 : i1 to i32
    %c0_i32_3 = arith.constant 0 : i32
    %4 = arith.cmpi ne, %3, %c0_i32_3 : i32
    scf.if %4 {
      %c0_16 = arith.constant 0 : index
      %c0_17 = arith.constant 0 : index
      %c0_18 = arith.constant 0 : index
      %22 = vector.load %arg2[%c0_16, %c0_17, %c0_18] : memref<1x128x32xf32, #tpu.memory_space<vmem>>, vector<1x128x32xf32>
      %23 = vector.shape_cast %22 : vector<1x128x32xf32> to vector<128x32xf32>
      %24 = arith.truncf %23 : vector<128x32xf32> to vector<128x32xbf16>
      %cst_19 = arith.constant dense<0.000000e+00> : vector<128x16xf32>
      %25 = tpu.matmul %24, %0, %cst_19 {dimension_numbers = #tpu.dot_dimension_numbers<[1], [0], [0], [1], [0, 0, 1, 1], [], []>} : vector<128x32xbf16>, vector<32x16xbf16>, vector<128x16xf32> -> vector<128x16xf32>
      %26 = vector.broadcast %1 : vector<1x16xf32> to vector<128x16xf32>
      %27 = arith.addf %25, %26 : vector<128x16xf32>
      %28 = arith.truncf %27 : vector<128x16xf32> to vector<128x16xbf16>
      %c0_20 = arith.constant 0 : index
      %c0_21 = arith.constant 0 : index
      %29 = vector.load %arg6[%c0_20, %c0_21] : memref<256x16xbf16, #tpu.memory_space<vmem>>, vector<256x16xbf16>
      %cst_22 = arith.constant dense<0.000000e+00> : vector<256x128xf32>
      %30 = tpu.matmul %29, %28, %cst_22 {dimension_numbers = #tpu.dot_dimension_numbers<[1], [1], [0], [0], [0, 0, 1, 0], [], []>} : vector<256x16xbf16>, vector<128x16xbf16>, vector<256x128xf32> -> vector<256x128xf32>
      %31 = vector.extract_strided_slice %30 {offsets = [0, 0], sizes = [16, 128], strides = [1, 1]} : vector<256x128xf32> to vector<16x128xf32>
      %32 = arith.truncf %31 : vector<16x128xf32> to vector<16x128xbf16>
      %c0_23 = arith.constant 0 : index
      %c0_24 = arith.constant 0 : index
      %33 = vector.load %arg9[%c0_23, %c0_24] : memref<16x2048xbf16, #tpu.memory_space<vmem>>, vector<16x128xbf16>
      tpu.vector_store %arg9[%c0_23, %c0_24], %32 {strides = array<i32>} : memref<16x2048xbf16, #tpu.memory_space<vmem>>, vector<16x128xbf16>,
      %34 = vector.extract_strided_slice %30 {offsets = [16, 0], sizes = [16, 128], strides = [1, 1]} : vector<256x128xf32> to vector<16x128xf32>
      %35 = arith.truncf %34 : vector<16x128xf32> to vector<16x128xbf16>
      %c0_25 = arith.constant 0 : index
      %c128 = arith.constant 128 : index
      %36 = vector.load %arg9[%c0_25, %c128] : memref<16x2048xbf16, #tpu.memory_space<vmem>>, vector<16x128xbf16>
      tpu.vector_store %arg9[%c0_25, %c128], %35 {strides = array<i32>} : memref<16x2048xbf16, #tpu.memory_space<vmem>>, vector<16x128xbf16>,
      %37 = vector.extract_strided_slice %30 {offsets = [32, 0], sizes = [16, 128], strides = [1, 1]} : vector<256x128xf32> to vector<16x128xf32>
      %38 = arith.truncf %37 : vector<16x128xf32> to vector<16x128xbf16>
      %c0_26 = arith.constant 0 : index
      %c256 = arith.constant 256 : index
      %39 = vector.load %arg9[%c0_26, %c256] : memref<16x2048xbf16, #tpu.memory_space<vmem>>, vector<16x128xbf16>
      tpu.vector_store %arg9[%c0_26, %c256], %38 {strides = array<i32>} : memref<16x2048xbf16, #tpu.memory_space<vmem>>, vector<16x128xbf16>,
      %40 = vector.extract_strided_slice %30 {offsets = [48, 0], sizes = [16, 128], strides = [1, 1]} : vector<256x128xf32> to vector<16x128xf32>
      %41 = arith.truncf %40 : vector<16x128xf32> to vector<16x128xbf16>
      %c0_27 = arith.constant 0 : index
      %c384 = arith.constant 384 : index
      %42 = vector.load %arg9[%c0_27, %c384] : memref<16x2048xbf16, #tpu.memory_space<vmem>>, vector<16x128xbf16>
      tpu.vector_store %arg9[%c0_27, %c384], %41 {strides = array<i32>} : memref<16x2048xbf16, #tpu.memory_space<vmem>>, vector<16x128xbf16>,
      %43 = vector.extract_strided_slice %30 {offsets = [64, 0], sizes = [16, 128], strides = [1, 1]} : vector<256x128xf32> to vector<16x128xf32>
      %44 = arith.truncf %43 : vector<16x128xf32> to vector<16x128xbf16>
      %c0_28 = arith.constant 0 : index
      %c512 = arith.constant 512 : index
      %45 = vector.load %arg9[%c0_28, %c512] : memref<16x2048xbf16, #tpu.memory_space<vmem>>, vector<16x128xbf16>
      tpu.vector_store %arg9[%c0_28, %c512], %44 {strides = array<i32>} : memref<16x2048xbf16, #tpu.memory_space<vmem>>, vector<16x128xbf16>,
      %46 = vector.extract_strided_slice %30 {offsets = [80, 0], sizes = [16, 128], strides = [1, 1]} : vector<256x128xf32> to vector<16x128xf32>
      %47 = arith.truncf %46 : vector<16x128xf32> to vector<16x128xbf16>
      %c0_29 = arith.constant 0 : index
      %c640 = arith.constant 640 : index
      %48 = vector.load %arg9[%c0_29, %c640] : memref<16x2048xbf16, #tpu.memory_space<vmem>>, vector<16x128xbf16>
      tpu.vector_store %arg9[%c0_29, %c640], %47 {strides = array<i32>} : memref<16x2048xbf16, #tpu.memory_space<vmem>>, vector<16x128xbf16>,
      %49 = vector.extract_strided_slice %30 {offsets = [96, 0], sizes = [16, 128], strides = [1, 1]} : vector<256x128xf32> to vector<16x128xf32>
      %50 = arith.truncf %49 : vector<16x128xf32> to vector<16x128xbf16>
      %c0_30 = arith.constant 0 : index
      %c768 = arith.constant 768 : index
      %51 = vector.load %arg9[%c0_30, %c768] : memref<16x2048xbf16, #tpu.memory_space<vmem>>, vector<16x128xbf16>
      tpu.vector_store %arg9[%c0_30, %c768], %50 {strides = array<i32>} : memref<16x2048xbf16, #tpu.memory_space<vmem>>, vector<16x128xbf16>,
      %52 = vector.extract_strided_slice %30 {offsets = [112, 0], sizes = [16, 128], strides = [1, 1]} : vector<256x128xf32> to vector<16x128xf32>
      %53 = arith.truncf %52 : vector<16x128xf32> to vector<16x128xbf16>
      %c0_31 = arith.constant 0 : index
      %c896 = arith.constant 896 : index
      %54 = vector.load %arg9[%c0_31, %c896] : memref<16x2048xbf16, #tpu.memory_space<vmem>>, vector<16x128xbf16>
      tpu.vector_store %arg9[%c0_31, %c896], %53 {strides = array<i32>} : memref<16x2048xbf16, #tpu.memory_space<vmem>>, vector<16x128xbf16>,
      %55 = vector.extract_strided_slice %30 {offsets = [128, 0], sizes = [16, 128], strides = [1, 1]} : vector<256x128xf32> to vector<16x128xf32>
      %56 = arith.truncf %55 : vector<16x128xf32> to vector<16x128xbf16>
      %c0_32 = arith.constant 0 : index
      %c1024 = arith.constant 1024 : index
      %57 = vector.load %arg9[%c0_32, %c1024] : memref<16x2048xbf16, #tpu.memory_space<vmem>>, vector<16x128xbf16>
      tpu.vector_store %arg9[%c0_32, %c1024], %56 {strides = array<i32>} : memref<16x2048xbf16, #tpu.memory_space<vmem>>, vector<16x128xbf16>,
      %58 = vector.extract_strided_slice %30 {offsets = [144, 0], sizes = [16, 128], strides = [1, 1]} : vector<256x128xf32> to vector<16x128xf32>
      %59 = arith.truncf %58 : vector<16x128xf32> to vector<16x128xbf16>
      %c0_33 = arith.constant 0 : index
      %c1152 = arith.constant 1152 : index
      %60 = vector.load %arg9[%c0_33, %c1152] : memref<16x2048xbf16, #tpu.memory_space<vmem>>, vector<16x128xbf16>
      tpu.vector_store %arg9[%c0_33, %c1152], %59 {strides = array<i32>} : memref<16x2048xbf16, #tpu.memory_space<vmem>>, vector<16x128xbf16>,
      %61 = vector.extract_strided_slice %30 {offsets = [160, 0], sizes = [16, 128], strides = [1, 1]} : vector<256x128xf32> to vector<16x128xf32>
      %62 = arith.truncf %61 : vector<16x128xf32> to vector<16x128xbf16>
      %c0_34 = arith.constant 0 : index
      %c1280 = arith.constant 1280 : index
      %63 = vector.load %arg9[%c0_34, %c1280] : memref<16x2048xbf16, #tpu.memory_space<vmem>>, vector<16x128xbf16>
      tpu.vector_store %arg9[%c0_34, %c1280], %62 {strides = array<i32>} : memref<16x2048xbf16, #tpu.memory_space<vmem>>, vector<16x128xbf16>,
      %64 = vector.extract_strided_slice %30 {offsets = [176, 0], sizes = [16, 128], strides = [1, 1]} : vector<256x128xf32> to vector<16x128xf32>
      %65 = arith.truncf %64 : vector<16x128xf32> to vector<16x128xbf16>
      %c0_35 = arith.constant 0 : index
      %c1408 = arith.constant 1408 : index
      %66 = vector.load %arg9[%c0_35, %c1408] : memref<16x2048xbf16, #tpu.memory_space<vmem>>, vector<16x128xbf16>
      tpu.vector_store %arg9[%c0_35, %c1408], %65 {strides = array<i32>} : memref<16x2048xbf16, #tpu.memory_space<vmem>>, vector<16x128xbf16>,
      %67 = vector.extract_strided_slice %30 {offsets = [192, 0], sizes = [16, 128], strides = [1, 1]} : vector<256x128xf32> to vector<16x128xf32>
      %68 = arith.truncf %67 : vector<16x128xf32> to vector<16x128xbf16>
      %c0_36 = arith.constant 0 : index
      %c1536 = arith.constant 1536 : index
      %69 = vector.load %arg9[%c0_36, %c1536] : memref<16x2048xbf16, #tpu.memory_space<vmem>>, vector<16x128xbf16>
      tpu.vector_store %arg9[%c0_36, %c1536], %68 {strides = array<i32>} : memref<16x2048xbf16, #tpu.memory_space<vmem>>, vector<16x128xbf16>,
      %70 = vector.extract_strided_slice %30 {offsets = [208, 0], sizes = [16, 128], strides = [1, 1]} : vector<256x128xf32> to vector<16x128xf32>
      %71 = arith.truncf %70 : vector<16x128xf32> to vector<16x128xbf16>
      %c0_37 = arith.constant 0 : index
      %c1664 = arith.constant 1664 : index
      %72 = vector.load %arg9[%c0_37, %c1664] : memref<16x2048xbf16, #tpu.memory_space<vmem>>, vector<16x128xbf16>
      tpu.vector_store %arg9[%c0_37, %c1664], %71 {strides = array<i32>} : memref<16x2048xbf16, #tpu.memory_space<vmem>>, vector<16x128xbf16>,
      %73 = vector.extract_strided_slice %30 {offsets = [224, 0], sizes = [16, 128], strides = [1, 1]} : vector<256x128xf32> to vector<16x128xf32>
      %74 = arith.truncf %73 : vector<16x128xf32> to vector<16x128xbf16>
      %c0_38 = arith.constant 0 : index
      %c1792 = arith.constant 1792 : index
      %75 = vector.load %arg9[%c0_38, %c1792] : memref<16x2048xbf16, #tpu.memory_space<vmem>>, vector<16x128xbf16>
      tpu.vector_store %arg9[%c0_38, %c1792], %74 {strides = array<i32>} : memref<16x2048xbf16, #tpu.memory_space<vmem>>, vector<16x128xbf16>,
      %76 = vector.extract_strided_slice %30 {offsets = [240, 0], sizes = [16, 128], strides = [1, 1]} : vector<256x128xf32> to vector<16x128xf32>
      %77 = arith.truncf %76 : vector<16x128xf32> to vector<16x128xbf16>
      %c0_39 = arith.constant 0 : index
      %c1920 = arith.constant 1920 : index
      %78 = vector.load %arg9[%c0_39, %c1920] : memref<16x2048xbf16, #tpu.memory_space<vmem>>, vector<16x128xbf16>
      tpu.vector_store %arg9[%c0_39, %c1920], %77 {strides = array<i32>} : memref<16x2048xbf16, #tpu.memory_space<vmem>>, vector<16x128xbf16>,
    } else {
    }
    %c0_4 = arith.constant 0 : index
    %c0_5 = arith.constant 0 : index
    %c0_6 = arith.constant 0 : index
    %5 = vector.load %arg3[%c0_4, %c0_5, %c0_6] : memref<1x128x32xf32, #tpu.memory_space<vmem>>, vector<1x128x32xf32>
    %6 = vector.shape_cast %5 : vector<1x128x32xf32> to vector<128x32xf32>
    %7 = arith.truncf %6 : vector<128x32xf32> to vector<128x32xbf16>
    %cst = arith.constant dense<0.000000e+00> : vector<128x16xf32>
    %8 = tpu.matmul %7, %0, %cst {dimension_numbers = #tpu.dot_dimension_numbers<[1], [0], [0], [1], [0, 0, 1, 1], [], []>} : vector<128x32xbf16>, vector<32x16xbf16>, vector<128x16xf32> -> vector<128x16xf32>
    %9 = vector.broadcast %1 : vector<1x16xf32> to vector<128x16xf32>
    %10 = arith.addf %8, %9 : vector<128x16xf32>
    %11 = arith.truncf %10 : vector<128x16xf32> to vector<128x16xbf16>
    %c0_7 = arith.constant 0 : index
    %c0_8 = arith.constant 0 : index
    %12 = vector.load %arg9[%c0_7, %c0_8] : memref<16x2048xbf16, #tpu.memory_space<vmem>>, vector<16x2048xbf16>
    %cst_9 = arith.constant dense<0.000000e+00> : vector<128x2048xf32>
    %13 = tpu.matmul %11, %12, %cst_9 {dimension_numbers = #tpu.dot_dimension_numbers<[1], [0], [0], [1], [0, 0, 1, 1], [], []>} : vector<128x16xbf16>, vector<16x2048xbf16>, vector<128x2048xf32> -> vector<128x2048xf32>
    %c0_10 = arith.constant 0 : index
    %c0_11 = arith.constant 0 : index
    %c0_12 = arith.constant 0 : index
    %14 = vector.load %arg7[%c0_10, %c0_11, %c0_12] : memref<1x128x2048xbf16, #tpu.memory_space<vmem>>, vector<1x128x2048xbf16>
    %15 = vector.shape_cast %14 : vector<1x128x2048xbf16> to vector<128x2048xbf16>
    %16 = arith.extf %15 : vector<128x2048xbf16> to vector<128x2048xf32>
    %17 = arith.addf %13, %16 : vector<128x2048xf32>
    %18 = arith.truncf %17 : vector<128x2048xf32> to vector<128x2048xbf16>
    %c0_13 = arith.constant 0 : index
    %c0_14 = arith.constant 0 : index
    %c0_15 = arith.constant 0 : index
    %19 = vector.load %arg8[%c0_13, %c0_14, %c0_15] : memref<1x128x2048xbf16, #tpu.memory_space<vmem>>, vector<1x128x2048xbf16>
    %20 = vector.shape_cast %19 : vector<1x128x2048xbf16> to vector<128x2048xbf16>
    %21 = vector.shape_cast %18 : vector<128x2048xbf16> to vector<1x128x2048xbf16>
    tpu.vector_store %arg8[%c0_13, %c0_14, %c0_15], %21 {strides = array<i32>} : memref<1x128x2048xbf16, #tpu.memory_space<vmem>>, vector<1x128x2048xbf16>,
    return
  }
  func.func @transform_0(%arg0: i32, %arg1: i32) -> (i32, i32, i32) {
    %c0_i32 = arith.constant 0 : i32
    %c0_i32_0 = arith.constant 0 : i32
    %c0_i32_1 = arith.constant 0 : i32
    return %arg0, %c0_i32, %c0_i32_0 : i32, i32, i32
  }
  func.func @transform_1(%arg0: i32, %arg1: i32) -> (i32, i32, i32) {
    %c0_i32 = arith.constant 0 : i32
    %c0_i32_0 = arith.constant 0 : i32
    return %arg0, %arg1, %c0_i32 : i32, i32, i32
  }
  func.func @transform_2(%arg0: i32, %arg1: i32) -> (i32, i32) {
    %c0_i32 = arith.constant 0 : i32
    %c0_i32_0 = arith.constant 0 : i32
    %c0_i32_1 = arith.constant 0 : i32
    return %c0_i32, %c0_i32_0 : i32, i32
  }
  func.func @transform_3(%arg0: i32, %arg1: i32) -> (i32, i32) {
    %c0_i32 = arith.constant 0 : i32
    %c0_i32_0 = arith.constant 0 : i32
    %c0_i32_1 = arith.constant 0 : i32
    return %c0_i32, %c0_i32_0 : i32, i32
  }
  func.func @transform_4(%arg0: i32, %arg1: i32) -> (i32, i32) {
    %c0_i32 = arith.constant 0 : i32
    %c0_i32_0 = arith.constant 0 : i32
    %c0_i32_1 = arith.constant 0 : i32
    return %c0_i32, %c0_i32_0 : i32, i32
  }
  func.func @transform_5(%arg0: i32, %arg1: i32) -> (i32, i32, i32) {
    %c0_i32 = arith.constant 0 : i32
    %c0_i32_0 = arith.constant 0 : i32
    return %arg0, %arg1, %c0_i32 : i32, i32, i32
  }
  func.func @transform_6(%arg0: i32, %arg1: i32) -> (i32, i32, i32) {
    %c0_i32 = arith.constant 0 : i32
    %c0_i32_0 = arith.constant 0 : i32
    return %arg0, %arg1, %c0_i32 : i32, i32, i32
  }
}

</mosaic_0001>

<llo_original>
// kernel: tpu_custom_call.1
$region0: #{tpu_custom_call.1}
  #allocation0 [shape = 'u32[]', space=smem, size = 0x4, offset = 0x4, fixed_abs, tag = 'smem constant byte address 0x4 - core index']
  #allocation1 [shape = 'u32[144,128]{1,0:T(1,128)}', space=vmem, size = 0x12000, scoped, tag = 'internal scratch']
  #allocation2 [shape = 'bf16[16,2048]{1,0:T(16,128)(2,1)}', space=vmem, size = 0x10000, scoped, tag = 'scratch operand']
  %s0 = inlined_call_operand.vmem [shape: f32[2,128,32], index: 0, kind: input, shape index: {}]
  %s1 = inlined_call_operand.vmem [shape: f32[2,128,32], index: 1, kind: input, shape index: {}]
  %s2 = inlined_call_operand.vmem [shape: bf16[32,16], index: 2, kind: input, shape index: {}]
  %s3 = inlined_call_operand.vmem [shape: f32[1,16], index: 3, kind: input, shape index: {}]
  %s4 = inlined_call_operand.vmem [shape: bf16[256,16], index: 4, kind: input, shape index: {}]
  %s5 = inlined_call_operand.hbm [shape: bf16[2,128,2048], index: 5, kind: input, shape index: {}, may-alias: {5,6}]
  %s6 = inlined_call_operand.hbm [shape: bf16[2,128,2048], index: 6, kind: output, shape index: {}, may-alias: {5,6}]
  %s7 = sld [smem:[#allocation0]]
  $region65: #{tpu_custom_call.1} parent=0
    _
  %s9 = ssub.s32 1, %s7
  %s10 = scalar_select 0, %s9, %s7
  $region1: #{tpu_custom_call.1} parent=0
    #allocation3 [shape = 'u8[1048576]{0}', space=vmem, size = 0x100000, scoped, tag = 'input window, operand 5']
    #allocation4 [shape = 's32[2]{0}', space=sflag, size = 0x8, scoped, tag = 'scoped memory for tpu_custom_call.1']
    #allocation5 [shape = 's32[2]{0}', space=sflag, size = 0x8, scoped, tag = 'scoped memory for tpu_custom_call.1']
    #allocation6 [shape = 'u8[1048576]{0}', space=vmem, size = 0x100000, scoped, tag = 'output window, operand 0']
    %11 = vsyncpa [#allocation4], 0
    %s12 = scalar_lea.sflag [#allocation4], 1
    %13 = vsyncpa %s12, 0
    %14 = vsyncpa [#allocation5], 0
    %s15 = scalar_lea.sflag [#allocation5], 1
    %16 = vsyncpa %s15, 0
    loop: start=0, step=1, limit=4
    $region2: #{tpu_custom_call.1} parent=1 // loop_pre_header
      _
    $region3: #{tpu_custom_call.1} parent=1 // loop_header
      %s18 = sphi 0, %s22
      %p19 = scmp.ge.s32.totalorder %s18, 4
      %s25 = sphi 0, %s37
      %s26 = sphi 0, %s33
      %s27 = sphi 0, %s25
      %s28 = sphi 0, %s26
      %s29 = sphi 0, %s27
      %s30 = sphi 0, %s28
      %s40 = sphi 0, %s42
      %s43 = sphi 0, %s40
      %s44 = sphi 0, %s43
      %s60 = sphi 0, %s44
      %s68 = sphi 0, %s70
      %s71 = sphi 0, %s68
      %s72 = sphi 0, %s71
      %s88 = sphi 0, %s72
      %s92 = sphi 0, %s92
      %s94 = sphi 0, %s92
      %s95 = sphi 0, %s94
      %s109 = sphi 0, %s95
      %s113 = sphi 0, %s113
      %s115 = sphi 0, %s113
      %s116 = sphi 0, %s115
      %s130 = sphi 0, %s116
      %s134 = sphi 0, %s134
      %s136 = sphi 0, %s134
      %s137 = sphi 0, %s136
      %s151 = sphi 0, %s137
      %s159 = sphi 0, %s161
      %s162 = sphi 0, %s159
      %s163 = sphi 0, %s162
      %s179 = sphi 0, %s163
      %s187 = sphi 0, %s189
      %s190 = sphi 0, %s187
      %s191 = sphi 0, %s190
      %s207 = sphi 0, %s191
    $region4: #{tpu_custom_call.1} parent=1 // loop_header_branch
      %21 = sbr.rel (%p19) target = $region8
    $region5: #{tpu_custom_call.1} parent=1 // loop_body
      %s23 = ssub.s32 %s18, 1
      %s24 = ssub.s32 %s18, 2
      %s31 = sadd.s32 1, %s26
      %p32 = scmp.ge.s32.totalorder %s31, 1
      %s33 = scalar_select %p32, 0, %s31
      %s34 = sadd.s32 1, %s25
      %s35 = scalar_select %p32, %s34, %s25
      %p36 = scmp.ge.s32.totalorder %s35, 2
      %s37 = scalar_select %p36, 0, %s35
      %s38 = ssub.s32 %s25, %s37
      %p39 = scmp.eq.s32.totalorder %s38, 0
      %s41 = sadd.s32 %s40, 1
      %s42 = scalar_select %p39, %s40, %s41
      %p45 = pneg %p39
      %p46 = scmp.eq.s32.totalorder %s18, 1
      %p47 = por %p45, %p46
      %p48 = scmp.ne.s32.totalorder %s40, %s43
      %p49 = scmp.eq.s32.totalorder %s18, 0
      %p50 = por %p48, %p49
      %p51 = scmp.ne.s32.totalorder %s40, %s43
      %p52 = scmp.eq.s32.totalorder %s23, 1
      %p53 = por %p51, %p52
      %p54 = scmp.ne.s32.totalorder %s43, %s44
      %p55 = scmp.eq.s32.totalorder %s23, 0
      %p56 = por %p54, %p55
      %p57 = scmp.ne.s32.totalorder %s43, %s44
      %p58 = scmp.eq.s32.totalorder %s24, 1
      %p59 = por %p57, %p58
      %p61 = scmp.ne.s32.totalorder %s44, %s60
      %p62 = scmp.eq.s32.totalorder %s24, 0
      %p63 = por %p61, %p62
      %s64 = ssub.s32 %s25, %s37
      %s65 = ssub.s32 %s26, %s33
      %s66 = sor.u32 %s64, %s65
      %p67 = scmp.eq.s32.totalorder %s66, 0
      %s69 = sadd.s32 %s68, 1
      %s70 = scalar_select %p67, %s68, %s69
      %p73 = pneg %p67
      %p74 = scmp.eq.s32.totalorder %s18, 1
      %p75 = por %p73, %p74
      %p76 = scmp.ne.s32.totalorder %s68, %s71
      %p77 = scmp.eq.s32.totalorder %s18, 0
      %p78 = por %p76, %p77
      %p79 = scmp.ne.s32.totalorder %s68, %s71
      %p80 = scmp.eq.s32.totalorder %s23, 1
      %p81 = por %p79, %p80
      %p82 = scmp.ne.s32.totalorder %s71, %s72
      %p83 = scmp.eq.s32.totalorder %s23, 0
      %p84 = por %p82, %p83
      %p85 = scmp.ne.s32.totalorder %s71, %s72
      %p86 = scmp.eq.s32.totalorder %s24, 1
      %p87 = por %p85, %p86
      %p89 = scmp.ne.s32.totalorder %s72, %s88
      %p90 = scmp.eq.s32.totalorder %s24, 0
      %p91 = por %p89, %p90
      %s93 = sadd.s32 %s92, 1
      %p96 = scmp.eq.s32.totalorder %s18, 1
      %p97 = scmp.ne.s32.totalorder %s92, %s94
      %p98 = scmp.eq.s32.totalorder %s18, 0
      %p99 = por %p97, %p98
      %p100 = scmp.ne.s32.totalorder %s92, %s94
      %p101 = scmp.eq.s32.totalorder %s23, 1
      %p102 = por %p100, %p101
      %p103 = scmp.ne.s32.totalorder %s94, %s95
      %p104 = scmp.eq.s32.totalorder %s23, 0
      %p105 = por %p103, %p104
      %p106 = scmp.ne.s32.totalorder %s94, %s95
      %p107 = scmp.eq.s32.totalorder %s24, 1
      %p108 = por %p106, %p107
      %p110 = scmp.ne.s32.totalorder %s95, %s109
      %p111 = scmp.eq.s32.totalorder %s24, 0
      %p112 = por %p110, %p111
      %s114 = sadd.s32 %s113, 1
      %p117 = scmp.eq.s32.totalorder %s18, 1
      %p118 = scmp.ne.s32.totalorder %s113, %s115
      %p119 = scmp.eq.s32.totalorder %s18, 0
      %p120 = por %p118, %p119
      %p121 = scmp.ne.s32.totalorder %s113, %s115
      %p122 = scmp.eq.s32.totalorder %s23, 1
      %p123 = por %p121, %p122
      %p124 = scmp.ne.s32.totalorder %s115, %s116
      %p125 = scmp.eq.s32.totalorder %s23, 0
      %p126 = por %p124, %p125
      %p127 = scmp.ne.s32.totalorder %s115, %s116
      %p128 = scmp.eq.s32.totalorder %s24, 1
      %p129 = por %p127, %p128
      %p131 = scmp.ne.s32.totalorder %s116, %s130
      %p132 = scmp.eq.s32.totalorder %s24, 0
      %p133 = por %p131, %p132
      %s135 = sadd.s32 %s134, 1
      %p138 = scmp.eq.s32.totalorder %s18, 1
      %p139 = scmp.ne.s32.totalorder %s134, %s136
      %p140 = scmp.eq.s32.totalorder %s18, 0
      %p141 = por %p139, %p140
      %p142 = scmp.ne.s32.totalorder %s134, %s136
      %p143 = scmp.eq.s32.totalorder %s23, 1
      %p144 = por %p142, %p143
      %p145 = scmp.ne.s32.totalorder %s136, %s137
      %p146 = scmp.eq.s32.totalorder %s23, 0
      %p147 = por %p145, %p146
      %p148 = scmp.ne.s32.totalorder %s136, %s137
      %p149 = scmp.eq.s32.totalorder %s24, 1
      %p150 = por %p148, %p149
      %p152 = scmp.ne.s32.totalorder %s137, %s151
      %p153 = scmp.eq.s32.totalorder %s24, 0
      %p154 = por %p152, %p153
      %s155 = ssub.s32 %s25, %s37
      %s156 = ssub.s32 %s26, %s33
      %s157 = sor.u32 %s155, %s156
      %p158 = scmp.eq.s32.totalorder %s157, 0
      %s160 = sadd.s32 %s159, 1
      %s161 = scalar_select %p158, %s159, %s160
      %p164 = pneg %p158
      %p165 = scmp.eq.s32.totalorder %s18, 1
      %p166 = por %p164, %p165
      %p167 = scmp.ne.s32.totalorder %s159, %s162
      %p168 = scmp.eq.s32.totalorder %s18, 0
      %p169 = por %p167, %p168
      %p170 = scmp.ne.s32.totalorder %s159, %s162
      %p171 = scmp.eq.s32.totalorder %s23, 1
      %p172 = por %p170, %p171
      %p173 = scmp.ne.s32.totalorder %s162, %s163
      %p174 = scmp.eq.s32.totalorder %s23, 0
      %p175 = por %p173, %p174
      %p176 = scmp.ne.s32.totalorder %s162, %s163
      %p177 = scmp.eq.s32.totalorder %s24, 1
      %p178 = por %p176, %p177
      %p180 = scmp.ne.s32.totalorder %s163, %s179
      %p181 = scmp.eq.s32.totalorder %s24, 0
      %p182 = por %p180, %p181
      %s183 = ssub.s32 %s25, %s37
      %s184 = ssub.s32 %s26, %s33
      %s185 = sor.u32 %s183, %s184
      %p186 = scmp.eq.s32.totalorder %s185, 0
      %s188 = sadd.s32 %s187, 1
      %s189 = scalar_select %p186, %s187, %s188
      %p192 = pneg %p186
      %p193 = scmp.eq.s32.totalorder %s18, 1
      %p194 = por %p192, %p193
      %p195 = scmp.ne.s32.totalorder %s187, %s190
      %p196 = scmp.eq.s32.totalorder %s18, 0
      %p197 = por %p195, %p196
      %p198 = scmp.ne.s32.totalorder %s187, %s190
      %p199 = scmp.eq.s32.totalorder %s23, 1
      %p200 = por %p198, %p199
      %p201 = scmp.ne.s32.totalorder %s190, %s191
      %p202 = scmp.eq.s32.totalorder %s23, 0
      %p203 = por %p201, %p202
      %p204 = scmp.ne.s32.totalorder %s190, %s191
      %p205 = scmp.eq.s32.totalorder %s24, 1
      %p206 = por %p204, %p205
      %p208 = scmp.ne.s32.totalorder %s191, %s207
      %p209 = scmp.eq.s32.totalorder %s24, 0
      %p210 = por %p208, %p209
      %p211 = scmp.le.s32.totalorder 1, %s18
      %p212 = scmp.lt.s32.totalorder %s18, 3
      %p213 = pnand %p211, %p212
      %p214 = pneg %p213
      // Predicated region
      $region9: #{tpu_custom_call.1} parent=5 // pred_check
        _
      $region10: #{tpu_custom_call.1} parent=5 // pred_check_branch
        %216 = sbr.rel (%p213) target = $region12
      $region11: #{tpu_custom_call.1} parent=5 // pred_region
        %s217 = ssub.s32 %s18, 1
        // Predicated region
        $region13: #{tpu_custom_call.1} parent=11 // pred_check
          %p218 = pneg %p105
        $region14: #{tpu_custom_call.1} parent=11 // pred_check_branch
          %220 = sbr.rel (%p218) target = $region16
        $region15: #{tpu_custom_call.1} parent=11 // pred_region
          _
        $region16: #{tpu_custom_call.1} parent=11 // pred_fallthru
          _
        // Predicated region
        $region17: #{tpu_custom_call.1} parent=11 // pred_check
          %p221 = pneg %p126
        $region18: #{tpu_custom_call.1} parent=11 // pred_check_branch
          %223 = sbr.rel (%p221) target = $region20
        $region19: #{tpu_custom_call.1} parent=11 // pred_region
          _
        $region20: #{tpu_custom_call.1} parent=11 // pred_fallthru
          _
        // Predicated region
        $region21: #{tpu_custom_call.1} parent=11 // pred_check
          %p224 = pneg %p147
        $region22: #{tpu_custom_call.1} parent=11 // pred_check_branch
          %226 = sbr.rel (%p224) target = $region24
        $region23: #{tpu_custom_call.1} parent=11 // pred_region
          _
        $region24: #{tpu_custom_call.1} parent=11 // pred_fallthru
          _
      $region12: #{tpu_custom_call.1} parent=5 // pred_fallthru
        _
      %p227 = scmp.lt.s32.totalorder %s18, 2
      // Predicated region
      $region25: #{tpu_custom_call.1} parent=5 // pred_check
        %p228 = pneg %p227
      $region26: #{tpu_custom_call.1} parent=5 // pred_check_branch
        %230 = sbr.rel (%p228) target = $region28
      $region27: #{tpu_custom_call.1} parent=5 // pred_region
        // Predicated region
        $region29: #{tpu_custom_call.1} parent=27 // pred_check
          %p231 = pneg %p50
        $region30: #{tpu_custom_call.1} parent=27 // pred_check_branch
          %233 = sbr.rel (%p231) target = $region32
        $region31: #{tpu_custom_call.1} parent=27 // pred_region
          %p234 = scmp.lt.s32.totalorder %s25, 1
          %s235 = scalar_select %p234, %s25, 1
          %s236 = smul.addr %s235, 16
          %s237 = smul.addr %s236, 8
          %s238 = scalar_lea.vmem %s0, %s237
        $region32: #{tpu_custom_call.1} parent=27 // pred_fallthru
          _
        // Predicated region
        $region33: #{tpu_custom_call.1} parent=27 // pred_check
          %p239 = pneg %p78
        $region34: #{tpu_custom_call.1} parent=27 // pred_check_branch
          %241 = sbr.rel (%p239) target = $region36
        $region35: #{tpu_custom_call.1} parent=27 // pred_region
          %s242 = smul.u32 16, %s26
          %p243 = scmp.lt.s32.totalorder %s25, 1
          %s244 = scalar_select %p243, %s25, 1
          %p245 = scmp.lt.s32.totalorder %s242, 15
          %s246 = scalar_select %p245, %s242, 15
          %s247 = smul.addr %s244, 16
          %s248 = sadd.s32 %s246, %s247
          %s249 = smul.addr %s248, 8
          %s250 = scalar_lea.vmem %s1, %s249
          %s251 = smul.u32 16, %s26
        $region36: #{tpu_custom_call.1} parent=27 // pred_fallthru
          _
        // Predicated region
        $region37: #{tpu_custom_call.1} parent=27 // pred_check
          %p252 = pneg %p169
        $region38: #{tpu_custom_call.1} parent=27 // pred_check_branch
          %254 = sbr.rel (%p252) target = $region40
        $region39: #{tpu_custom_call.1} parent=27 // pred_region
          %s255 = sand.u32 %s159, 1
          %s256 = scalar_lea.sflag [#allocation4], %s255
          %s257 = sand.u32 %s159, 1
          %s258 = smul.addr %s257, 1024
          %s259 = scalar_lea.vmem [#allocation3], %s258
          %s260 = smul.u32 16, %s26
          %s262 = ssub.s32 16384, 16384
          %263 = vsyncadd %s256, %s262
          %s264 = smul.addr %s260, 16
          %s265 = smul.addr %s25, 256
          %s266 = sadd.s32 %s264, %s265
          %s267 = smul.addr %s266, 64
          %s268 = scalar_lea.hbm %s5, %s267
          %s269 = sshll.u32 %s259, 4
          %s270 = int_to_ptr.vmem [resolvable:$true] %s269
          %275 = dma.hbm_to_vmem [thread:$0]  %s268, 16384, %s270, %s256, 1024, 1024, 64
        $region40: #{tpu_custom_call.1} parent=27 // pred_fallthru
          _
      $region28: #{tpu_custom_call.1} parent=5 // pred_fallthru
        _
      %p276 = scmp.le.s32.totalorder 1, %s18
      %p277 = scmp.lt.s32.totalorder %s18, 3
      %p278 = pnand %p276, %p277
      %p279 = pneg %p278
      // Predicated region
      $region41: #{tpu_custom_call.1} parent=5 // pred_check
        _
      $region42: #{tpu_custom_call.1} parent=5 // pred_check_branch
        %281 = sbr.rel (%p278) target = $region44
      $region43: #{tpu_custom_call.1} parent=5 // pred_region
        %s282 = ssub.s32 %s18, 1
        %s283 = sand.u32 %s162, 1
        %s284 = scalar_lea.sflag [#allocation4], %s283
        %s285 = sand.u32 %s162, 1
        %s286 = smul.addr %s285, 1024
        %s287 = scalar_lea.vmem [#allocation3], %s286
        // Predicated region
        $region45: #{tpu_custom_call.1} parent=43 // pred_check
          %p288 = pneg %p175
        $region46: #{tpu_custom_call.1} parent=43 // pred_check_branch
          %290 = sbr.rel (%p288) target = $region48
        $region47: #{tpu_custom_call.1} parent=43 // pred_region
          %291 = dma.done %s284, 16384
        $region48: #{tpu_custom_call.1} parent=43 // pred_fallthru
          _
        %p292 = scmp.lt.s32.totalorder %s27, 1
        %s293 = scalar_select %p292, %s27, 1
        %s294 = smul.addr %s293, 16
        %s295 = smul.addr %s294, 8
        %s296 = scalar_lea.vmem %s0, %s295
        %p297 = pneg %p56
        %p298 = pneg %p53
        %s299 = smul.u32 16, %s28
        %p300 = scmp.lt.s32.totalorder %s27, 1
        %s301 = scalar_select %p300, %s27, 1
        %p302 = scmp.lt.s32.totalorder %s299, 15
        %s303 = scalar_select %p302, %s299, 15
        %s304 = smul.addr %s301, 16
        %s305 = sadd.s32 %s303, %s304
        %s306 = smul.addr %s305, 8
        %s307 = scalar_lea.vmem %s1, %s306
        %p308 = pneg %p84
        %p309 = pneg %p81
        %p310 = pneg %p105
        %p311 = pneg %p102
        %p312 = pneg %p126
        %p313 = pneg %p123
        %p314 = pneg %p147
        %p315 = pneg %p144
        %s316 = sand.u32 %s162, 1
        %s317 = scalar_lea.sflag [#allocation4], %s316
        %s318 = sand.u32 %s162, 1
        %s319 = smul.addr %s318, 1024
        %s320 = scalar_lea.vmem [#allocation3], %s319
        %p321 = pneg %p175
        %p322 = pneg %p172
        %p323 = pneg %p203
        %p324 = pneg %p200
        %s325 = sand.u32 %s190, 1
        %s326 = scalar_lea.sflag [#allocation5], %s325
        %s327 = sand.u32 %s190, 1
        %s328 = smul.addr %s327, 1024
        %s329 = scalar_lea.vmem [#allocation6], %s328
        %p330 = scmp.lt.s32.totalorder %s27, 1
        %s331 = scalar_select %p330, %s27, 1
        %s332 = smul.addr %s331, 16
        %s333 = smul.addr %s332, 8
        %s334 = scalar_lea.vmem %s0, %s333
        %s335 = smul.u32 16, %s28
        %p336 = scmp.lt.s32.totalorder %s27, 1
        %s337 = scalar_select %p336, %s27, 1
        %p338 = scmp.lt.s32.totalorder %s335, 15
        %s339 = scalar_select %p338, %s335, 15
        %s340 = smul.addr %s337, 16
        %s341 = sadd.s32 %s339, %s340
        %s342 = smul.addr %s341, 8
        %s343 = scalar_lea.vmem %s1, %s342
        %s344 = smul.u32 16, %s28
        %s345 = smul.u32 16, %s28
        %s346 = smul.u32 16, %s28
        %v348 = vld [vmem:[%s2] sm:$0xf]
        %v349 = vld [vmem:[%s2 + $0x4] sm:$0xf]
        %v350 = vld [vmem:[%s2 + $0x8] sm:$0xf]
        %v351 = vld [vmem:[%s2 + $0xc] sm:$0xf]
        %v352 = vld [vmem:[%s3] sm:$0x1]
        %p353 = scmp.eq.s32.totalorder %s28, 0
        // Predicated region
        $region49: #{tpu_custom_call.1} parent=43 // pred_check
          %p354 = pneg %p353
        $region50: #{tpu_custom_call.1} parent=43 // pred_check_branch
          %356 = sbr.rel (%p354) target = $region52
        $region51: #{tpu_custom_call.1} parent=43 // pred_region
          %v357 = vld [vmem:[%s334] sm:$0xff]
          %v358 = vld [vmem:[%s334 + $0x8] sm:$0xff]
          %v359 = vld [vmem:[%s334 + $0x10] sm:$0xff]
          %v360 = vld [vmem:[%s334 + $0x18] sm:$0xff]
          %v361 = vld [vmem:[%s334 + $0x20] sm:$0xff]
          %v362 = vld [vmem:[%s334 + $0x28] sm:$0xff]
          %v363 = vld [vmem:[%s334 + $0x30] sm:$0xff]
          %v364 = vld [vmem:[%s334 + $0x38] sm:$0xff]
          %v365 = vld [vmem:[%s334 + $0x40] sm:$0xff]
          %v366 = vld [vmem:[%s334 + $0x48] sm:$0xff]
          %v367 = vld [vmem:[%s334 + $0x50] sm:$0xff]
          %v368 = vld [vmem:[%s334 + $0x58] sm:$0xff]
          %v369 = vld [vmem:[%s334 + $0x60] sm:$0xff]
          %v370 = vld [vmem:[%s334 + $0x68] sm:$0xff]
          %v371 = vld [vmem:[%s334 + $0x70] sm:$0xff]
          %v372 = vld [vmem:[%s334 + $0x78] sm:$0xff]
          %v373 = vpack.c.bf16 %v358, %v357
          %v374 = vpack.c.bf16 %v360, %v359
          %v375 = vpack.c.bf16 %v362, %v361
          %v376 = vpack.c.bf16 %v364, %v363
          %v377 = vpack.c.bf16 %v366, %v365
          %v378 = vpack.c.bf16 %v368, %v367
          %v379 = vpack.c.bf16 %v370, %v369
          %v380 = vpack.c.bf16 %v372, %v371
          %v382 = vlaneseq
          %v383 = vshrl.u32 %v382, 7
          %v384 = vsub.s32 0, %v383
          %v385 = vrot.slane %v352, %v384
          %v391 = vunpack.c.l.b16 %v348
          %v392 = vunpack.c.l.b16 %v349
          %v393 = vunpack.c.l.b16 %v350
          %v394 = vunpack.c.l.b16 %v351
          %v395 = vpack.c.b16 %v392, %v391
          %v396 = vpack.c.b16 %v394, %v393
          %vm399 = vcmask 261120
          %v401 = vsel %vm399, %v373, 0
          %v404 = vsel %vm399, %v374, 0
          %v407 = vsel %vm399, %v375, 0
          %v410 = vsel %vm399, %v376, 0
          %v413 = vsel %vm399, %v377, 0
          %v416 = vsel %vm399, %v378, 0
          %v419 = vsel %vm399, %v379, 0
          %v422 = vsel %vm399, %v380, 0
          %424 = vmatprep.subr.bf16.mxu0 0
          %425 = vmatpush1.bf16.msra.mxu0 %v395
          %426 = vmatprep.subr.bf16.mxu0 0
          %427 = vmatpush1.bf16.msra.mxu0 %v396
          %428 = vmatprep.subr.bf16.mxu0 0
          %429 = vmatpush1.bf16.msra.mxu0 0
          %430 = vmatprep.subr.bf16.mxu0 0
          %431 = vmatpush1.bf16.msra.mxu0 0
          %432 = vmatprep.subr.bf16.mxu0 0
          %433 = vmatpush1.bf16.msra.mxu0 0
          %434 = vmatprep.subr.bf16.mxu0 0
          %435 = vmatpush1.bf16.msra.mxu0 0
          %436 = vmatprep.subr.bf16.mxu0 0
          %437 = vmatpush1.bf16.msra.mxu0 0
          %438 = vmatprep.subr.bf16.mxu0 0
          %439 = vmatpush1.bf16.msra.mxu0 0
          %440 = vmatprep.subr.bf16.mxu0 0
          %441 = vmatpush1.bf16.msra.mxu0 0
          %442 = vmatprep.subr.bf16.mxu0 0
          %443 = vmatpush1.bf16.msra.mxu0 0
          %444 = vmatprep.subr.bf16.mxu0 0
          %445 = vmatpush1.bf16.msra.mxu0 0
          %446 = vmatprep.subr.bf16.mxu0 0
          %447 = vmatpush1.bf16.msra.mxu0 0
          %448 = vmatprep.subr.bf16.mxu0 0
          %449 = vmatpush1.bf16.msra.mxu0 0
          %450 = vmatprep.subr.bf16.mxu0 0
          %451 = vmatpush1.bf16.msra.mxu0 0
          %452 = vmatprep.subr.bf16.mxu0 0
          %453 = vmatpush1.bf16.msra.mxu0 0
          %454 = vmatprep.subr.bf16.mxu0 0
          %455 = vmatpush1.bf16.msra.mxu0 0
          %456 = vmatprep.mubr.bf16.mxu0 0
          %457 = vmatmul.mubr.bf16.gmra.mrb[0].mxu0 %v401
          %v458 = vpop.f32.mrb[0].mxu0
          %v459 = vadd.f32 %v385, %v458
          %v460 = vpop.f32.mrb[0].mxu0
          %v461 = vpop.f32.mrb[0].mxu0
          %v462 = vadd.f32 %v385, %v461
          %v463 = vpop.f32.mrb[0].mxu0
          %464 = vmatprep.mubr.bf16.mxu0 0
          %465 = vmatmul.mubr.bf16.gmra.mrb[0].mxu0 %v404
          %v466 = vpop.f32.mrb[0].mxu0
          %v467 = vadd.f32 %v385, %v466
          %v468 = vpop.f32.mrb[0].mxu0
          %v469 = vpop.f32.mrb[0].mxu0
          %v470 = vadd.f32 %v385, %v469
          %v471 = vpop.f32.mrb[0].mxu0
          %472 = vmatprep.mubr.bf16.mxu0 0
          %473 = vmatmul.mubr.bf16.gmra.mrb[0].mxu0 %v407
          %v474 = vpop.f32.mrb[0].mxu0
          %v475 = vadd.f32 %v385, %v474
          %v476 = vpop.f32.mrb[0].mxu0
          %v477 = vpop.f32.mrb[0].mxu0
          %v478 = vadd.f32 %v385, %v477
          %v479 = vpop.f32.mrb[0].mxu0
          %480 = vmatprep.mubr.bf16.mxu0 0
          %481 = vmatmul.mubr.bf16.gmra.mrb[0].mxu0 %v410
          %v482 = vpop.f32.mrb[0].mxu0
          %v483 = vadd.f32 %v385, %v482
          %v484 = vpop.f32.mrb[0].mxu0
          %v485 = vpop.f32.mrb[0].mxu0
          %v486 = vadd.f32 %v385, %v485
          %v487 = vpop.f32.mrb[0].mxu0
          %488 = vmatprep.mubr.bf16.mxu0 0
          %489 = vmatmul.mubr.bf16.gmra.mrb[0].mxu0 %v413
          %v490 = vpop.f32.mrb[0].mxu0
          %v491 = vadd.f32 %v385, %v490
          %v492 = vpop.f32.mrb[0].mxu0
          %v493 = vpop.f32.mrb[0].mxu0
          %v494 = vadd.f32 %v385, %v493
          %v495 = vpop.f32.mrb[0].mxu0
          %496 = vmatprep.mubr.bf16.mxu0 0
          %497 = vmatmul.mubr.bf16.gmra.mrb[0].mxu0 %v416
          %v498 = vpop.f32.mrb[0].mxu0
          %v499 = vadd.f32 %v385, %v498
          %v500 = vpop.f32.mrb[0].mxu0
          %v501 = vpop.f32.mrb[0].mxu0
          %v502 = vadd.f32 %v385, %v501
          %v503 = vpop.f32.mrb[0].mxu0
          %504 = vmatprep.mubr.bf16.mxu0 0
          %505 = vmatmul.mubr.bf16.gmra.mrb[0].mxu0 %v419
          %v506 = vpop.f32.mrb[0].mxu0
          %v507 = vadd.f32 %v385, %v506
          %v508 = vpop.f32.mrb[0].mxu0
          %v509 = vpop.f32.mrb[0].mxu0
          %v510 = vadd.f32 %v385, %v509
          %v511 = vpop.f32.mrb[0].mxu0
          %512 = vmatprep.mubr.bf16.mxu0 0
          %513 = vmatmul.mubr.bf16.gmra.mrb[0].mxu0 %v422
          %v514 = vpop.f32.mrb[0].mxu0
          %v515 = vadd.f32 %v385, %v514
          %v516 = vpop.f32.mrb[0].mxu0
          %v517 = vpop.f32.mrb[0].mxu0
          %v518 = vadd.f32 %v385, %v517
          %v519 = vpop.f32.mrb[0].mxu0
          %520 = vdwg.mxu0
          %v521 = vpack.c.bf16 %v462, %v459
          %v522 = vpack.c.bf16 %v470, %v467
          %v523 = vpack.c.bf16 %v478, %v475
          %v524 = vpack.c.bf16 %v486, %v483
          %v525 = vpack.c.bf16 %v494, %v491
          %v526 = vpack.c.bf16 %v502, %v499
          %v527 = vpack.c.bf16 %v510, %v507
          %v528 = vpack.c.bf16 %v518, %v515
          %v529 = vld [vmem:[%s4] sm:$0xf]
          %v530 = vld [vmem:[%s4 + $0x4] sm:$0xf]
          %v531 = vld [vmem:[%s4 + $0x8] sm:$0xf]
          %v532 = vld [vmem:[%s4 + $0xc] sm:$0xf]
          %v533 = vld [vmem:[%s4 + $0x10] sm:$0xf]
          %v534 = vld [vmem:[%s4 + $0x14] sm:$0xf]
          %v535 = vld [vmem:[%s4 + $0x18] sm:$0xf]
          %v536 = vld [vmem:[%s4 + $0x1c] sm:$0xf]
          %v537 = vld [vmem:[%s4 + $0x20] sm:$0xf]
          %v538 = vld [vmem:[%s4 + $0x24] sm:$0xf]
          %v539 = vld [vmem:[%s4 + $0x28] sm:$0xf]
          %v540 = vld [vmem:[%s4 + $0x2c] sm:$0xf]
          %v541 = vld [vmem:[%s4 + $0x30] sm:$0xf]
          %v542 = vld [vmem:[%s4 + $0x34] sm:$0xf]
          %v543 = vld [vmem:[%s4 + $0x38] sm:$0xf]
          %v544 = vld [vmem:[%s4 + $0x3c] sm:$0xf]
          %v545 = vld [vmem:[%s4 + $0x40] sm:$0xf]
          %v546 = vld [vmem:[%s4 + $0x44] sm:$0xf]
          %v547 = vld [vmem:[%s4 + $0x48] sm:$0xf]
          %v548 = vld [vmem:[%s4 + $0x4c] sm:$0xf]
          %v549 = vld [vmem:[%s4 + $0x50] sm:$0xf]
          %v550 = vld [vmem:[%s4 + $0x54] sm:$0xf]
          %v551 = vld [vmem:[%s4 + $0x58] sm:$0xf]
          %v552 = vld [vmem:[%s4 + $0x5c] sm:$0xf]
          %v553 = vld [vmem:[%s4 + $0x60] sm:$0xf]
          %v554 = vld [vmem:[%s4 + $0x64] sm:$0xf]
          %v555 = vld [vmem:[%s4 + $0x68] sm:$0xf]
          %v556 = vld [vmem:[%s4 + $0x6c] sm:$0xf]
          %v557 = vld [vmem:[%s4 + $0x70] sm:$0xf]
          %v558 = vld [vmem:[%s4 + $0x74] sm:$0xf]
          %v559 = vld [vmem:[%s4 + $0x78] sm:$0xf]
          %v560 = vld [vmem:[%s4 + $0x7c] sm:$0xf]
          %v593 = vunpack.c.l.b16 %v529
          %v594 = vunpack.c.l.b16 %v530
          %v595 = vunpack.c.l.b16 %v531
          %v596 = vunpack.c.l.b16 %v532
          %v597 = vunpack.c.l.b16 %v533
          %v598 = vunpack.c.l.b16 %v534
          %v599 = vunpack.c.l.b16 %v535
          %v600 = vunpack.c.l.b16 %v536
          %v601 = vunpack.c.l.b16 %v537
          %v602 = vunpack.c.l.b16 %v538
          %v603 = vunpack.c.l.b16 %v539
          %v604 = vunpack.c.l.b16 %v540
          %v605 = vunpack.c.l.b16 %v541
          %v606 = vunpack.c.l.b16 %v542
          %v607 = vunpack.c.l.b16 %v543
          %v608 = vunpack.c.l.b16 %v544
          %v609 = vunpack.c.l.b16 %v545
          %v610 = vunpack.c.l.b16 %v546
          %v611 = vunpack.c.l.b16 %v547
          %v612 = vunpack.c.l.b16 %v548
          %v613 = vunpack.c.l.b16 %v549
          %v614 = vunpack.c.l.b16 %v550
          %v615 = vunpack.c.l.b16 %v551
          %v616 = vunpack.c.l.b16 %v552
          %v617 = vunpack.c.l.b16 %v553
          %v618 = vunpack.c.l.b16 %v554
          %v619 = vunpack.c.l.b16 %v555
          %v620 = vunpack.c.l.b16 %v556
          %v621 = vunpack.c.l.b16 %v557
          %v622 = vunpack.c.l.b16 %v558
          %v623 = vunpack.c.l.b16 %v559
          %v624 = vunpack.c.l.b16 %v560
          %v625 = vpack.c.b16 %v594, %v593
          %v626 = vpack.c.b16 %v596, %v595
          %v627 = vpack.c.b16 %v598, %v597
          %v628 = vpack.c.b16 %v600, %v599
          %v629 = vpack.c.b16 %v602, %v601
          %v630 = vpack.c.b16 %v604, %v603
          %v631 = vpack.c.b16 %v606, %v605
          %v632 = vpack.c.b16 %v608, %v607
          %v633 = vpack.c.b16 %v610, %v609
          %v634 = vpack.c.b16 %v612, %v611
          %v635 = vpack.c.b16 %v614, %v613
          %v636 = vpack.c.b16 %v616, %v615
          %v637 = vpack.c.b16 %v618, %v617
          %v638 = vpack.c.b16 %v620, %v619
          %v639 = vpack.c.b16 %v622, %v621
          %v640 = vpack.c.b16 %v624, %v623
          %vm641 = vcmask 130048
          %v643 = vsel %vm641, %v625, 0
          %v646 = vsel %vm641, %v626, 0
          %v649 = vsel %vm641, %v627, 0
          %v652 = vsel %vm641, %v628, 0
          %v655 = vsel %vm641, %v629, 0
          %v658 = vsel %vm641, %v630, 0
          %v661 = vsel %vm641, %v631, 0
          %v664 = vsel %vm641, %v632, 0
          %v667 = vsel %vm641, %v633, 0
          %v670 = vsel %vm641, %v634, 0
          %v673 = vsel %vm641, %v635, 0
          %v676 = vsel %vm641, %v636, 0
          %v679 = vsel %vm641, %v637, 0
          %v682 = vsel %vm641, %v638, 0
          %v685 = vsel %vm641, %v639, 0
          %v688 = vsel %vm641, %v640, 0
          %v691 = vsel %vm641, %v521, 0
          %v694 = vsel %vm641, %v522, 0
          %v697 = vsel %vm641, %v523, 0
          %v700 = vsel %vm641, %v524, 0
          %v703 = vsel %vm641, %v525, 0
          %v706 = vsel %vm641, %v526, 0
          %v709 = vsel %vm641, %v527, 0
          %v712 = vsel %vm641, %v528, 0
          %714 = vmatprep.subr.bf16.mxu0 0
          %715 = vmatpush1.bf16.xpose.msra.mxu0 %v691
          %716 = vmatprep.subr.bf16.mxu0 0
          %717 = vmatpush1.bf16.xpose.msra.mxu0 %v694
          %718 = vmatprep.subr.bf16.mxu0 0
          %719 = vmatpush1.bf16.xpose.msra.mxu0 %v697
          %720 = vmatprep.subr.bf16.mxu0 0
          %721 = vmatpush1.bf16.xpose.msra.mxu0 %v700
          %722 = vmatprep.subr.bf16.mxu0 0
          %723 = vmatpush1.bf16.xpose.msra.mxu0 %v703
          %724 = vmatprep.subr.bf16.mxu0 0
          %725 = vmatpush1.bf16.xpose.msra.mxu0 %v706
          %726 = vmatprep.subr.bf16.mxu0 0
          %727 = vmatpush1.bf16.xpose.msra.mxu0 %v709
          %728 = vmatprep.subr.bf16.mxu0 0
          %729 = vmatpush1.bf16.xpose.msra.mxu0 %v712
          %730 = vmatprep.subr.bf16.mxu0 0
          %731 = vmatpush1.bf16.xpose.msra.mxu0 0
          %732 = vmatprep.subr.bf16.mxu0 0
          %733 = vmatpush1.bf16.xpose.msra.mxu0 0
          %734 = vmatprep.subr.bf16.mxu0 0
          %735 = vmatpush1.bf16.xpose.msra.mxu0 0
          %736 = vmatprep.subr.bf16.mxu0 0
          %737 = vmatpush1.bf16.xpose.msra.mxu0 0
          %738 = vmatprep.subr.bf16.mxu0 0
          %739 = vmatpush1.bf16.xpose.msra.mxu0 0
          %740 = vmatprep.subr.bf16.mxu0 0
          %741 = vmatpush1.bf16.xpose.msra.mxu0 0
          %742 = vmatprep.subr.bf16.mxu0 0
          %743 = vmatpush1.bf16.xpose.msra.mxu0 0
          %744 = vmatprep.subr.bf16.mxu0 0
          %745 = vmatpush1.bf16.xpose.msra.mxu0 0
          %746 = vmatprep.mubr.bf16.mxu0 0
          %747 = vmatmul.mubr.bf16.gmra.mrb[0].mxu0 %v643
          %v748 = vpop.f32.mrb[0].mxu0
          %v749 = vadd.f32 0.0, %v748
          %v750 = vpop.f32.mrb[0].mxu0
          %v751 = vpop.f32.mrb[0].mxu0
          %v752 = vadd.f32 0.0, %v751
          %v753 = vpop.f32.mrb[0].mxu0
          %754 = vmatprep.mubr.bf16.mxu0 0
          %755 = vmatmul.mubr.bf16.gmra.mrb[0].mxu0 %v646
          %v756 = vpop.f32.mrb[0].mxu0
          %v757 = vadd.f32 0.0, %v756
          %v758 = vpop.f32.mrb[0].mxu0
          %v759 = vpop.f32.mrb[0].mxu0
          %v760 = vadd.f32 0.0, %v759
          %v761 = vpop.f32.mrb[0].mxu0
          %762 = vmatprep.mubr.bf16.mxu0 0
          %763 = vmatmul.mubr.bf16.gmra.mrb[0].mxu0 %v649
          %v764 = vpop.f32.mrb[0].mxu0
          %v765 = vadd.f32 0.0, %v764
          %v766 = vpop.f32.mrb[0].mxu0
          %v767 = vpop.f32.mrb[0].mxu0
          %v768 = vadd.f32 0.0, %v767
          %v769 = vpop.f32.mrb[0].mxu0
          %770 = vmatprep.mubr.bf16.mxu0 0
          %771 = vmatmul.mubr.bf16.gmra.mrb[0].mxu0 %v652
          %v772 = vpop.f32.mrb[0].mxu0
          %v773 = vadd.f32 0.0, %v772
          %v774 = vpop.f32.mrb[0].mxu0
          %v775 = vpop.f32.mrb[0].mxu0
          %v776 = vadd.f32 0.0, %v775
          %v777 = vpop.f32.mrb[0].mxu0
          %778 = vmatprep.mubr.bf16.mxu0 0
          %779 = vmatmul.mubr.bf16.gmra.mrb[0].mxu0 %v655
          %v780 = vpop.f32.mrb[0].mxu0
          %v781 = vadd.f32 0.0, %v780
          %v782 = vpop.f32.mrb[0].mxu0
          %v783 = vpop.f32.mrb[0].mxu0
          %v784 = vadd.f32 0.0, %v783
          %v785 = vpop.f32.mrb[0].mxu0
          %786 = vmatprep.mubr.bf16.mxu0 0
          %787 = vmatmul.mubr.bf16.gmra.mrb[0].mxu0 %v658
          %v788 = vpop.f32.mrb[0].mxu0
          %v789 = vadd.f32 0.0, %v788
          %v790 = vpop.f32.mrb[0].mxu0
          %v791 = vpop.f32.mrb[0].mxu0
          %v792 = vadd.f32 0.0, %v791
          %v793 = vpop.f32.mrb[0].mxu0
          %794 = vmatprep.mubr.bf16.mxu0 0
          %795 = vmatmul.mubr.bf16.gmra.mrb[0].mxu0 %v661
          %v796 = vpop.f32.mrb[0].mxu0
          %v797 = vadd.f32 0.0, %v796
          %v798 = vpop.f32.mrb[0].mxu0
          %v799 = vpop.f32.mrb[0].mxu0
          %v800 = vadd.f32 0.0, %v799
          %v801 = vpop.f32.mrb[0].mxu0
          %802 = vmatprep.mubr.bf16.mxu0 0
          %803 = vmatmul.mubr.bf16.gmra.mrb[0].mxu0 %v664
          %v804 = vpop.f32.mrb[0].mxu0
          %v805 = vadd.f32 0.0, %v804
          %v806 = vpop.f32.mrb[0].mxu0
          %v807 = vpop.f32.mrb[0].mxu0
          %v808 = vadd.f32 0.0, %v807
          %v809 = vpop.f32.mrb[0].mxu0
          %810 = vmatprep.mubr.bf16.mxu0 0
          %811 = vmatmul.mubr.bf16.gmra.mrb[0].mxu0 %v667
          %v812 = vpop.f32.mrb[0].mxu0
          %v813 = vadd.f32 0.0, %v812
          %v814 = vpop.f32.mrb[0].mxu0
          %v815 = vpop.f32.mrb[0].mxu0
          %v816 = vadd.f32 0.0, %v815
          %v817 = vpop.f32.mrb[0].mxu0
          %818 = vmatprep.mubr.bf16.mxu0 0
          %819 = vmatmul.mubr.bf16.gmra.mrb[0].mxu0 %v670
          %v820 = vpop.f32.mrb[0].mxu0
          %v821 = vadd.f32 0.0, %v820
          %v822 = vpop.f32.mrb[0].mxu0
          %v823 = vpop.f32.mrb[0].mxu0
          %v824 = vadd.f32 0.0, %v823
          %v825 = vpop.f32.mrb[0].mxu0
          %826 = vmatprep.mubr.bf16.mxu0 0
          %827 = vmatmul.mubr.bf16.gmra.mrb[0].mxu0 %v673
          %v828 = vpop.f32.mrb[0].mxu0
          %v829 = vadd.f32 0.0, %v828
          %v830 = vpop.f32.mrb[0].mxu0
          %v831 = vpop.f32.mrb[0].mxu0
          %v832 = vadd.f32 0.0, %v831
          %v833 = vpop.f32.mrb[0].mxu0
          %834 = vmatprep.mubr.bf16.mxu0 0
          %835 = vmatmul.mubr.bf16.gmra.mrb[0].mxu0 %v676
          %v836 = vpop.f32.mrb[0].mxu0
          %v837 = vadd.f32 0.0, %v836
          %v838 = vpop.f32.mrb[0].mxu0
          %v839 = vpop.f32.mrb[0].mxu0
          %v840 = vadd.f32 0.0, %v839
          %v841 = vpop.f32.mrb[0].mxu0
          %842 = vmatprep.mubr.bf16.mxu0 0
          %843 = vmatmul.mubr.bf16.gmra.mrb[0].mxu0 %v679
          %v844 = vpop.f32.mrb[0].mxu0
          %v845 = vadd.f32 0.0, %v844
          %v846 = vpop.f32.mrb[0].mxu0
          %v847 = vpop.f32.mrb[0].mxu0
          %v848 = vadd.f32 0.0, %v847
          %v849 = vpop.f32.mrb[0].mxu0
          %850 = vmatprep.mubr.bf16.mxu0 0
          %851 = vmatmul.mubr.bf16.gmra.mrb[0].mxu0 %v682
          %v852 = vpop.f32.mrb[0].mxu0
          %v853 = vadd.f32 0.0, %v852
          %v854 = vpop.f32.mrb[0].mxu0
          %v855 = vpop.f32.mrb[0].mxu0
          %v856 = vadd.f32 0.0, %v855
          %v857 = vpop.f32.mrb[0].mxu0
          %858 = vmatprep.mubr.bf16.mxu0 0
          %859 = vmatmul.mubr.bf16.gmra.mrb[0].mxu0 %v685
          %v860 = vpop.f32.mrb[0].mxu0
          %v861 = vadd.f32 0.0, %v860
          %v862 = vpop.f32.mrb[0].mxu0
          %v863 = vpop.f32.mrb[0].mxu0
          %v864 = vadd.f32 0.0, %v863
          %v865 = vpop.f32.mrb[0].mxu0
          %866 = vmatprep.mubr.bf16.mxu0 0
          %867 = vmatmul.mubr.bf16.gmra.mrb[0].mxu0 %v688
          %v868 = vpop.f32.mrb[0].mxu0
          %v869 = vadd.f32 0.0, %v868
          %v870 = vpop.f32.mrb[0].mxu0
          %v871 = vpop.f32.mrb[0].mxu0
          %v872 = vadd.f32 0.0, %v871
          %v873 = vpop.f32.mrb[0].mxu0
          %874 = vdwg.mxu0
          %v875 = vpack.c.bf16 %v752, %v749
          %876 = vst [vmem:[#allocation2] sm:$0xff] %v875
          %v877 = vpack.c.bf16 %v760, %v757
          %878 = vst [vmem:[#allocation2 + $0x8] sm:$0xff] %v877
          %v879 = vpack.c.bf16 %v768, %v765
          %880 = vst [vmem:[#allocation2 + $0x10] sm:$0xff] %v879
          %v881 = vpack.c.bf16 %v776, %v773
          %882 = vst [vmem:[#allocation2 + $0x18] sm:$0xff] %v881
          %v883 = vpack.c.bf16 %v784, %v781
          %884 = vst [vmem:[#allocation2 + $0x20] sm:$0xff] %v883
          %v885 = vpack.c.bf16 %v792, %v789
          %886 = vst [vmem:[#allocation2 + $0x28] sm:$0xff] %v885
          %v887 = vpack.c.bf16 %v800, %v797
          %888 = vst [vmem:[#allocation2 + $0x30] sm:$0xff] %v887
          %v889 = vpack.c.bf16 %v808, %v805
          %890 = vst [vmem:[#allocation2 + $0x38] sm:$0xff] %v889
          %v891 = vpack.c.bf16 %v816, %v813
          %892 = vst [vmem:[#allocation2 + $0x40] sm:$0xff] %v891
          %v893 = vpack.c.bf16 %v824, %v821
          %894 = vst [vmem:[#allocation2 + $0x48] sm:$0xff] %v893
          %v895 = vpack.c.bf16 %v832, %v829
          %896 = vst [vmem:[#allocation2 + $0x50] sm:$0xff] %v895
          %v897 = vpack.c.bf16 %v840, %v837
          %898 = vst [vmem:[#allocation2 + $0x58] sm:$0xff] %v897
          %v899 = vpack.c.bf16 %v848, %v845
          %900 = vst [vmem:[#allocation2 + $0x60] sm:$0xff] %v899
          %v901 = vpack.c.bf16 %v856, %v853
          %902 = vst [vmem:[#allocation2 + $0x68] sm:$0xff] %v901
          %v903 = vpack.c.bf16 %v864, %v861
          %904 = vst [vmem:[#allocation2 + $0x70] sm:$0xff] %v903
          %v905 = vpack.c.bf16 %v872, %v869
          %906 = vst [vmem:[#allocation2 + $0x78] sm:$0xff] %v905
        $region52: #{tpu_custom_call.1} parent=43 // pred_fallthru
          _
        %v907 = vld [vmem:[%s343] sm:$0xff]
        %v908 = vld [vmem:[%s343 + $0x8] sm:$0xff]
        %v909 = vld [vmem:[%s343 + $0x10] sm:$0xff]
        %v910 = vld [vmem:[%s343 + $0x18] sm:$0xff]
        %v911 = vld [vmem:[%s343 + $0x20] sm:$0xff]
        %v912 = vld [vmem:[%s343 + $0x28] sm:$0xff]
        %v913 = vld [vmem:[%s343 + $0x30] sm:$0xff]
        %v914 = vld [vmem:[%s343 + $0x38] sm:$0xff]
        %v915 = vld [vmem:[%s343 + $0x40] sm:$0xff]
        %v916 = vld [vmem:[%s343 + $0x48] sm:$0xff]
        %v917 = vld [vmem:[%s343 + $0x50] sm:$0xff]
        %v918 = vld [vmem:[%s343 + $0x58] sm:$0xff]
        %v919 = vld [vmem:[%s343 + $0x60] sm:$0xff]
        %v920 = vld [vmem:[%s343 + $0x68] sm:$0xff]
        %v921 = vld [vmem:[%s343 + $0x70] sm:$0xff]
        %v922 = vld [vmem:[%s343 + $0x78] sm:$0xff]
        %v923 = vpack.c.bf16 %v908, %v907
        %v924 = vpack.c.bf16 %v910, %v909
        %v925 = vpack.c.bf16 %v912, %v911
        %v926 = vpack.c.bf16 %v914, %v913
        %v927 = vpack.c.bf16 %v916, %v915
        %v928 = vpack.c.bf16 %v918, %v917
        %v929 = vpack.c.bf16 %v920, %v919
        %v930 = vpack.c.bf16 %v922, %v921
        %v932 = vlaneseq
        %v933 = vshrl.u32 %v932, 7
        %v934 = vsub.s32 0, %v933
        %v935 = vrot.slane %v352, %v934
        %v941 = vunpack.c.l.b16 %v348
        %v942 = vunpack.c.l.b16 %v349
        %v943 = vunpack.c.l.b16 %v350
        %v944 = vunpack.c.l.b16 %v351
        %v945 = vpack.c.b16 %v942, %v941
        %v946 = vpack.c.b16 %v944, %v943
        %vm949 = vcmask 261120
        %v951 = vsel %vm949, %v923, 0
        %v954 = vsel %vm949, %v924, 0
        %v957 = vsel %vm949, %v925, 0
        %v960 = vsel %vm949, %v926, 0
        %v963 = vsel %vm949, %v927, 0
        %v966 = vsel %vm949, %v928, 0
        %v969 = vsel %vm949, %v929, 0
        %v972 = vsel %vm949, %v930, 0
        %974 = vmatprep.subr.bf16.mxu0 0
        %975 = vmatpush1.bf16.msra.mxu0 %v945
        %976 = vmatprep.subr.bf16.mxu0 0
        %977 = vmatpush1.bf16.msra.mxu0 %v946
        %978 = vmatprep.subr.bf16.mxu0 0
        %979 = vmatpush1.bf16.msra.mxu0 0
        %980 = vmatprep.subr.bf16.mxu0 0
        %981 = vmatpush1.bf16.msra.mxu0 0
        %982 = vmatprep.subr.bf16.mxu0 0
        %983 = vmatpush1.bf16.msra.mxu0 0
        %984 = vmatprep.subr.bf16.mxu0 0
        %985 = vmatpush1.bf16.msra.mxu0 0
        %986 = vmatprep.subr.bf16.mxu0 0
        %987 = vmatpush1.bf16.msra.mxu0 0
        %988 = vmatprep.subr.bf16.mxu0 0
        %989 = vmatpush1.bf16.msra.mxu0 0
        %990 = vmatprep.subr.bf16.mxu0 0
        %991 = vmatpush1.bf16.msra.mxu0 0
        %992 = vmatprep.subr.bf16.mxu0 0
        %993 = vmatpush1.bf16.msra.mxu0 0
        %994 = vmatprep.subr.bf16.mxu0 0
        %995 = vmatpush1.bf16.msra.mxu0 0
        %996 = vmatprep.subr.bf16.mxu0 0
        %997 = vmatpush1.bf16.msra.mxu0 0
        %998 = vmatprep.subr.bf16.mxu0 0
        %999 = vmatpush1.bf16.msra.mxu0 0
        %1000 = vmatprep.subr.bf16.mxu0 0
        %1001 = vmatpush1.bf16.msra.mxu0 0
        %1002 = vmatprep.subr.bf16.mxu0 0
        %1003 = vmatpush1.bf16.msra.mxu0 0
        %1004 = vmatprep.subr.bf16.mxu0 0
        %1005 = vmatpush1.bf16.msra.mxu0 0
        %1006 = vmatprep.mubr.bf16.mxu0 0
        %1007 = vmatmul.mubr.bf16.gmra.mrb[0].mxu0 %v951
        %v1008 = vpop.f32.mrb[0].mxu0
        %v1009 = vadd.f32 %v935, %v1008
        %v1010 = vpop.f32.mrb[0].mxu0
        %v1011 = vpop.f32.mrb[0].mxu0
        %v1012 = vadd.f32 %v935, %v1011
        %v1013 = vpop.f32.mrb[0].mxu0
        %1014 = vmatprep.mubr.bf16.mxu0 0
        %1015 = vmatmul.mubr.bf16.gmra.mrb[0].mxu0 %v954
        %v1016 = vpop.f32.mrb[0].mxu0
        %v1017 = vadd.f32 %v935, %v1016
        %v1018 = vpop.f32.mrb[0].mxu0
        %v1019 = vpop.f32.mrb[0].mxu0
        %v1020 = vadd.f32 %v935, %v1019
        %v1021 = vpop.f32.mrb[0].mxu0
        %1022 = vmatprep.mubr.bf16.mxu0 0
        %1023 = vmatmul.mubr.bf16.gmra.mrb[0].mxu0 %v957
        %v1024 = vpop.f32.mrb[0].mxu0
        %v1025 = vadd.f32 %v935, %v1024
        %v1026 = vpop.f32.mrb[0].mxu0
        %v1027 = vpop.f32.mrb[0].mxu0
        %v1028 = vadd.f32 %v935, %v1027
        %v1029 = vpop.f32.mrb[0].mxu0
        %1030 = vmatprep.mubr.bf16.mxu0 0
        %1031 = vmatmul.mubr.bf16.gmra.mrb[0].mxu0 %v960
        %v1032 = vpop.f32.mrb[0].mxu0
        %v1033 = vadd.f32 %v935, %v1032
        %v1034 = vpop.f32.mrb[0].mxu0
        %v1035 = vpop.f32.mrb[0].mxu0
        %v1036 = vadd.f32 %v935, %v1035
        %v1037 = vpop.f32.mrb[0].mxu0
        %1038 = vmatprep.mubr.bf16.mxu0 0
        %1039 = vmatmul.mubr.bf16.gmra.mrb[0].mxu0 %v963
        %v1040 = vpop.f32.mrb[0].mxu0
        %v1041 = vadd.f32 %v935, %v1040
        %v1042 = vpop.f32.mrb[0].mxu0
        %v1043 = vpop.f32.mrb[0].mxu0
        %v1044 = vadd.f32 %v935, %v1043
        %v1045 = vpop.f32.mrb[0].mxu0
        %1046 = vmatprep.mubr.bf16.mxu0 0
        %1047 = vmatmul.mubr.bf16.gmra.mrb[0].mxu0 %v966
        %v1048 = vpop.f32.mrb[0].mxu0
        %v1049 = vadd.f32 %v935, %v1048
        %v1050 = vpop.f32.mrb[0].mxu0
        %v1051 = vpop.f32.mrb[0].mxu0
        %v1052 = vadd.f32 %v935, %v1051
        %v1053 = vpop.f32.mrb[0].mxu0
        %1054 = vmatprep.mubr.bf16.mxu0 0
        %1055 = vmatmul.mubr.bf16.gmra.mrb[0].mxu0 %v969
        %v1056 = vpop.f32.mrb[0].mxu0
        %v1057 = vadd.f32 %v935, %v1056
        %v1058 = vpop.f32.mrb[0].mxu0
        %v1059 = vpop.f32.mrb[0].mxu0
        %v1060 = vadd.f32 %v935, %v1059
        %v1061 = vpop.f32.mrb[0].mxu0
        %1062 = vmatprep.mubr.bf16.mxu0 0
        %1063 = vmatmul.mubr.bf16.gmra.mrb[0].mxu0 %v972
        %v1064 = vpop.f32.mrb[0].mxu0
        %v1065 = vadd.f32 %v935, %v1064
        %v1066 = vpop.f32.mrb[0].mxu0
        %v1067 = vpop.f32.mrb[0].mxu0
        %v1068 = vadd.f32 %v935, %v1067
        %v1069 = vpop.f32.mrb[0].mxu0
        %1070 = vdwg.mxu0
        %v1071 = vpack.c.bf16 %v1012, %v1009
        %v1072 = vpack.c.bf16 %v1020, %v1017
        %v1073 = vpack.c.bf16 %v1028, %v1025
        %v1074 = vpack.c.bf16 %v1036, %v1033
        %v1075 = vpack.c.bf16 %v1044, %v1041
        %v1076 = vpack.c.bf16 %v1052, %v1049
        %v1077 = vpack.c.bf16 %v1060, %v1057
        %v1078 = vpack.c.bf16 %v1068, %v1065
        %v1079 = vld [vmem:[#allocation2] sm:$0xff]
        %v1080 = vld [vmem:[#allocation2 + $0x8] sm:$0xff]
        %v1081 = vld [vmem:[#allocation2 + $0x10] sm:$0xff]
        %v1082 = vld [vmem:[#allocation2 + $0x18] sm:$0xff]
        %v1083 = vld [vmem:[#allocation2 + $0x20] sm:$0xff]
        %v1084 = vld [vmem:[#allocation2 + $0x28] sm:$0xff]
        %v1085 = vld [vmem:[#allocation2 + $0x30] sm:$0xff]
        %v1086 = vld [vmem:[#allocation2 + $0x38] sm:$0xff]
        %v1087 = vld [vmem:[#allocation2 + $0x40] sm:$0xff]
        %v1088 = vld [vmem:[#allocation2 + $0x48] sm:$0xff]
        %v1089 = vld [vmem:[#allocation2 + $0x50] sm:$0xff]
        %v1090 = vld [vmem:[#allocation2 + $0x58] sm:$0xff]
        %v1091 = vld [vmem:[#allocation2 + $0x60] sm:$0xff]
        %v1092 = vld [vmem:[#allocation2 + $0x68] sm:$0xff]
        %v1093 = vld [vmem:[#allocation2 + $0x70] sm:$0xff]
        %v1094 = vld [vmem:[#allocation2 + $0x78] sm:$0xff]
        %v1095 = vld [vmem:[%s287] sm:$0xff]
        %v1096 = vld [vmem:[%s287 + $0x8] sm:$0xff]
        %v1097 = vld [vmem:[%s287 + $0x10] sm:$0xff]
        %v1098 = vld [vmem:[%s287 + $0x18] sm:$0xff]
        %v1099 = vld [vmem:[%s287 + $0x20] sm:$0xff]
        %v1100 = vld [vmem:[%s287 + $0x28] sm:$0xff]
        %v1101 = vld [vmem:[%s287 + $0x30] sm:$0xff]
        %v1102 = vld [vmem:[%s287 + $0x38] sm:$0xff]
        %v1103 = vld [vmem:[%s287 + $0x40] sm:$0xff]
        %v1104 = vld [vmem:[%s287 + $0x48] sm:$0xff]
        %v1105 = vld [vmem:[%s287 + $0x50] sm:$0xff]
        %v1106 = vld [vmem:[%s287 + $0x58] sm:$0xff]
        %v1107 = vld [vmem:[%s287 + $0x60] sm:$0xff]
        %v1108 = vld [vmem:[%s287 + $0x68] sm:$0xff]
        %v1109 = vld [vmem:[%s287 + $0x70] sm:$0xff]
        %v1110 = vld [vmem:[%s287 + $0x78] sm:$0xff]
        %v1111 = vld [vmem:[%s287 + $0x80] sm:$0xff]
        %v1112 = vld [vmem:[%s287 + $0x88] sm:$0xff]
        %v1113 = vld [vmem:[%s287 + $0x90] sm:$0xff]
        %v1114 = vld [vmem:[%s287 + $0x98] sm:$0xff]
        %v1115 = vld [vmem:[%s287 + $0xa0] sm:$0xff]
        %v1116 = vld [vmem:[%s287 + $0xa8] sm:$0xff]
        %v1117 = vld [vmem:[%s287 + $0xb0] sm:$0xff]
        %v1118 = vld [vmem:[%s287 + $0xb8] sm:$0xff]
        %v1119 = vld [vmem:[%s287 + $0xc0] sm:$0xff]
        %v1120 = vld [vmem:[%s287 + $0xc8] sm:$0xff]
        %v1121 = vld [vmem:[%s287 + $0xd0] sm:$0xff]
        %v1122 = vld [vmem:[%s287 + $0xd8] sm:$0xff]
        %v1123 = vld [vmem:[%s287 + $0xe0] sm:$0xff]
        %v1124 = vld [vmem:[%s287 + $0xe8] sm:$0xff]
        %v1125 = vld [vmem:[%s287 + $0xf0] sm:$0xff]
        %v1126 = vld [vmem:[%s287 + $0xf8] sm:$0xff]
        %v1127 = vld [vmem:[%s287 + $0x100] sm:$0xff]
        %v1128 = vld [vmem:[%s287 + $0x108] sm:$0xff]
        %v1129 = vld [vmem:[%s287 + $0x110] sm:$0xff]
        %v1130 = vld [vmem:[%s287 + $0x118] sm:$0xff]
        %v1131 = vld [vmem:[%s287 + $0x120] sm:$0xff]
        %v1132 = vld [vmem:[%s287 + $0x128] sm:$0xff]
        %v1133 = vld [vmem:[%s287 + $0x130] sm:$0xff]
        %v1134 = vld [vmem:[%s287 + $0x138] sm:$0xff]
        %v1135 = vld [vmem:[%s287 + $0x140] sm:$0xff]
        %v1136 = vld [vmem:[%s287 + $0x148] sm:$0xff]
        %v1137 = vld [vmem:[%s287 + $0x150] sm:$0xff]
        %v1138 = vld [vmem:[%s287 + $0x158] sm:$0xff]
        %v1139 = vld [vmem:[%s287 + $0x160] sm:$0xff]
        %v1140 = vld [vmem:[%s287 + $0x168] sm:$0xff]
        %v1141 = vld [vmem:[%s287 + $0x170] sm:$0xff]
        %v1142 = vld [vmem:[%s287 + $0x178] sm:$0xff]
        %v1143 = vld [vmem:[%s287 + $0x180] sm:$0xff]
        %v1144 = vld [vmem:[%s287 + $0x188] sm:$0xff]
        %v1145 = vld [vmem:[%s287 + $0x190] sm:$0xff]
        %v1146 = vld [vmem:[%s287 + $0x198] sm:$0xff]
        %v1147 = vld [vmem:[%s287 + $0x1a0] sm:$0xff]
        %v1148 = vld [vmem:[%s287 + $0x1a8] sm:$0xff]
        %v1149 = vld [vmem:[%s287 + $0x1b0] sm:$0xff]
        %v1150 = vld [vmem:[%s287 + $0x1b8] sm:$0xff]
        %v1151 = vld [vmem:[%s287 + $0x1c0] sm:$0xff]
        %v1152 = vld [vmem:[%s287 + $0x1c8] sm:$0xff]
        %v1153 = vld [vmem:[%s287 + $0x1d0] sm:$0xff]
        %v1154 = vld [vmem:[%s287 + $0x1d8] sm:$0xff]
        %v1155 = vld [vmem:[%s287 + $0x1e0] sm:$0xff]
        %v1156 = vld [vmem:[%s287 + $0x1e8] sm:$0xff]
        %v1157 = vld [vmem:[%s287 + $0x1f0] sm:$0xff]
        %v1158 = vld [vmem:[%s287 + $0x1f8] sm:$0xff]
        %v1159 = vld [vmem:[%s287 + $0x200] sm:$0xff]
        %v1160 = vld [vmem:[%s287 + $0x208] sm:$0xff]
        %v1161 = vld [vmem:[%s287 + $0x210] sm:$0xff]
        %v1162 = vld [vmem:[%s287 + $0x218] sm:$0xff]
        %v1163 = vld [vmem:[%s287 + $0x220] sm:$0xff]
        %v1164 = vld [vmem:[%s287 + $0x228] sm:$0xff]
        %v1165 = vld [vmem:[%s287 + $0x230] sm:$0xff]
        %v1166 = vld [vmem:[%s287 + $0x238] sm:$0xff]
        %v1167 = vld [vmem:[%s287 + $0x240] sm:$0xff]
        %v1168 = vld [vmem:[%s287 + $0x248] sm:$0xff]
        %v1169 = vld [vmem:[%s287 + $0x250] sm:$0xff]
        %v1170 = vld [vmem:[%s287 + $0x258] sm:$0xff]
        %v1171 = vld [vmem:[%s287 + $0x260] sm:$0xff]
        %v1172 = vld [vmem:[%s287 + $0x268] sm:$0xff]
        %v1173 = vld [vmem:[%s287 + $0x270] sm:$0xff]
        %v1174 = vld [vmem:[%s287 + $0x278] sm:$0xff]
        %v1175 = vld [vmem:[%s287 + $0x280] sm:$0xff]
        %v1176 = vld [vmem:[%s287 + $0x288] sm:$0xff]
        %v1177 = vld [vmem:[%s287 + $0x290] sm:$0xff]
        %v1178 = vld [vmem:[%s287 + $0x298] sm:$0xff]
        %v1179 = vld [vmem:[%s287 + $0x2a0] sm:$0xff]
        %v1180 = vld [vmem:[%s287 + $0x2a8] sm:$0xff]
        %v1181 = vld [vmem:[%s287 + $0x2b0] sm:$0xff]
        %v1182 = vld [vmem:[%s287 + $0x2b8] sm:$0xff]
        %v1183 = vld [vmem:[%s287 + $0x2c0] sm:$0xff]
        %v1184 = vld [vmem:[%s287 + $0x2c8] sm:$0xff]
        %v1185 = vld [vmem:[%s287 + $0x2d0] sm:$0xff]
        %v1186 = vld [vmem:[%s287 + $0x2d8] sm:$0xff]
        %v1187 = vld [vmem:[%s287 + $0x2e0] sm:$0xff]
        %v1188 = vld [vmem:[%s287 + $0x2e8] sm:$0xff]
        %v1189 = vld [vmem:[%s287 + $0x2f0] sm:$0xff]
        %v1190 = vld [vmem:[%s287 + $0x2f8] sm:$0xff]
        %v1191 = vld [vmem:[%s287 + $0x300] sm:$0xff]
        %v1192 = vld [vmem:[%s287 + $0x308] sm:$0xff]
        %v1193 = vld [vmem:[%s287 + $0x310] sm:$0xff]
        %v1194 = vld [vmem:[%s287 + $0x318] sm:$0xff]
        %v1195 = vld [vmem:[%s287 + $0x320] sm:$0xff]
        %v1196 = vld [vmem:[%s287 + $0x328] sm:$0xff]
        %v1197 = vld [vmem:[%s287 + $0x330] sm:$0xff]
        %v1198 = vld [vmem:[%s287 + $0x338] sm:$0xff]
        %v1199 = vld [vmem:[%s287 + $0x340] sm:$0xff]
        %v1200 = vld [vmem:[%s287 + $0x348] sm:$0xff]
        %v1201 = vld [vmem:[%s287 + $0x350] sm:$0xff]
        %v1202 = vld [vmem:[%s287 + $0x358] sm:$0xff]
        %v1203 = vld [vmem:[%s287 + $0x360] sm:$0xff]
        %v1204 = vld [vmem:[%s287 + $0x368] sm:$0xff]
        %v1205 = vld [vmem:[%s287 + $0x370] sm:$0xff]
        %v1206 = vld [vmem:[%s287 + $0x378] sm:$0xff]
        %v1207 = vld [vmem:[%s287 + $0x380] sm:$0xff]
        %v1208 = vld [vmem:[%s287 + $0x388] sm:$0xff]
        %v1209 = vld [vmem:[%s287 + $0x390] sm:$0xff]
        %v1210 = vld [vmem:[%s287 + $0x398] sm:$0xff]
        %v1211 = vld [vmem:[%s287 + $0x3a0] sm:$0xff]
        %v1212 = vld [vmem:[%s287 + $0x3a8] sm:$0xff]
        %v1213 = vld [vmem:[%s287 + $0x3b0] sm:$0xff]
        %v1214 = vld [vmem:[%s287 + $0x3b8] sm:$0xff]
        %v1215 = vld [vmem:[%s287 + $0x3c0] sm:$0xff]
        %v1216 = vld [vmem:[%s287 + $0x3c8] sm:$0xff]
        %v1217 = vld [vmem:[%s287 + $0x3d0] sm:$0xff]
        %v1218 = vld [vmem:[%s287 + $0x3d8] sm:$0xff]
        %v1219 = vld [vmem:[%s287 + $0x3e0] sm:$0xff]
        %v1220 = vld [vmem:[%s287 + $0x3e8] sm:$0xff]
        %v1221 = vld [vmem:[%s287 + $0x3f0] sm:$0xff]
        %v1222 = vld [vmem:[%s287 + $0x3f8] sm:$0xff]
        %v1223 = vunpack.c.l.bf16 %v1095
        %v1224 = vunpack.c.h.bf16 %v1095
        %v1225 = vunpack.c.l.bf16 %v1096
        %v1226 = vunpack.c.h.bf16 %v1096
        %v1227 = vunpack.c.l.bf16 %v1097
        %v1228 = vunpack.c.h.bf16 %v1097
        %v1229 = vunpack.c.l.bf16 %v1098
        %v1230 = vunpack.c.h.bf16 %v1098
        %v1231 = vunpack.c.l.bf16 %v1099
        %v1232 = vunpack.c.h.bf16 %v1099
        %v1233 = vunpack.c.l.bf16 %v1100
        %v1234 = vunpack.c.h.bf16 %v1100
        %v1235 = vunpack.c.l.bf16 %v1101
        %v1236 = vunpack.c.h.bf16 %v1101
        %v1237 = vunpack.c.l.bf16 %v1102
        %v1238 = vunpack.c.h.bf16 %v1102
        %v1239 = vunpack.c.l.bf16 %v1103
        %v1240 = vunpack.c.h.bf16 %v1103
        %v1241 = vunpack.c.l.bf16 %v1104
        %v1242 = vunpack.c.h.bf16 %v1104
        %v1243 = vunpack.c.l.bf16 %v1105
        %v1244 = vunpack.c.h.bf16 %v1105
        %v1245 = vunpack.c.l.bf16 %v1106
        %v1246 = vunpack.c.h.bf16 %v1106
        %v1247 = vunpack.c.l.bf16 %v1107
        %v1248 = vunpack.c.h.bf16 %v1107
        %v1249 = vunpack.c.l.bf16 %v1108
        %v1250 = vunpack.c.h.bf16 %v1108
        %v1251 = vunpack.c.l.bf16 %v1109
        %v1252 = vunpack.c.h.bf16 %v1109
        %v1253 = vunpack.c.l.bf16 %v1110
        %v1254 = vunpack.c.h.bf16 %v1110
        %v1255 = vunpack.c.l.bf16 %v1111
        %v1256 = vunpack.c.h.bf16 %v1111
        %v1257 = vunpack.c.l.bf16 %v1112
        %v1258 = vunpack.c.h.bf16 %v1112
        %v1259 = vunpack.c.l.bf16 %v1113
        %v1260 = vunpack.c.h.bf16 %v1113
        %v1261 = vunpack.c.l.bf16 %v1114
        %v1262 = vunpack.c.h.bf16 %v1114
        %v1263 = vunpack.c.l.bf16 %v1115
        %v1264 = vunpack.c.h.bf16 %v1115
        %v1265 = vunpack.c.l.bf16 %v1116
        %v1266 = vunpack.c.h.bf16 %v1116
        %v1267 = vunpack.c.l.bf16 %v1117
        %v1268 = vunpack.c.h.bf16 %v1117
        %v1269 = vunpack.c.l.bf16 %v1118
        %v1270 = vunpack.c.h.bf16 %v1118
        %v1271 = vunpack.c.l.bf16 %v1119
        %v1272 = vunpack.c.h.bf16 %v1119
        %v1273 = vunpack.c.l.bf16 %v1120
        %v1274 = vunpack.c.h.bf16 %v1120
        %v1275 = vunpack.c.l.bf16 %v1121
        %v1276 = vunpack.c.h.bf16 %v1121
        %v1277 = vunpack.c.l.bf16 %v1122
        %v1278 = vunpack.c.h.bf16 %v1122
        %v1279 = vunpack.c.l.bf16 %v1123
        %v1280 = vunpack.c.h.bf16 %v1123
        %v1281 = vunpack.c.l.bf16 %v1124
        %v1282 = vunpack.c.h.bf16 %v1124
        %v1283 = vunpack.c.l.bf16 %v1125
        %v1284 = vunpack.c.h.bf16 %v1125
        %v1285 = vunpack.c.l.bf16 %v1126
        %v1286 = vunpack.c.h.bf16 %v1126
        %v1287 = vunpack.c.l.bf16 %v1127
        %v1288 = vunpack.c.h.bf16 %v1127
        %v1289 = vunpack.c.l.bf16 %v1128
        %v1290 = vunpack.c.h.bf16 %v1128
        %v1291 = vunpack.c.l.bf16 %v1129
        %v1292 = vunpack.c.h.bf16 %v1129
        %v1293 = vunpack.c.l.bf16 %v1130
        %v1294 = vunpack.c.h.bf16 %v1130
        %v1295 = vunpack.c.l.bf16 %v1131
        %v1296 = vunpack.c.h.bf16 %v1131
        %v1297 = vunpack.c.l.bf16 %v1132
        %v1298 = vunpack.c.h.bf16 %v1132
        %v1299 = vunpack.c.l.bf16 %v1133
        %v1300 = vunpack.c.h.bf16 %v1133
        %v1301 = vunpack.c.l.bf16 %v1134
        %v1302 = vunpack.c.h.bf16 %v1134
        %v1303 = vunpack.c.l.bf16 %v1135
        %v1304 = vunpack.c.h.bf16 %v1135
        %v1305 = vunpack.c.l.bf16 %v1136
        %v1306 = vunpack.c.h.bf16 %v1136
        %v1307 = vunpack.c.l.bf16 %v1137
        %v1308 = vunpack.c.h.bf16 %v1137
        %v1309 = vunpack.c.l.bf16 %v1138
        %v1310 = vunpack.c.h.bf16 %v1138
        %v1311 = vunpack.c.l.bf16 %v1139
        %v1312 = vunpack.c.h.bf16 %v1139
        %v1313 = vunpack.c.l.bf16 %v1140
        %v1314 = vunpack.c.h.bf16 %v1140
        %v1315 = vunpack.c.l.bf16 %v1141
        %v1316 = vunpack.c.h.bf16 %v1141
        %v1317 = vunpack.c.l.bf16 %v1142
        %v1318 = vunpack.c.h.bf16 %v1142
        %v1319 = vunpack.c.l.bf16 %v1143
        %v1320 = vunpack.c.h.bf16 %v1143
        %v1321 = vunpack.c.l.bf16 %v1144
        %v1322 = vunpack.c.h.bf16 %v1144
        %v1323 = vunpack.c.l.bf16 %v1145
        %v1324 = vunpack.c.h.bf16 %v1145
        %v1325 = vunpack.c.l.bf16 %v1146
        %v1326 = vunpack.c.h.bf16 %v1146
        %v1327 = vunpack.c.l.bf16 %v1147
        %v1328 = vunpack.c.h.bf16 %v1147
        %v1329 = vunpack.c.l.bf16 %v1148
        %v1330 = vunpack.c.h.bf16 %v1148
        %v1331 = vunpack.c.l.bf16 %v1149
        %v1332 = vunpack.c.h.bf16 %v1149
        %v1333 = vunpack.c.l.bf16 %v1150
        %v1334 = vunpack.c.h.bf16 %v1150
        %v1335 = vunpack.c.l.bf16 %v1151
        %v1336 = vunpack.c.h.bf16 %v1151
        %v1337 = vunpack.c.l.bf16 %v1152
        %v1338 = vunpack.c.h.bf16 %v1152
        %v1339 = vunpack.c.l.bf16 %v1153
        %v1340 = vunpack.c.h.bf16 %v1153
        %v1341 = vunpack.c.l.bf16 %v1154
        %v1342 = vunpack.c.h.bf16 %v1154
        %v1343 = vunpack.c.l.bf16 %v1155
        %v1344 = vunpack.c.h.bf16 %v1155
        %v1345 = vunpack.c.l.bf16 %v1156
        %v1346 = vunpack.c.h.bf16 %v1156
        %v1347 = vunpack.c.l.bf16 %v1157
        %v1348 = vunpack.c.h.bf16 %v1157
        %v1349 = vunpack.c.l.bf16 %v1158
        %v1350 = vunpack.c.h.bf16 %v1158
        %v1351 = vunpack.c.l.bf16 %v1159
        %v1352 = vunpack.c.h.bf16 %v1159
        %v1353 = vunpack.c.l.bf16 %v1160
        %v1354 = vunpack.c.h.bf16 %v1160
        %v1355 = vunpack.c.l.bf16 %v1161
        %v1356 = vunpack.c.h.bf16 %v1161
        %v1357 = vunpack.c.l.bf16 %v1162
        %v1358 = vunpack.c.h.bf16 %v1162
        %v1359 = vunpack.c.l.bf16 %v1163
        %v1360 = vunpack.c.h.bf16 %v1163
        %v1361 = vunpack.c.l.bf16 %v1164
        %v1362 = vunpack.c.h.bf16 %v1164
        %v1363 = vunpack.c.l.bf16 %v1165
        %v1364 = vunpack.c.h.bf16 %v1165
        %v1365 = vunpack.c.l.bf16 %v1166
        %v1366 = vunpack.c.h.bf16 %v1166
        %v1367 = vunpack.c.l.bf16 %v1167
        %v1368 = vunpack.c.h.bf16 %v1167
        %v1369 = vunpack.c.l.bf16 %v1168
        %v1370 = vunpack.c.h.bf16 %v1168
        %v1371 = vunpack.c.l.bf16 %v1169
        %v1372 = vunpack.c.h.bf16 %v1169
        %v1373 = vunpack.c.l.bf16 %v1170
        %v1374 = vunpack.c.h.bf16 %v1170
        %v1375 = vunpack.c.l.bf16 %v1171
        %v1376 = vunpack.c.h.bf16 %v1171
        %v1377 = vunpack.c.l.bf16 %v1172
        %v1378 = vunpack.c.h.bf16 %v1172
        %v1379 = vunpack.c.l.bf16 %v1173
        %v1380 = vunpack.c.h.bf16 %v1173
        %v1381 = vunpack.c.l.bf16 %v1174
        %v1382 = vunpack.c.h.bf16 %v1174
        %v1383 = vunpack.c.l.bf16 %v1175
        %v1384 = vunpack.c.h.bf16 %v1175
        %v1385 = vunpack.c.l.bf16 %v1176
        %v1386 = vunpack.c.h.bf16 %v1176
        %v1387 = vunpack.c.l.bf16 %v1177
        %v1388 = vunpack.c.h.bf16 %v1177
        %v1389 = vunpack.c.l.bf16 %v1178
        %v1390 = vunpack.c.h.bf16 %v1178
        %v1391 = vunpack.c.l.bf16 %v1179
        %v1392 = vunpack.c.h.bf16 %v1179
        %v1393 = vunpack.c.l.bf16 %v1180
        %v1394 = vunpack.c.h.bf16 %v1180
        %v1395 = vunpack.c.l.bf16 %v1181
        %v1396 = vunpack.c.h.bf16 %v1181
        %v1397 = vunpack.c.l.bf16 %v1182
        %v1398 = vunpack.c.h.bf16 %v1182
        %v1399 = vunpack.c.l.bf16 %v1183
        %v1400 = vunpack.c.h.bf16 %v1183
        %v1401 = vunpack.c.l.bf16 %v1184
        %v1402 = vunpack.c.h.bf16 %v1184
        %v1403 = vunpack.c.l.bf16 %v1185
        %v1404 = vunpack.c.h.bf16 %v1185
        %v1405 = vunpack.c.l.bf16 %v1186
        %v1406 = vunpack.c.h.bf16 %v1186
        %v1407 = vunpack.c.l.bf16 %v1187
        %v1408 = vunpack.c.h.bf16 %v1187
        %v1409 = vunpack.c.l.bf16 %v1188
        %v1410 = vunpack.c.h.bf16 %v1188
        %v1411 = vunpack.c.l.bf16 %v1189
        %v1412 = vunpack.c.h.bf16 %v1189
        %v1413 = vunpack.c.l.bf16 %v1190
        %v1414 = vunpack.c.h.bf16 %v1190
        %v1415 = vunpack.c.l.bf16 %v1191
        %v1416 = vunpack.c.h.bf16 %v1191
        %v1417 = vunpack.c.l.bf16 %v1192
        %v1418 = vunpack.c.h.bf16 %v1192
        %v1419 = vunpack.c.l.bf16 %v1193
        %v1420 = vunpack.c.h.bf16 %v1193
        %v1421 = vunpack.c.l.bf16 %v1194
        %v1422 = vunpack.c.h.bf16 %v1194
        %v1423 = vunpack.c.l.bf16 %v1195
        %v1424 = vunpack.c.h.bf16 %v1195
        %v1425 = vunpack.c.l.bf16 %v1196
        %v1426 = vunpack.c.h.bf16 %v1196
        %v1427 = vunpack.c.l.bf16 %v1197
        %v1428 = vunpack.c.h.bf16 %v1197
        %v1429 = vunpack.c.l.bf16 %v1198
        %v1430 = vunpack.c.h.bf16 %v1198
        %v1431 = vunpack.c.l.bf16 %v1199
        %v1432 = vunpack.c.h.bf16 %v1199
        %v1433 = vunpack.c.l.bf16 %v1200
        %v1434 = vunpack.c.h.bf16 %v1200
        %v1435 = vunpack.c.l.bf16 %v1201
        %v1436 = vunpack.c.h.bf16 %v1201
        %v1437 = vunpack.c.l.bf16 %v1202
        %v1438 = vunpack.c.h.bf16 %v1202
        %v1439 = vunpack.c.l.bf16 %v1203
        %v1440 = vunpack.c.h.bf16 %v1203
        %v1441 = vunpack.c.l.bf16 %v1204
        %v1442 = vunpack.c.h.bf16 %v1204
        %v1443 = vunpack.c.l.bf16 %v1205
        %v1444 = vunpack.c.h.bf16 %v1205
        %v1445 = vunpack.c.l.bf16 %v1206
        %v1446 = vunpack.c.h.bf16 %v1206
        %v1447 = vunpack.c.l.bf16 %v1207
        %v1448 = vunpack.c.h.bf16 %v1207
        %v1449 = vunpack.c.l.bf16 %v1208
        %v1450 = vunpack.c.h.bf16 %v1208
        %v1451 = vunpack.c.l.bf16 %v1209
        %v1452 = vunpack.c.h.bf16 %v1209
        %v1453 = vunpack.c.l.bf16 %v1210
        %v1454 = vunpack.c.h.bf16 %v1210
        %v1455 = vunpack.c.l.bf16 %v1211
        %v1456 = vunpack.c.h.bf16 %v1211
        %v1457 = vunpack.c.l.bf16 %v1212
        %v1458 = vunpack.c.h.bf16 %v1212
        %v1459 = vunpack.c.l.bf16 %v1213
        %v1460 = vunpack.c.h.bf16 %v1213
        %v1461 = vunpack.c.l.bf16 %v1214
        %v1462 = vunpack.c.h.bf16 %v1214
        %v1463 = vunpack.c.l.bf16 %v1215
        %v1464 = vunpack.c.h.bf16 %v1215
        %v1465 = vunpack.c.l.bf16 %v1216
        %v1466 = vunpack.c.h.bf16 %v1216
        %v1467 = vunpack.c.l.bf16 %v1217
        %v1468 = vunpack.c.h.bf16 %v1217
        %v1469 = vunpack.c.l.bf16 %v1218
        %v1470 = vunpack.c.h.bf16 %v1218
        %v1471 = vunpack.c.l.bf16 %v1219
        %v1472 = vunpack.c.h.bf16 %v1219
        %v1473 = vunpack.c.l.bf16 %v1220
        %v1474 = vunpack.c.h.bf16 %v1220
        %v1475 = vunpack.c.l.bf16 %v1221
        %v1476 = vunpack.c.h.bf16 %v1221
        %v1477 = vunpack.c.l.bf16 %v1222
        %v1478 = vunpack.c.h.bf16 %v1222
        %vm1479 = vcmask 130048
        %v1481 = vsel %vm1479, %v1071, 0
        %v1484 = vsel %vm1479, %v1072, 0
        %v1487 = vsel %vm1479, %v1073, 0
        %v1490 = vsel %vm1479, %v1074, 0
        %v1493 = vsel %vm1479, %v1075, 0
        %v1496 = vsel %vm1479, %v1076, 0
        %v1499 = vsel %vm1479, %v1077, 0
        %v1502 = vsel %vm1479, %v1078, 0
        %1504 = vmatprep.subr.bf16.mxu0 %v1080
        %1505 = vmatpush1.bf16.msra.mxu0 %v1079
        %1506 = vmatprep.subr.bf16.mxu0 0
        %1507 = vmatpush1.bf16.msra.mxu0 0
        %1508 = vmatprep.subr.bf16.mxu0 0
        %1509 = vmatpush1.bf16.msra.mxu0 0
        %1510 = vmatprep.subr.bf16.mxu0 0
        %1511 = vmatpush1.bf16.msra.mxu0 0
        %1512 = vmatprep.subr.bf16.mxu0 0
        %1513 = vmatpush1.bf16.msra.mxu0 0
        %1514 = vmatprep.subr.bf16.mxu0 0
        %1515 = vmatpush1.bf16.msra.mxu0 0
        %1516 = vmatprep.subr.bf16.mxu0 0
        %1517 = vmatpush1.bf16.msra.mxu0 0
        %1518 = vmatprep.subr.bf16.mxu0 0
        %1519 = vmatpush1.bf16.msra.mxu0 0
        %1520 = vmatprep.subr.bf16.mxu0 0
        %1521 = vmatpush1.bf16.msra.mxu0 0
        %1522 = vmatprep.subr.bf16.mxu0 0
        %1523 = vmatpush1.bf16.msra.mxu0 0
        %1524 = vmatprep.subr.bf16.mxu0 0
        %1525 = vmatpush1.bf16.msra.mxu0 0
        %1526 = vmatprep.subr.bf16.mxu0 0
        %1527 = vmatpush1.bf16.msra.mxu0 0
        %1528 = vmatprep.subr.bf16.mxu0 0
        %1529 = vmatpush1.bf16.msra.mxu0 0
        %1530 = vmatprep.subr.bf16.mxu0 0
        %1531 = vmatpush1.bf16.msra.mxu0 0
        %1532 = vmatprep.subr.bf16.mxu0 0
        %1533 = vmatpush1.bf16.msra.mxu0 0
        %1534 = vmatprep.subr.bf16.mxu0 0
        %1535 = vmatpush1.bf16.msra.mxu0 0
        %1536 = vmatprep.mubr.bf16.mxu0 0
        %1537 = vmatmul.mubr.bf16.gmra.mrb[0].mxu0 %v1481
        %v1538 = vpop.f32.mrb[0].mxu0
        %v1539 = vadd.f32 %v1223, %v1538
        %v1540 = vpop.f32.mrb[0].mxu0
        %v1541 = vadd.f32 %v1224, %v1540
        %v1542 = vpop.f32.mrb[0].mxu0
        %v1543 = vadd.f32 %v1239, %v1542
        %v1544 = vpop.f32.mrb[0].mxu0
        %v1545 = vadd.f32 %v1240, %v1544
        %1546 = vmatprep.mubr.bf16.mxu0 0
        %1547 = vmatmul.mubr.bf16.gmra.mrb[0].mxu0 %v1484
        %v1548 = vpop.f32.mrb[0].mxu0
        %v1549 = vadd.f32 %v1255, %v1548
        %v1550 = vpop.f32.mrb[0].mxu0
        %v1551 = vadd.f32 %v1256, %v1550
        %v1552 = vpop.f32.mrb[0].mxu0
        %v1553 = vadd.f32 %v1271, %v1552
        %v1554 = vpop.f32.mrb[0].mxu0
        %v1555 = vadd.f32 %v1272, %v1554
        %1556 = vmatprep.mubr.bf16.mxu0 0
        %1557 = vmatmul.mubr.bf16.gmra.mrb[0].mxu0 %v1487
        %v1558 = vpop.f32.mrb[0].mxu0
        %v1559 = vadd.f32 %v1287, %v1558
        %v1560 = vpop.f32.mrb[0].mxu0
        %v1561 = vadd.f32 %v1288, %v1560
        %v1562 = vpop.f32.mrb[0].mxu0
        %v1563 = vadd.f32 %v1303, %v1562
        %v1564 = vpop.f32.mrb[0].mxu0
        %v1565 = vadd.f32 %v1304, %v1564
        %1566 = vmatprep.mubr.bf16.mxu0 0
        %1567 = vmatmul.mubr.bf16.gmra.mrb[0].mxu0 %v1490
        %v1568 = vpop.f32.mrb[0].mxu0
        %v1569 = vadd.f32 %v1319, %v1568
        %v1570 = vpop.f32.mrb[0].mxu0
        %v1571 = vadd.f32 %v1320, %v1570
        %v1572 = vpop.f32.mrb[0].mxu0
        %v1573 = vadd.f32 %v1335, %v1572
        %v1574 = vpop.f32.mrb[0].mxu0
        %v1575 = vadd.f32 %v1336, %v1574
        %1576 = vmatprep.mubr.bf16.mxu0 0
        %1577 = vmatmul.mubr.bf16.gmra.mrb[0].mxu0 %v1493
        %v1578 = vpop.f32.mrb[0].mxu0
        %v1579 = vadd.f32 %v1351, %v1578
        %v1580 = vpop.f32.mrb[0].mxu0
        %v1581 = vadd.f32 %v1352, %v1580
        %v1582 = vpop.f32.mrb[0].mxu0
        %v1583 = vadd.f32 %v1367, %v1582
        %v1584 = vpop.f32.mrb[0].mxu0
        %v1585 = vadd.f32 %v1368, %v1584
        %1586 = vmatprep.mubr.bf16.mxu0 0
        %1587 = vmatmul.mubr.bf16.gmra.mrb[0].mxu0 %v1496
        %v1588 = vpop.f32.mrb[0].mxu0
        %v1589 = vadd.f32 %v1383, %v1588
        %v1590 = vpop.f32.mrb[0].mxu0
        %v1591 = vadd.f32 %v1384, %v1590
        %v1592 = vpop.f32.mrb[0].mxu0
        %v1593 = vadd.f32 %v1399, %v1592
        %v1594 = vpop.f32.mrb[0].mxu0
        %v1595 = vadd.f32 %v1400, %v1594
        %1596 = vmatprep.mubr.bf16.mxu0 0
        %1597 = vmatmul.mubr.bf16.gmra.mrb[0].mxu0 %v1499
        %v1598 = vpop.f32.mrb[0].mxu0
        %v1599 = vadd.f32 %v1415, %v1598
        %v1600 = vpop.f32.mrb[0].mxu0
        %v1601 = vadd.f32 %v1416, %v1600
        %v1602 = vpop.f32.mrb[0].mxu0
        %v1603 = vadd.f32 %v1431, %v1602
        %v1604 = vpop.f32.mrb[0].mxu0
        %v1605 = vadd.f32 %v1432, %v1604
        %1606 = vmatprep.mubr.bf16.mxu0 0
        %1607 = vmatmul.mubr.bf16.gmra.mrb[0].mxu0 %v1502
        %v1608 = vpop.f32.mrb[0].mxu0
        %v1609 = vadd.f32 %v1447, %v1608
        %v1610 = vpop.f32.mrb[0].mxu0
        %v1611 = vadd.f32 %v1448, %v1610
        %v1612 = vpop.f32.mrb[0].mxu0
        %v1613 = vadd.f32 %v1463, %v1612
        %v1614 = vpop.f32.mrb[0].mxu0
        %v1615 = vadd.f32 %v1464, %v1614
        %1616 = vdwg.mxu0
        %1617 = vmatprep.subr.bf16.mxu0 %v1082
        %1618 = vmatpush1.bf16.msra.mxu0 %v1081
        %1619 = vmatprep.subr.bf16.mxu0 0
        %1620 = vmatpush1.bf16.msra.mxu0 0
        %1621 = vmatprep.subr.bf16.mxu0 0
        %1622 = vmatpush1.bf16.msra.mxu0 0
        %1623 = vmatprep.subr.bf16.mxu0 0
        %1624 = vmatpush1.bf16.msra.mxu0 0
        %1625 = vmatprep.subr.bf16.mxu0 0
        %1626 = vmatpush1.bf16.msra.mxu0 0
        %1627 = vmatprep.subr.bf16.mxu0 0
        %1628 = vmatpush1.bf16.msra.mxu0 0
        %1629 = vmatprep.subr.bf16.mxu0 0
        %1630 = vmatpush1.bf16.msra.mxu0 0
        %1631 = vmatprep.subr.bf16.mxu0 0
        %1632 = vmatpush1.bf16.msra.mxu0 0
        %1633 = vmatprep.subr.bf16.mxu0 0
        %1634 = vmatpush1.bf16.msra.mxu0 0
        %1635 = vmatprep.subr.bf16.mxu0 0
        %1636 = vmatpush1.bf16.msra.mxu0 0
        %1637 = vmatprep.subr.bf16.mxu0 0
        %1638 = vmatpush1.bf16.msra.mxu0 0
        %1639 = vmatprep.subr.bf16.mxu0 0
        %1640 = vmatpush1.bf16.msra.mxu0 0
        %1641 = vmatprep.subr.bf16.mxu0 0
        %1642 = vmatpush1.bf16.msra.mxu0 0
        %1643 = vmatprep.subr.bf16.mxu0 0
        %1644 = vmatpush1.bf16.msra.mxu0 0
        %1645 = vmatprep.subr.bf16.mxu0 0
        %1646 = vmatpush1.bf16.msra.mxu0 0
        %1647 = vmatprep.subr.bf16.mxu0 0
        %1648 = vmatpush1.bf16.msra.mxu0 0
        %1649 = vmatprep.mubr.bf16.mxu0 0
        %1650 = vmatmul.mubr.bf16.gmra.mrb[0].mxu0 %v1481
        %v1651 = vpop.f32.mrb[0].mxu0
        %v1652 = vadd.f32 %v1225, %v1651
        %v1653 = vpop.f32.mrb[0].mxu0
        %v1654 = vadd.f32 %v1226, %v1653
        %v1655 = vpop.f32.mrb[0].mxu0
        %v1656 = vadd.f32 %v1241, %v1655
        %v1657 = vpop.f32.mrb[0].mxu0
        %v1658 = vadd.f32 %v1242, %v1657
        %1659 = vmatprep.mubr.bf16.mxu0 0
        %1660 = vmatmul.mubr.bf16.gmra.mrb[0].mxu0 %v1484
        %v1661 = vpop.f32.mrb[0].mxu0
        %v1662 = vadd.f32 %v1257, %v1661
        %v1663 = vpop.f32.mrb[0].mxu0
        %v1664 = vadd.f32 %v1258, %v1663
        %v1665 = vpop.f32.mrb[0].mxu0
        %v1666 = vadd.f32 %v1273, %v1665
        %v1667 = vpop.f32.mrb[0].mxu0
        %v1668 = vadd.f32 %v1274, %v1667
        %1669 = vmatprep.mubr.bf16.mxu0 0
        %1670 = vmatmul.mubr.bf16.gmra.mrb[0].mxu0 %v1487
        %v1671 = vpop.f32.mrb[0].mxu0
        %v1672 = vadd.f32 %v1289, %v1671
        %v1673 = vpop.f32.mrb[0].mxu0
        %v1674 = vadd.f32 %v1290, %v1673
        %v1675 = vpop.f32.mrb[0].mxu0
        %v1676 = vadd.f32 %v1305, %v1675
        %v1677 = vpop.f32.mrb[0].mxu0
        %v1678 = vadd.f32 %v1306, %v1677
        %1679 = vmatprep.mubr.bf16.mxu0 0
        %1680 = vmatmul.mubr.bf16.gmra.mrb[0].mxu0 %v1490
        %v1681 = vpop.f32.mrb[0].mxu0
        %v1682 = vadd.f32 %v1321, %v1681
        %v1683 = vpop.f32.mrb[0].mxu0
        %v1684 = vadd.f32 %v1322, %v1683
        %v1685 = vpop.f32.mrb[0].mxu0
        %v1686 = vadd.f32 %v1337, %v1685
        %v1687 = vpop.f32.mrb[0].mxu0
        %v1688 = vadd.f32 %v1338, %v1687
        %1689 = vmatprep.mubr.bf16.mxu0 0
        %1690 = vmatmul.mubr.bf16.gmra.mrb[0].mxu0 %v1493
        %v1691 = vpop.f32.mrb[0].mxu0
        %v1692 = vadd.f32 %v1353, %v1691
        %v1693 = vpop.f32.mrb[0].mxu0
        %v1694 = vadd.f32 %v1354, %v1693
        %v1695 = vpop.f32.mrb[0].mxu0
        %v1696 = vadd.f32 %v1369, %v1695
        %v1697 = vpop.f32.mrb[0].mxu0
        %v1698 = vadd.f32 %v1370, %v1697
        %1699 = vmatprep.mubr.bf16.mxu0 0
        %1700 = vmatmul.mubr.bf16.gmra.mrb[0].mxu0 %v1496
        %v1701 = vpop.f32.mrb[0].mxu0
        %v1702 = vadd.f32 %v1385, %v1701
        %v1703 = vpop.f32.mrb[0].mxu0
        %v1704 = vadd.f32 %v1386, %v1703
        %v1705 = vpop.f32.mrb[0].mxu0
        %v1706 = vadd.f32 %v1401, %v1705
        %v1707 = vpop.f32.mrb[0].mxu0
        %v1708 = vadd.f32 %v1402, %v1707
        %1709 = vmatprep.mubr.bf16.mxu0 0
        %1710 = vmatmul.mubr.bf16.gmra.mrb[0].mxu0 %v1499
        %v1711 = vpop.f32.mrb[0].mxu0
        %v1712 = vadd.f32 %v1417, %v1711
        %v1713 = vpop.f32.mrb[0].mxu0
        %v1714 = vadd.f32 %v1418, %v1713
        %v1715 = vpop.f32.mrb[0].mxu0
        %v1716 = vadd.f32 %v1433, %v1715
        %v1717 = vpop.f32.mrb[0].mxu0
        %v1718 = vadd.f32 %v1434, %v1717
        %1719 = vmatprep.mubr.bf16.mxu0 0
        %1720 = vmatmul.mubr.bf16.gmra.mrb[0].mxu0 %v1502
        %v1721 = vpop.f32.mrb[0].mxu0
        %v1722 = vadd.f32 %v1449, %v1721
        %v1723 = vpop.f32.mrb[0].mxu0
        %v1724 = vadd.f32 %v1450, %v1723
        %v1725 = vpop.f32.mrb[0].mxu0
        %v1726 = vadd.f32 %v1465, %v1725
        %v1727 = vpop.f32.mrb[0].mxu0
        %v1728 = vadd.f32 %v1466, %v1727
        %1729 = vdwg.mxu0
        %1730 = vmatprep.subr.bf16.mxu0 %v1084
        %1731 = vmatpush1.bf16.msra.mxu0 %v1083
        %1732 = vmatprep.subr.bf16.mxu0 0
        %1733 = vmatpush1.bf16.msra.mxu0 0
        %1734 = vmatprep.subr.bf16.mxu0 0
        %1735 = vmatpush1.bf16.msra.mxu0 0
        %1736 = vmatprep.subr.bf16.mxu0 0
        %1737 = vmatpush1.bf16.msra.mxu0 0
        %1738 = vmatprep.subr.bf16.mxu0 0
        %1739 = vmatpush1.bf16.msra.mxu0 0
        %1740 = vmatprep.subr.bf16.mxu0 0
        %1741 = vmatpush1.bf16.msra.mxu0 0
        %1742 = vmatprep.subr.bf16.mxu0 0
        %1743 = vmatpush1.bf16.msra.mxu0 0
        %1744 = vmatprep.subr.bf16.mxu0 0
        %1745 = vmatpush1.bf16.msra.mxu0 0
        %1746 = vmatprep.subr.bf16.mxu0 0
        %1747 = vmatpush1.bf16.msra.mxu0 0
        %1748 = vmatprep.subr.bf16.mxu0 0
        %1749 = vmatpush1.bf16.msra.mxu0 0
        %1750 = vmatprep.subr.bf16.mxu0 0
        %1751 = vmatpush1.bf16.msra.mxu0 0
        %1752 = vmatprep.subr.bf16.mxu0 0
        %1753 = vmatpush1.bf16.msra.mxu0 0
        %1754 = vmatprep.subr.bf16.mxu0 0
        %1755 = vmatpush1.bf16.msra.mxu0 0
        %1756 = vmatprep.subr.bf16.mxu0 0
        %1757 = vmatpush1.bf16.msra.mxu0 0
        %1758 = vmatprep.subr.bf16.mxu0 0
        %1759 = vmatpush1.bf16.msra.mxu0 0
        %1760 = vmatprep.subr.bf16.mxu0 0
        %1761 = vmatpush1.bf16.msra.mxu0 0
        %1762 = vmatprep.mubr.bf16.mxu0 0
        %1763 = vmatmul.mubr.bf16.gmra.mrb[0].mxu0 %v1481
        %v1764 = vpop.f32.mrb[0].mxu0
        %v1765 = vadd.f32 %v1227, %v1764
        %v1766 = vpop.f32.mrb[0].mxu0
        %v1767 = vadd.f32 %v1228, %v1766
        %v1768 = vpop.f32.mrb[0].mxu0
        %v1769 = vadd.f32 %v1243, %v1768
        %v1770 = vpop.f32.mrb[0].mxu0
        %v1771 = vadd.f32 %v1244, %v1770
        %1772 = vmatprep.mubr.bf16.mxu0 0
        %1773 = vmatmul.mubr.bf16.gmra.mrb[0].mxu0 %v1484
        %v1774 = vpop.f32.mrb[0].mxu0
        %v1775 = vadd.f32 %v1259, %v1774
        %v1776 = vpop.f32.mrb[0].mxu0
        %v1777 = vadd.f32 %v1260, %v1776
        %v1778 = vpop.f32.mrb[0].mxu0
        %v1779 = vadd.f32 %v1275, %v1778
        %v1780 = vpop.f32.mrb[0].mxu0
        %v1781 = vadd.f32 %v1276, %v1780
        %1782 = vmatprep.mubr.bf16.mxu0 0
        %1783 = vmatmul.mubr.bf16.gmra.mrb[0].mxu0 %v1487
        %v1784 = vpop.f32.mrb[0].mxu0
        %v1785 = vadd.f32 %v1291, %v1784
        %v1786 = vpop.f32.mrb[0].mxu0
        %v1787 = vadd.f32 %v1292, %v1786
        %v1788 = vpop.f32.mrb[0].mxu0
        %v1789 = vadd.f32 %v1307, %v1788
        %v1790 = vpop.f32.mrb[0].mxu0
        %v1791 = vadd.f32 %v1308, %v1790
        %1792 = vmatprep.mubr.bf16.mxu0 0
        %1793 = vmatmul.mubr.bf16.gmra.mrb[0].mxu0 %v1490
        %v1794 = vpop.f32.mrb[0].mxu0
        %v1795 = vadd.f32 %v1323, %v1794
        %v1796 = vpop.f32.mrb[0].mxu0
        %v1797 = vadd.f32 %v1324, %v1796
        %v1798 = vpop.f32.mrb[0].mxu0
        %v1799 = vadd.f32 %v1339, %v1798
        %v1800 = vpop.f32.mrb[0].mxu0
        %v1801 = vadd.f32 %v1340, %v1800
        %1802 = vmatprep.mubr.bf16.mxu0 0
        %1803 = vmatmul.mubr.bf16.gmra.mrb[0].mxu0 %v1493
        %v1804 = vpop.f32.mrb[0].mxu0
        %v1805 = vadd.f32 %v1355, %v1804
        %v1806 = vpop.f32.mrb[0].mxu0
        %v1807 = vadd.f32 %v1356, %v1806
        %v1808 = vpop.f32.mrb[0].mxu0
        %v1809 = vadd.f32 %v1371, %v1808
        %v1810 = vpop.f32.mrb[0].mxu0
        %v1811 = vadd.f32 %v1372, %v1810
        %1812 = vmatprep.mubr.bf16.mxu0 0
        %1813 = vmatmul.mubr.bf16.gmra.mrb[0].mxu0 %v1496
        %v1814 = vpop.f32.mrb[0].mxu0
        %v1815 = vadd.f32 %v1387, %v1814
        %v1816 = vpop.f32.mrb[0].mxu0
        %v1817 = vadd.f32 %v1388, %v1816
        %v1818 = vpop.f32.mrb[0].mxu0
        %v1819 = vadd.f32 %v1403, %v1818
        %v1820 = vpop.f32.mrb[0].mxu0
        %v1821 = vadd.f32 %v1404, %v1820
        %1822 = vmatprep.mubr.bf16.mxu0 0
        %1823 = vmatmul.mubr.bf16.gmra.mrb[0].mxu0 %v1499
        %v1824 = vpop.f32.mrb[0].mxu0
        %v1825 = vadd.f32 %v1419, %v1824
        %v1826 = vpop.f32.mrb[0].mxu0
        %v1827 = vadd.f32 %v1420, %v1826
        %v1828 = vpop.f32.mrb[0].mxu0
        %v1829 = vadd.f32 %v1435, %v1828
        %v1830 = vpop.f32.mrb[0].mxu0
        %v1831 = vadd.f32 %v1436, %v1830
        %1832 = vmatprep.mubr.bf16.mxu0 0
        %1833 = vmatmul.mubr.bf16.gmra.mrb[0].mxu0 %v1502
        %v1834 = vpop.f32.mrb[0].mxu0
        %v1835 = vadd.f32 %v1451, %v1834
        %v1836 = vpop.f32.mrb[0].mxu0
        %v1837 = vadd.f32 %v1452, %v1836
        %v1838 = vpop.f32.mrb[0].mxu0
        %v1839 = vadd.f32 %v1467, %v1838
        %v1840 = vpop.f32.mrb[0].mxu0
        %v1841 = vadd.f32 %v1468, %v1840
        %1842 = vdwg.mxu0
        %1843 = vmatprep.subr.bf16.mxu0 %v1086
        %1844 = vmatpush1.bf16.msra.mxu0 %v1085
        %1845 = vmatprep.subr.bf16.mxu0 0
        %1846 = vmatpush1.bf16.msra.mxu0 0
        %1847 = vmatprep.subr.bf16.mxu0 0
        %1848 = vmatpush1.bf16.msra.mxu0 0
        %1849 = vmatprep.subr.bf16.mxu0 0
        %1850 = vmatpush1.bf16.msra.mxu0 0
        %1851 = vmatprep.subr.bf16.mxu0 0
        %1852 = vmatpush1.bf16.msra.mxu0 0
        %1853 = vmatprep.subr.bf16.mxu0 0
        %1854 = vmatpush1.bf16.msra.mxu0 0
        %1855 = vmatprep.subr.bf16.mxu0 0
        %1856 = vmatpush1.bf16.msra.mxu0 0
        %1857 = vmatprep.subr.bf16.mxu0 0
        %1858 = vmatpush1.bf16.msra.mxu0 0
        %1859 = vmatprep.subr.bf16.mxu0 0
        %1860 = vmatpush1.bf16.msra.mxu0 0
        %1861 = vmatprep.subr.bf16.mxu0 0
        %1862 = vmatpush1.bf16.msra.mxu0 0
        %1863 = vmatprep.subr.bf16.mxu0 0
        %1864 = vmatpush1.bf16.msra.mxu0 0
        %1865 = vmatprep.subr.bf16.mxu0 0
        %1866 = vmatpush1.bf16.msra.mxu0 0
        %1867 = vmatprep.subr.bf16.mxu0 0
        %1868 = vmatpush1.bf16.msra.mxu0 0
        %1869 = vmatprep.subr.bf16.mxu0 0
        %1870 = vmatpush1.bf16.msra.mxu0 0
        %1871 = vmatprep.subr.bf16.mxu0 0
        %1872 = vmatpush1.bf16.msra.mxu0 0
        %1873 = vmatprep.subr.bf16.mxu0 0
        %1874 = vmatpush1.bf16.msra.mxu0 0
        %1875 = vmatprep.mubr.bf16.mxu0 0
        %1876 = vmatmul.mubr.bf16.gmra.mrb[0].mxu0 %v1481
        %v1877 = vpop.f32.mrb[0].mxu0
        %v1878 = vadd.f32 %v1229, %v1877
        %v1879 = vpop.f32.mrb[0].mxu0
        %v1880 = vadd.f32 %v1230, %v1879
        %v1881 = vpop.f32.mrb[0].mxu0
        %v1882 = vadd.f32 %v1245, %v1881
        %v1883 = vpop.f32.mrb[0].mxu0
        %v1884 = vadd.f32 %v1246, %v1883
        %1885 = vmatprep.mubr.bf16.mxu0 0
        %1886 = vmatmul.mubr.bf16.gmra.mrb[0].mxu0 %v1484
        %v1887 = vpop.f32.mrb[0].mxu0
        %v1888 = vadd.f32 %v1261, %v1887
        %v1889 = vpop.f32.mrb[0].mxu0
        %v1890 = vadd.f32 %v1262, %v1889
        %v1891 = vpop.f32.mrb[0].mxu0
        %v1892 = vadd.f32 %v1277, %v1891
        %v1893 = vpop.f32.mrb[0].mxu0
        %v1894 = vadd.f32 %v1278, %v1893
        %1895 = vmatprep.mubr.bf16.mxu0 0
        %1896 = vmatmul.mubr.bf16.gmra.mrb[0].mxu0 %v1487
        %v1897 = vpop.f32.mrb[0].mxu0
        %v1898 = vadd.f32 %v1293, %v1897
        %v1899 = vpop.f32.mrb[0].mxu0
        %v1900 = vadd.f32 %v1294, %v1899
        %v1901 = vpop.f32.mrb[0].mxu0
        %v1902 = vadd.f32 %v1309, %v1901
        %v1903 = vpop.f32.mrb[0].mxu0
        %v1904 = vadd.f32 %v1310, %v1903
        %1905 = vmatprep.mubr.bf16.mxu0 0
        %1906 = vmatmul.mubr.bf16.gmra.mrb[0].mxu0 %v1490
        %v1907 = vpop.f32.mrb[0].mxu0
        %v1908 = vadd.f32 %v1325, %v1907
        %v1909 = vpop.f32.mrb[0].mxu0
        %v1910 = vadd.f32 %v1326, %v1909
        %v1911 = vpop.f32.mrb[0].mxu0
        %v1912 = vadd.f32 %v1341, %v1911
        %v1913 = vpop.f32.mrb[0].mxu0
        %v1914 = vadd.f32 %v1342, %v1913
        %1915 = vmatprep.mubr.bf16.mxu0 0
        %1916 = vmatmul.mubr.bf16.gmra.mrb[0].mxu0 %v1493
        %v1917 = vpop.f32.mrb[0].mxu0
        %v1918 = vadd.f32 %v1357, %v1917
        %v1919 = vpop.f32.mrb[0].mxu0
        %v1920 = vadd.f32 %v1358, %v1919
        %v1921 = vpop.f32.mrb[0].mxu0
        %v1922 = vadd.f32 %v1373, %v1921
        %v1923 = vpop.f32.mrb[0].mxu0
        %v1924 = vadd.f32 %v1374, %v1923
        %1925 = vmatprep.mubr.bf16.mxu0 0
        %1926 = vmatmul.mubr.bf16.gmra.mrb[0].mxu0 %v1496
        %v1927 = vpop.f32.mrb[0].mxu0
        %v1928 = vadd.f32 %v1389, %v1927
        %v1929 = vpop.f32.mrb[0].mxu0
        %v1930 = vadd.f32 %v1390, %v1929
        %v1931 = vpop.f32.mrb[0].mxu0
        %v1932 = vadd.f32 %v1405, %v1931
        %v1933 = vpop.f32.mrb[0].mxu0
        %v1934 = vadd.f32 %v1406, %v1933
        %1935 = vmatprep.mubr.bf16.mxu0 0
        %1936 = vmatmul.mubr.bf16.gmra.mrb[0].mxu0 %v1499
        %v1937 = vpop.f32.mrb[0].mxu0
        %v1938 = vadd.f32 %v1421, %v1937
        %v1939 = vpop.f32.mrb[0].mxu0
        %v1940 = vadd.f32 %v1422, %v1939
        %v1941 = vpop.f32.mrb[0].mxu0
        %v1942 = vadd.f32 %v1437, %v1941
        %v1943 = vpop.f32.mrb[0].mxu0
        %v1944 = vadd.f32 %v1438, %v1943
        %1945 = vmatprep.mubr.bf16.mxu0 0
        %1946 = vmatmul.mubr.bf16.gmra.mrb[0].mxu0 %v1502
        %v1947 = vpop.f32.mrb[0].mxu0
        %v1948 = vadd.f32 %v1453, %v1947
        %v1949 = vpop.f32.mrb[0].mxu0
        %v1950 = vadd.f32 %v1454, %v1949
        %v1951 = vpop.f32.mrb[0].mxu0
        %v1952 = vadd.f32 %v1469, %v1951
        %v1953 = vpop.f32.mrb[0].mxu0
        %v1954 = vadd.f32 %v1470, %v1953
        %1955 = vdwg.mxu0
        %1956 = vmatprep.subr.bf16.mxu0 %v1088
        %1957 = vmatpush1.bf16.msra.mxu0 %v1087
        %1958 = vmatprep.subr.bf16.mxu0 0
        %1959 = vmatpush1.bf16.msra.mxu0 0
        %1960 = vmatprep.subr.bf16.mxu0 0
        %1961 = vmatpush1.bf16.msra.mxu0 0
        %1962 = vmatprep.subr.bf16.mxu0 0
        %1963 = vmatpush1.bf16.msra.mxu0 0
        %1964 = vmatprep.subr.bf16.mxu0 0
        %1965 = vmatpush1.bf16.msra.mxu0 0
        %1966 = vmatprep.subr.bf16.mxu0 0
        %1967 = vmatpush1.bf16.msra.mxu0 0
        %1968 = vmatprep.subr.bf16.mxu0 0
        %1969 = vmatpush1.bf16.msra.mxu0 0
        %1970 = vmatprep.subr.bf16.mxu0 0
        %1971 = vmatpush1.bf16.msra.mxu0 0
        %1972 = vmatprep.subr.bf16.mxu0 0
        %1973 = vmatpush1.bf16.msra.mxu0 0
        %1974 = vmatprep.subr.bf16.mxu0 0
        %1975 = vmatpush1.bf16.msra.mxu0 0
        %1976 = vmatprep.subr.bf16.mxu0 0
        %1977 = vmatpush1.bf16.msra.mxu0 0
        %1978 = vmatprep.subr.bf16.mxu0 0
        %1979 = vmatpush1.bf16.msra.mxu0 0
        %1980 = vmatprep.subr.bf16.mxu0 0
        %1981 = vmatpush1.bf16.msra.mxu0 0
        %1982 = vmatprep.subr.bf16.mxu0 0
        %1983 = vmatpush1.bf16.msra.mxu0 0
        %1984 = vmatprep.subr.bf16.mxu0 0
        %1985 = vmatpush1.bf16.msra.mxu0 0
        %1986 = vmatprep.subr.bf16.mxu0 0
        %1987 = vmatpush1.bf16.msra.mxu0 0
        %1988 = vmatprep.mubr.bf16.mxu0 0
        %1989 = vmatmul.mubr.bf16.gmra.mrb[0].mxu0 %v1481
        %v1990 = vpop.f32.mrb[0].mxu0
        %v1991 = vadd.f32 %v1231, %v1990
        %v1992 = vpop.f32.mrb[0].mxu0
        %v1993 = vadd.f32 %v1232, %v1992
        %v1994 = vpop.f32.mrb[0].mxu0
        %v1995 = vadd.f32 %v1247, %v1994
        %v1996 = vpop.f32.mrb[0].mxu0
        %v1997 = vadd.f32 %v1248, %v1996
        %1998 = vmatprep.mubr.bf16.mxu0 0
        %1999 = vmatmul.mubr.bf16.gmra.mrb[0].mxu0 %v1484
        %v2000 = vpop.f32.mrb[0].mxu0
        %v2001 = vadd.f32 %v1263, %v2000
        %v2002 = vpop.f32.mrb[0].mxu0
        %v2003 = vadd.f32 %v1264, %v2002
        %v2004 = vpop.f32.mrb[0].mxu0
        %v2005 = vadd.f32 %v1279, %v2004
        %v2006 = vpop.f32.mrb[0].mxu0
        %v2007 = vadd.f32 %v1280, %v2006
        %2008 = vmatprep.mubr.bf16.mxu0 0
        %2009 = vmatmul.mubr.bf16.gmra.mrb[0].mxu0 %v1487
        %v2010 = vpop.f32.mrb[0].mxu0
        %v2011 = vadd.f32 %v1295, %v2010
        %v2012 = vpop.f32.mrb[0].mxu0
        %v2013 = vadd.f32 %v1296, %v2012
        %v2014 = vpop.f32.mrb[0].mxu0
        %v2015 = vadd.f32 %v1311, %v2014
        %v2016 = vpop.f32.mrb[0].mxu0
        %v2017 = vadd.f32 %v1312, %v2016
        %2018 = vmatprep.mubr.bf16.mxu0 0
        %2019 = vmatmul.mubr.bf16.gmra.mrb[0].mxu0 %v1490
        %v2020 = vpop.f32.mrb[0].mxu0
        %v2021 = vadd.f32 %v1327, %v2020
        %v2022 = vpop.f32.mrb[0].mxu0
        %v2023 = vadd.f32 %v1328, %v2022
        %v2024 = vpop.f32.mrb[0].mxu0
        %v2025 = vadd.f32 %v1343, %v2024
        %v2026 = vpop.f32.mrb[0].mxu0
        %v2027 = vadd.f32 %v1344, %v2026
        %2028 = vmatprep.mubr.bf16.mxu0 0
        %2029 = vmatmul.mubr.bf16.gmra.mrb[0].mxu0 %v1493
        %v2030 = vpop.f32.mrb[0].mxu0
        %v2031 = vadd.f32 %v1359, %v2030
        %v2032 = vpop.f32.mrb[0].mxu0
        %v2033 = vadd.f32 %v1360, %v2032
        %v2034 = vpop.f32.mrb[0].mxu0
        %v2035 = vadd.f32 %v1375, %v2034
        %v2036 = vpop.f32.mrb[0].mxu0
        %v2037 = vadd.f32 %v1376, %v2036
        %2038 = vmatprep.mubr.bf16.mxu0 0
        %2039 = vmatmul.mubr.bf16.gmra.mrb[0].mxu0 %v1496
        %v2040 = vpop.f32.mrb[0].mxu0
        %v2041 = vadd.f32 %v1391, %v2040
        %v2042 = vpop.f32.mrb[0].mxu0
        %v2043 = vadd.f32 %v1392, %v2042
        %v2044 = vpop.f32.mrb[0].mxu0
        %v2045 = vadd.f32 %v1407, %v2044
        %v2046 = vpop.f32.mrb[0].mxu0
        %v2047 = vadd.f32 %v1408, %v2046
        %2048 = vmatprep.mubr.bf16.mxu0 0
        %2049 = vmatmul.mubr.bf16.gmra.mrb[0].mxu0 %v1499
        %v2050 = vpop.f32.mrb[0].mxu0
        %v2051 = vadd.f32 %v1423, %v2050
        %v2052 = vpop.f32.mrb[0].mxu0
        %v2053 = vadd.f32 %v1424, %v2052
        %v2054 = vpop.f32.mrb[0].mxu0
        %v2055 = vadd.f32 %v1439, %v2054
        %v2056 = vpop.f32.mrb[0].mxu0
        %v2057 = vadd.f32 %v1440, %v2056
        %2058 = vmatprep.mubr.bf16.mxu0 0
        %2059 = vmatmul.mubr.bf16.gmra.mrb[0].mxu0 %v1502
        %v2060 = vpop.f32.mrb[0].mxu0
        %v2061 = vadd.f32 %v1455, %v2060
        %v2062 = vpop.f32.mrb[0].mxu0
        %v2063 = vadd.f32 %v1456, %v2062
        %v2064 = vpop.f32.mrb[0].mxu0
        %v2065 = vadd.f32 %v1471, %v2064
        %v2066 = vpop.f32.mrb[0].mxu0
        %v2067 = vadd.f32 %v1472, %v2066
        %2068 = vdwg.mxu0
        %2069 = vmatprep.subr.bf16.mxu0 %v1090
        %2070 = vmatpush1.bf16.msra.mxu0 %v1089
        %2071 = vmatprep.subr.bf16.mxu0 0
        %2072 = vmatpush1.bf16.msra.mxu0 0
        %2073 = vmatprep.subr.bf16.mxu0 0
        %2074 = vmatpush1.bf16.msra.mxu0 0
        %2075 = vmatprep.subr.bf16.mxu0 0
        %2076 = vmatpush1.bf16.msra.mxu0 0
        %2077 = vmatprep.subr.bf16.mxu0 0
        %2078 = vmatpush1.bf16.msra.mxu0 0
        %2079 = vmatprep.subr.bf16.mxu0 0
        %2080 = vmatpush1.bf16.msra.mxu0 0
        %2081 = vmatprep.subr.bf16.mxu0 0
        %2082 = vmatpush1.bf16.msra.mxu0 0
        %2083 = vmatprep.subr.bf16.mxu0 0
        %2084 = vmatpush1.bf16.msra.mxu0 0
        %2085 = vmatprep.subr.bf16.mxu0 0
        %2086 = vmatpush1.bf16.msra.mxu0 0
        %2087 = vmatprep.subr.bf16.mxu0 0
        %2088 = vmatpush1.bf16.msra.mxu0 0
        %2089 = vmatprep.subr.bf16.mxu0 0
        %2090 = vmatpush1.bf16.msra.mxu0 0
        %2091 = vmatprep.subr.bf16.mxu0 0
        %2092 = vmatpush1.bf16.msra.mxu0 0
        %2093 = vmatprep.subr.bf16.mxu0 0
        %2094 = vmatpush1.bf16.msra.mxu0 0
        %2095 = vmatprep.subr.bf16.mxu0 0
        %2096 = vmatpush1.bf16.msra.mxu0 0
        %2097 = vmatprep.subr.bf16.mxu0 0
        %2098 = vmatpush1.bf16.msra.mxu0 0
        %2099 = vmatprep.subr.bf16.mxu0 0
        %2100 = vmatpush1.bf16.msra.mxu0 0
        %2101 = vmatprep.mubr.bf16.mxu0 0
        %2102 = vmatmul.mubr.bf16.gmra.mrb[0].mxu0 %v1481
        %v2103 = vpop.f32.mrb[0].mxu0
        %v2104 = vadd.f32 %v1233, %v2103
        %v2105 = vpop.f32.mrb[0].mxu0
        %v2106 = vadd.f32 %v1234, %v2105
        %v2107 = vpop.f32.mrb[0].mxu0
        %v2108 = vadd.f32 %v1249, %v2107
        %v2109 = vpop.f32.mrb[0].mxu0
        %v2110 = vadd.f32 %v1250, %v2109
        %2111 = vmatprep.mubr.bf16.mxu0 0
        %2112 = vmatmul.mubr.bf16.gmra.mrb[0].mxu0 %v1484
        %v2113 = vpop.f32.mrb[0].mxu0
        %v2114 = vadd.f32 %v1265, %v2113
        %v2115 = vpop.f32.mrb[0].mxu0
        %v2116 = vadd.f32 %v1266, %v2115
        %v2117 = vpop.f32.mrb[0].mxu0
        %v2118 = vadd.f32 %v1281, %v2117
        %v2119 = vpop.f32.mrb[0].mxu0
        %v2120 = vadd.f32 %v1282, %v2119
        %2121 = vmatprep.mubr.bf16.mxu0 0
        %2122 = vmatmul.mubr.bf16.gmra.mrb[0].mxu0 %v1487
        %v2123 = vpop.f32.mrb[0].mxu0
        %v2124 = vadd.f32 %v1297, %v2123
        %v2125 = vpop.f32.mrb[0].mxu0
        %v2126 = vadd.f32 %v1298, %v2125
        %v2127 = vpop.f32.mrb[0].mxu0
        %v2128 = vadd.f32 %v1313, %v2127
        %v2129 = vpop.f32.mrb[0].mxu0
        %v2130 = vadd.f32 %v1314, %v2129
        %2131 = vmatprep.mubr.bf16.mxu0 0
        %2132 = vmatmul.mubr.bf16.gmra.mrb[0].mxu0 %v1490
        %v2133 = vpop.f32.mrb[0].mxu0
        %v2134 = vadd.f32 %v1329, %v2133
        %v2135 = vpop.f32.mrb[0].mxu0
        %v2136 = vadd.f32 %v1330, %v2135
        %v2137 = vpop.f32.mrb[0].mxu0
        %v2138 = vadd.f32 %v1345, %v2137
        %v2139 = vpop.f32.mrb[0].mxu0
        %v2140 = vadd.f32 %v1346, %v2139
        %2141 = vmatprep.mubr.bf16.mxu0 0
        %2142 = vmatmul.mubr.bf16.gmra.mrb[0].mxu0 %v1493
        %v2143 = vpop.f32.mrb[0].mxu0
        %v2144 = vadd.f32 %v1361, %v2143
        %v2145 = vpop.f32.mrb[0].mxu0
        %v2146 = vadd.f32 %v1362, %v2145
        %v2147 = vpop.f32.mrb[0].mxu0
        %v2148 = vadd.f32 %v1377, %v2147
        %v2149 = vpop.f32.mrb[0].mxu0
        %v2150 = vadd.f32 %v1378, %v2149
        %2151 = vmatprep.mubr.bf16.mxu0 0
        %2152 = vmatmul.mubr.bf16.gmra.mrb[0].mxu0 %v1496
        %v2153 = vpop.f32.mrb[0].mxu0
        %v2154 = vadd.f32 %v1393, %v2153
        %v2155 = vpop.f32.mrb[0].mxu0
        %v2156 = vadd.f32 %v1394, %v2155
        %v2157 = vpop.f32.mrb[0].mxu0
        %v2158 = vadd.f32 %v1409, %v2157
        %v2159 = vpop.f32.mrb[0].mxu0
        %v2160 = vadd.f32 %v1410, %v2159
        %2161 = vmatprep.mubr.bf16.mxu0 0
        %2162 = vmatmul.mubr.bf16.gmra.mrb[0].mxu0 %v1499
        %v2163 = vpop.f32.mrb[0].mxu0
        %v2164 = vadd.f32 %v1425, %v2163
        %v2165 = vpop.f32.mrb[0].mxu0
        %v2166 = vadd.f32 %v1426, %v2165
        %v2167 = vpop.f32.mrb[0].mxu0
        %v2168 = vadd.f32 %v1441, %v2167
        %v2169 = vpop.f32.mrb[0].mxu0
        %v2170 = vadd.f32 %v1442, %v2169
        %2171 = vmatprep.mubr.bf16.mxu0 0
        %2172 = vmatmul.mubr.bf16.gmra.mrb[0].mxu0 %v1502
        %v2173 = vpop.f32.mrb[0].mxu0
        %v2174 = vadd.f32 %v1457, %v2173
        %v2175 = vpop.f32.mrb[0].mxu0
        %v2176 = vadd.f32 %v1458, %v2175
        %v2177 = vpop.f32.mrb[0].mxu0
        %v2178 = vadd.f32 %v1473, %v2177
        %v2179 = vpop.f32.mrb[0].mxu0
        %v2180 = vadd.f32 %v1474, %v2179
        %2181 = vdwg.mxu0
        %2182 = vmatprep.subr.bf16.mxu0 %v1092
        %2183 = vmatpush1.bf16.msra.mxu0 %v1091
        %2184 = vmatprep.subr.bf16.mxu0 0
        %2185 = vmatpush1.bf16.msra.mxu0 0
        %2186 = vmatprep.subr.bf16.mxu0 0
        %2187 = vmatpush1.bf16.msra.mxu0 0
        %2188 = vmatprep.subr.bf16.mxu0 0
        %2189 = vmatpush1.bf16.msra.mxu0 0
        %2190 = vmatprep.subr.bf16.mxu0 0
        %2191 = vmatpush1.bf16.msra.mxu0 0
        %2192 = vmatprep.subr.bf16.mxu0 0
        %2193 = vmatpush1.bf16.msra.mxu0 0
        %2194 = vmatprep.subr.bf16.mxu0 0
        %2195 = vmatpush1.bf16.msra.mxu0 0
        %2196 = vmatprep.subr.bf16.mxu0 0
        %2197 = vmatpush1.bf16.msra.mxu0 0
        %2198 = vmatprep.subr.bf16.mxu0 0
        %2199 = vmatpush1.bf16.msra.mxu0 0
        %2200 = vmatprep.subr.bf16.mxu0 0
        %2201 = vmatpush1.bf16.msra.mxu0 0
        %2202 = vmatprep.subr.bf16.mxu0 0
        %2203 = vmatpush1.bf16.msra.mxu0 0
        %2204 = vmatprep.subr.bf16.mxu0 0
        %2205 = vmatpush1.bf16.msra.mxu0 0
        %2206 = vmatprep.subr.bf16.mxu0 0
        %2207 = vmatpush1.bf16.msra.mxu0 0
        %2208 = vmatprep.subr.bf16.mxu0 0
        %2209 = vmatpush1.bf16.msra.mxu0 0
        %2210 = vmatprep.subr.bf16.mxu0 0
        %2211 = vmatpush1.bf16.msra.mxu0 0
        %2212 = vmatprep.subr.bf16.mxu0 0
        %2213 = vmatpush1.bf16.msra.mxu0 0
        %2214 = vmatprep.mubr.bf16.mxu0 0
        %2215 = vmatmul.mubr.bf16.gmra.mrb[0].mxu0 %v1481
        %v2216 = vpop.f32.mrb[0].mxu0
        %v2217 = vadd.f32 %v1235, %v2216
        %v2218 = vpop.f32.mrb[0].mxu0
        %v2219 = vadd.f32 %v1236, %v2218
        %v2220 = vpop.f32.mrb[0].mxu0
        %v2221 = vadd.f32 %v1251, %v2220
        %v2222 = vpop.f32.mrb[0].mxu0
        %v2223 = vadd.f32 %v1252, %v2222
        %2224 = vmatprep.mubr.bf16.mxu0 0
        %2225 = vmatmul.mubr.bf16.gmra.mrb[0].mxu0 %v1484
        %v2226 = vpop.f32.mrb[0].mxu0
        %v2227 = vadd.f32 %v1267, %v2226
        %v2228 = vpop.f32.mrb[0].mxu0
        %v2229 = vadd.f32 %v1268, %v2228
        %v2230 = vpop.f32.mrb[0].mxu0
        %v2231 = vadd.f32 %v1283, %v2230
        %v2232 = vpop.f32.mrb[0].mxu0
        %v2233 = vadd.f32 %v1284, %v2232
        %2234 = vmatprep.mubr.bf16.mxu0 0
        %2235 = vmatmul.mubr.bf16.gmra.mrb[0].mxu0 %v1487
        %v2236 = vpop.f32.mrb[0].mxu0
        %v2237 = vadd.f32 %v1299, %v2236
        %v2238 = vpop.f32.mrb[0].mxu0
        %v2239 = vadd.f32 %v1300, %v2238
        %v2240 = vpop.f32.mrb[0].mxu0
        %v2241 = vadd.f32 %v1315, %v2240
        %v2242 = vpop.f32.mrb[0].mxu0
        %v2243 = vadd.f32 %v1316, %v2242
        %2244 = vmatprep.mubr.bf16.mxu0 0
        %2245 = vmatmul.mubr.bf16.gmra.mrb[0].mxu0 %v1490
        %v2246 = vpop.f32.mrb[0].mxu0
        %v2247 = vadd.f32 %v1331, %v2246
        %v2248 = vpop.f32.mrb[0].mxu0
        %v2249 = vadd.f32 %v1332, %v2248
        %v2250 = vpop.f32.mrb[0].mxu0
        %v2251 = vadd.f32 %v1347, %v2250
        %v2252 = vpop.f32.mrb[0].mxu0
        %v2253 = vadd.f32 %v1348, %v2252
        %2254 = vmatprep.mubr.bf16.mxu0 0
        %2255 = vmatmul.mubr.bf16.gmra.mrb[0].mxu0 %v1493
        %v2256 = vpop.f32.mrb[0].mxu0
        %v2257 = vadd.f32 %v1363, %v2256
        %v2258 = vpop.f32.mrb[0].mxu0
        %v2259 = vadd.f32 %v1364, %v2258
        %v2260 = vpop.f32.mrb[0].mxu0
        %v2261 = vadd.f32 %v1379, %v2260
        %v2262 = vpop.f32.mrb[0].mxu0
        %v2263 = vadd.f32 %v1380, %v2262
        %2264 = vmatprep.mubr.bf16.mxu0 0
        %2265 = vmatmul.mubr.bf16.gmra.mrb[0].mxu0 %v1496
        %v2266 = vpop.f32.mrb[0].mxu0
        %v2267 = vadd.f32 %v1395, %v2266
        %v2268 = vpop.f32.mrb[0].mxu0
        %v2269 = vadd.f32 %v1396, %v2268
        %v2270 = vpop.f32.mrb[0].mxu0
        %v2271 = vadd.f32 %v1411, %v2270
        %v2272 = vpop.f32.mrb[0].mxu0
        %v2273 = vadd.f32 %v1412, %v2272
        %2274 = vmatprep.mubr.bf16.mxu0 0
        %2275 = vmatmul.mubr.bf16.gmra.mrb[0].mxu0 %v1499
        %v2276 = vpop.f32.mrb[0].mxu0
        %v2277 = vadd.f32 %v1427, %v2276
        %v2278 = vpop.f32.mrb[0].mxu0
        %v2279 = vadd.f32 %v1428, %v2278
        %v2280 = vpop.f32.mrb[0].mxu0
        %v2281 = vadd.f32 %v1443, %v2280
        %v2282 = vpop.f32.mrb[0].mxu0
        %v2283 = vadd.f32 %v1444, %v2282
        %2284 = vmatprep.mubr.bf16.mxu0 0
        %2285 = vmatmul.mubr.bf16.gmra.mrb[0].mxu0 %v1502
        %v2286 = vpop.f32.mrb[0].mxu0
        %v2287 = vadd.f32 %v1459, %v2286
        %v2288 = vpop.f32.mrb[0].mxu0
        %v2289 = vadd.f32 %v1460, %v2288
        %v2290 = vpop.f32.mrb[0].mxu0
        %v2291 = vadd.f32 %v1475, %v2290
        %v2292 = vpop.f32.mrb[0].mxu0
        %v2293 = vadd.f32 %v1476, %v2292
        %2294 = vdwg.mxu0
        %2295 = vmatprep.subr.bf16.mxu0 %v1094
        %2296 = vmatpush1.bf16.msra.mxu0 %v1093
        %2297 = vmatprep.subr.bf16.mxu0 0
        %2298 = vmatpush1.bf16.msra.mxu0 0
        %2299 = vmatprep.subr.bf16.mxu0 0
        %2300 = vmatpush1.bf16.msra.mxu0 0
        %2301 = vmatprep.subr.bf16.mxu0 0
        %2302 = vmatpush1.bf16.msra.mxu0 0
        %2303 = vmatprep.subr.bf16.mxu0 0
        %2304 = vmatpush1.bf16.msra.mxu0 0
        %2305 = vmatprep.subr.bf16.mxu0 0
        %2306 = vmatpush1.bf16.msra.mxu0 0
        %2307 = vmatprep.subr.bf16.mxu0 0
        %2308 = vmatpush1.bf16.msra.mxu0 0
        %2309 = vmatprep.subr.bf16.mxu0 0
        %2310 = vmatpush1.bf16.msra.mxu0 0
        %2311 = vmatprep.subr.bf16.mxu0 0
        %2312 = vmatpush1.bf16.msra.mxu0 0
        %2313 = vmatprep.subr.bf16.mxu0 0
        %2314 = vmatpush1.bf16.msra.mxu0 0
        %2315 = vmatprep.subr.bf16.mxu0 0
        %2316 = vmatpush1.bf16.msra.mxu0 0
        %2317 = vmatprep.subr.bf16.mxu0 0
        %2318 = vmatpush1.bf16.msra.mxu0 0
        %2319 = vmatprep.subr.bf16.mxu0 0
        %2320 = vmatpush1.bf16.msra.mxu0 0
        %2321 = vmatprep.subr.bf16.mxu0 0
        %2322 = vmatpush1.bf16.msra.mxu0 0
        %2323 = vmatprep.subr.bf16.mxu0 0
        %2324 = vmatpush1.bf16.msra.mxu0 0
        %2325 = vmatprep.subr.bf16.mxu0 0
        %2326 = vmatpush1.bf16.msra.mxu0 0
        %2327 = vmatprep.mubr.bf16.mxu0 0
        %2328 = vmatmul.mubr.bf16.gmra.mrb[0].mxu0 %v1481
        %v2329 = vpop.f32.mrb[0].mxu0
        %v2330 = vadd.f32 %v1237, %v2329
        %v2331 = vpop.f32.mrb[0].mxu0
        %v2332 = vadd.f32 %v1238, %v2331
        %v2333 = vpop.f32.mrb[0].mxu0
        %v2334 = vadd.f32 %v1253, %v2333
        %v2335 = vpop.f32.mrb[0].mxu0
        %v2336 = vadd.f32 %v1254, %v2335
        %2337 = vmatprep.mubr.bf16.mxu0 0
        %2338 = vmatmul.mubr.bf16.gmra.mrb[0].mxu0 %v1484
        %v2339 = vpop.f32.mrb[0].mxu0
        %v2340 = vadd.f32 %v1269, %v2339
        %v2341 = vpop.f32.mrb[0].mxu0
        %v2342 = vadd.f32 %v1270, %v2341
        %v2343 = vpop.f32.mrb[0].mxu0
        %v2344 = vadd.f32 %v1285, %v2343
        %v2345 = vpop.f32.mrb[0].mxu0
        %v2346 = vadd.f32 %v1286, %v2345
        %2347 = vmatprep.mubr.bf16.mxu0 0
        %2348 = vmatmul.mubr.bf16.gmra.mrb[0].mxu0 %v1487
        %v2349 = vpop.f32.mrb[0].mxu0
        %v2350 = vadd.f32 %v1301, %v2349
        %v2351 = vpop.f32.mrb[0].mxu0
        %v2352 = vadd.f32 %v1302, %v2351
        %v2353 = vpop.f32.mrb[0].mxu0
        %v2354 = vadd.f32 %v1317, %v2353
        %v2355 = vpop.f32.mrb[0].mxu0
        %v2356 = vadd.f32 %v1318, %v2355
        %2357 = vmatprep.mubr.bf16.mxu0 0
        %2358 = vmatmul.mubr.bf16.gmra.mrb[0].mxu0 %v1490
        %v2359 = vpop.f32.mrb[0].mxu0
        %v2360 = vadd.f32 %v1333, %v2359
        %v2361 = vpop.f32.mrb[0].mxu0
        %v2362 = vadd.f32 %v1334, %v2361
        %v2363 = vpop.f32.mrb[0].mxu0
        %v2364 = vadd.f32 %v1349, %v2363
        %v2365 = vpop.f32.mrb[0].mxu0
        %v2366 = vadd.f32 %v1350, %v2365
        %2367 = vmatprep.mubr.bf16.mxu0 0
        %2368 = vmatmul.mubr.bf16.gmra.mrb[0].mxu0 %v1493
        %v2369 = vpop.f32.mrb[0].mxu0
        %v2370 = vadd.f32 %v1365, %v2369
        %v2371 = vpop.f32.mrb[0].mxu0
        %v2372 = vadd.f32 %v1366, %v2371
        %v2373 = vpop.f32.mrb[0].mxu0
        %v2374 = vadd.f32 %v1381, %v2373
        %v2375 = vpop.f32.mrb[0].mxu0
        %v2376 = vadd.f32 %v1382, %v2375
        %2377 = vmatprep.mubr.bf16.mxu0 0
        %2378 = vmatmul.mubr.bf16.gmra.mrb[0].mxu0 %v1496
        %v2379 = vpop.f32.mrb[0].mxu0
        %v2380 = vadd.f32 %v1397, %v2379
        %v2381 = vpop.f32.mrb[0].mxu0
        %v2382 = vadd.f32 %v1398, %v2381
        %v2383 = vpop.f32.mrb[0].mxu0
        %v2384 = vadd.f32 %v1413, %v2383
        %v2385 = vpop.f32.mrb[0].mxu0
        %v2386 = vadd.f32 %v1414, %v2385
        %2387 = vmatprep.mubr.bf16.mxu0 0
        %2388 = vmatmul.mubr.bf16.gmra.mrb[0].mxu0 %v1499
        %v2389 = vpop.f32.mrb[0].mxu0
        %v2390 = vadd.f32 %v1429, %v2389
        %v2391 = vpop.f32.mrb[0].mxu0
        %v2392 = vadd.f32 %v1430, %v2391
        %v2393 = vpop.f32.mrb[0].mxu0
        %v2394 = vadd.f32 %v1445, %v2393
        %v2395 = vpop.f32.mrb[0].mxu0
        %v2396 = vadd.f32 %v1446, %v2395
        %2397 = vmatprep.mubr.bf16.mxu0 0
        %2398 = vmatmul.mubr.bf16.gmra.mrb[0].mxu0 %v1502
        %v2399 = vpop.f32.mrb[0].mxu0
        %v2400 = vadd.f32 %v1461, %v2399
        %v2401 = vpop.f32.mrb[0].mxu0
        %v2402 = vadd.f32 %v1462, %v2401
        %v2403 = vpop.f32.mrb[0].mxu0
        %v2404 = vadd.f32 %v1477, %v2403
        %v2405 = vpop.f32.mrb[0].mxu0
        %v2406 = vadd.f32 %v1478, %v2405
        %2407 = vdwg.mxu0
        %v2408 = vpack.c.bf16 %v1543, %v1539
        %v2409 = vpack.c.bf16 %v1545, %v1541
        %v2410 = vpack.c.bf16 %v1656, %v1652
        %v2411 = vpack.c.bf16 %v1658, %v1654
        %v2412 = vpack.c.bf16 %v1769, %v1765
        %v2413 = vpack.c.bf16 %v1771, %v1767
        %v2414 = vpack.c.bf16 %v1882, %v1878
        %v2415 = vpack.c.bf16 %v1884, %v1880
        %v2416 = vpack.c.bf16 %v1995, %v1991
        %v2417 = vpack.c.bf16 %v1997, %v1993
        %v2418 = vpack.c.bf16 %v2108, %v2104
        %v2419 = vpack.c.bf16 %v2110, %v2106
        %v2420 = vpack.c.bf16 %v2221, %v2217
        %v2421 = vpack.c.bf16 %v2223, %v2219
        %v2422 = vpack.c.bf16 %v2334, %v2330
        %v2423 = vpack.c.bf16 %v2336, %v2332
        %v2424 = vpack.c.bf16 %v1553, %v1549
        %v2425 = vpack.c.bf16 %v1555, %v1551
        %v2426 = vpack.c.bf16 %v1666, %v1662
        %v2427 = vpack.c.bf16 %v1668, %v1664
        %v2428 = vpack.c.bf16 %v1779, %v1775
        %v2429 = vpack.c.bf16 %v1781, %v1777
        %v2430 = vpack.c.bf16 %v1892, %v1888
        %v2431 = vpack.c.bf16 %v1894, %v1890
        %v2432 = vpack.c.bf16 %v2005, %v2001
        %v2433 = vpack.c.bf16 %v2007, %v2003
        %v2434 = vpack.c.bf16 %v2118, %v2114
        %v2435 = vpack.c.bf16 %v2120, %v2116
        %v2436 = vpack.c.bf16 %v2231, %v2227
        %v2437 = vpack.c.bf16 %v2233, %v2229
        %v2438 = vpack.c.bf16 %v2344, %v2340
        %v2439 = vpack.c.bf16 %v2346, %v2342
        %v2440 = vpack.c.bf16 %v1563, %v1559
        %v2441 = vpack.c.bf16 %v1565, %v1561
        %v2442 = vpack.c.bf16 %v1676, %v1672
        %v2443 = vpack.c.bf16 %v1678, %v1674
        %v2444 = vpack.c.bf16 %v1789, %v1785
        %v2445 = vpack.c.bf16 %v1791, %v1787
        %v2446 = vpack.c.bf16 %v1902, %v1898
        %v2447 = vpack.c.bf16 %v1904, %v1900
        %v2448 = vpack.c.bf16 %v2015, %v2011
        %v2449 = vpack.c.bf16 %v2017, %v2013
        %v2450 = vpack.c.bf16 %v2128, %v2124
        %v2451 = vpack.c.bf16 %v2130, %v2126
        %v2452 = vpack.c.bf16 %v2241, %v2237
        %v2453 = vpack.c.bf16 %v2243, %v2239
        %v2454 = vpack.c.bf16 %v2354, %v2350
        %v2455 = vpack.c.bf16 %v2356, %v2352
        %v2456 = vpack.c.bf16 %v1573, %v1569
        %v2457 = vpack.c.bf16 %v1575, %v1571
        %v2458 = vpack.c.bf16 %v1686, %v1682
        %v2459 = vpack.c.bf16 %v1688, %v1684
        %v2460 = vpack.c.bf16 %v1799, %v1795
        %v2461 = vpack.c.bf16 %v1801, %v1797
        %v2462 = vpack.c.bf16 %v1912, %v1908
        %v2463 = vpack.c.bf16 %v1914, %v1910
        %v2464 = vpack.c.bf16 %v2025, %v2021
        %v2465 = vpack.c.bf16 %v2027, %v2023
        %v2466 = vpack.c.bf16 %v2138, %v2134
        %v2467 = vpack.c.bf16 %v2140, %v2136
        %v2468 = vpack.c.bf16 %v2251, %v2247
        %v2469 = vpack.c.bf16 %v2253, %v2249
        %v2470 = vpack.c.bf16 %v2364, %v2360
        %v2471 = vpack.c.bf16 %v2366, %v2362
        %v2472 = vpack.c.bf16 %v1583, %v1579
        %v2473 = vpack.c.bf16 %v1585, %v1581
        %v2474 = vpack.c.bf16 %v1696, %v1692
        %v2475 = vpack.c.bf16 %v1698, %v1694
        %v2476 = vpack.c.bf16 %v1809, %v1805
        %v2477 = vpack.c.bf16 %v1811, %v1807
        %v2478 = vpack.c.bf16 %v1922, %v1918
        %v2479 = vpack.c.bf16 %v1924, %v1920
        %v2480 = vpack.c.bf16 %v2035, %v2031
        %v2481 = vpack.c.bf16 %v2037, %v2033
        %v2482 = vpack.c.bf16 %v2148, %v2144
        %v2483 = vpack.c.bf16 %v2150, %v2146
        %v2484 = vpack.c.bf16 %v2261, %v2257
        %v2485 = vpack.c.bf16 %v2263, %v2259
        %v2486 = vpack.c.bf16 %v2374, %v2370
        %v2487 = vpack.c.bf16 %v2376, %v2372
        %v2488 = vpack.c.bf16 %v1593, %v1589
        %v2489 = vpack.c.bf16 %v1595, %v1591
        %v2490 = vpack.c.bf16 %v1706, %v1702
        %v2491 = vpack.c.bf16 %v1708, %v1704
        %v2492 = vpack.c.bf16 %v1819, %v1815
        %v2493 = vpack.c.bf16 %v1821, %v1817
        %v2494 = vpack.c.bf16 %v1932, %v1928
        %v2495 = vpack.c.bf16 %v1934, %v1930
        %v2496 = vpack.c.bf16 %v2045, %v2041
        %v2497 = vpack.c.bf16 %v2047, %v2043
        %v2498 = vpack.c.bf16 %v2158, %v2154
        %v2499 = vpack.c.bf16 %v2160, %v2156
        %v2500 = vpack.c.bf16 %v2271, %v2267
        %v2501 = vpack.c.bf16 %v2273, %v2269
        %v2502 = vpack.c.bf16 %v2384, %v2380
        %v2503 = vpack.c.bf16 %v2386, %v2382
        %v2504 = vpack.c.bf16 %v1603, %v1599
        %v2505 = vpack.c.bf16 %v1605, %v1601
        %v2506 = vpack.c.bf16 %v1716, %v1712
        %v2507 = vpack.c.bf16 %v1718, %v1714
        %v2508 = vpack.c.bf16 %v1829, %v1825
        %v2509 = vpack.c.bf16 %v1831, %v1827
        %v2510 = vpack.c.bf16 %v1942, %v1938
        %v2511 = vpack.c.bf16 %v1944, %v1940
        %v2512 = vpack.c.bf16 %v2055, %v2051
        %v2513 = vpack.c.bf16 %v2057, %v2053
        %v2514 = vpack.c.bf16 %v2168, %v2164
        %v2515 = vpack.c.bf16 %v2170, %v2166
        %v2516 = vpack.c.bf16 %v2281, %v2277
        %v2517 = vpack.c.bf16 %v2283, %v2279
        %v2518 = vpack.c.bf16 %v2394, %v2390
        %v2519 = vpack.c.bf16 %v2396, %v2392
        %v2520 = vpack.c.bf16 %v1613, %v1609
        %v2521 = vpack.c.bf16 %v1615, %v1611
        %v2522 = vpack.c.bf16 %v1726, %v1722
        %v2523 = vpack.c.bf16 %v1728, %v1724
        %v2524 = vpack.c.bf16 %v1839, %v1835
        %v2525 = vpack.c.bf16 %v1841, %v1837
        %v2526 = vpack.c.bf16 %v1952, %v1948
        %v2527 = vpack.c.bf16 %v1954, %v1950
        %v2528 = vpack.c.bf16 %v2065, %v2061
        %v2529 = vpack.c.bf16 %v2067, %v2063
        %v2530 = vpack.c.bf16 %v2178, %v2174
        %v2531 = vpack.c.bf16 %v2180, %v2176
        %v2532 = vpack.c.bf16 %v2291, %v2287
        %v2533 = vpack.c.bf16 %v2293, %v2289
        %v2534 = vpack.c.bf16 %v2404, %v2400
        %v2535 = vpack.c.bf16 %v2406, %v2402
        %v2664 = vunpack.c.l.b16 %v2408
        %v2665 = vunpack.c.l.b16 %v2409
        %v2666 = vunpack.c.l.b16 %v2410
        %v2667 = vunpack.c.l.b16 %v2411
        %v2668 = vunpack.c.l.b16 %v2412
        %v2669 = vunpack.c.l.b16 %v2413
        %v2670 = vunpack.c.l.b16 %v2414
        %v2671 = vunpack.c.l.b16 %v2415
        %v2672 = vunpack.c.l.b16 %v2416
        %v2673 = vunpack.c.l.b16 %v2417
        %v2674 = vunpack.c.l.b16 %v2418
        %v2675 = vunpack.c.l.b16 %v2419
        %v2676 = vunpack.c.l.b16 %v2420
        %v2677 = vunpack.c.l.b16 %v2421
        %v2678 = vunpack.c.l.b16 %v2422
        %v2679 = vunpack.c.l.b16 %v2423
        %v2680 = vunpack.c.h.b16 %v2408
        %v2681 = vunpack.c.h.b16 %v2409
        %v2682 = vunpack.c.h.b16 %v2410
        %v2683 = vunpack.c.h.b16 %v2411
        %v2684 = vunpack.c.h.b16 %v2412
        %v2685 = vunpack.c.h.b16 %v2413
        %v2686 = vunpack.c.h.b16 %v2414
        %v2687 = vunpack.c.h.b16 %v2415
        %v2688 = vunpack.c.h.b16 %v2416
        %v2689 = vunpack.c.h.b16 %v2417
        %v2690 = vunpack.c.h.b16 %v2418
        %v2691 = vunpack.c.h.b16 %v2419
        %v2692 = vunpack.c.h.b16 %v2420
        %v2693 = vunpack.c.h.b16 %v2421
        %v2694 = vunpack.c.h.b16 %v2422
        %v2695 = vunpack.c.h.b16 %v2423
        %v2696 = vunpack.c.l.b16 %v2424
        %v2697 = vunpack.c.l.b16 %v2425
        %v2698 = vunpack.c.l.b16 %v2426
        %v2699 = vunpack.c.l.b16 %v2427
        %v2700 = vunpack.c.l.b16 %v2428
        %v2701 = vunpack.c.l.b16 %v2429
        %v2702 = vunpack.c.l.b16 %v2430
        %v2703 = vunpack.c.l.b16 %v2431
        %v2704 = vunpack.c.l.b16 %v2432
        %v2705 = vunpack.c.l.b16 %v2433
        %v2706 = vunpack.c.l.b16 %v2434
        %v2707 = vunpack.c.l.b16 %v2435
        %v2708 = vunpack.c.l.b16 %v2436
        %v2709 = vunpack.c.l.b16 %v2437
        %v2710 = vunpack.c.l.b16 %v2438
        %v2711 = vunpack.c.l.b16 %v2439
        %v2712 = vunpack.c.h.b16 %v2424
        %v2713 = vunpack.c.h.b16 %v2425
        %v2714 = vunpack.c.h.b16 %v2426
        %v2715 = vunpack.c.h.b16 %v2427
        %v2716 = vunpack.c.h.b16 %v2428
        %v2717 = vunpack.c.h.b16 %v2429
        %v2718 = vunpack.c.h.b16 %v2430
        %v2719 = vunpack.c.h.b16 %v2431
        %v2720 = vunpack.c.h.b16 %v2432
        %v2721 = vunpack.c.h.b16 %v2433
        %v2722 = vunpack.c.h.b16 %v2434
        %v2723 = vunpack.c.h.b16 %v2435
        %v2724 = vunpack.c.h.b16 %v2436
        %v2725 = vunpack.c.h.b16 %v2437
        %v2726 = vunpack.c.h.b16 %v2438
        %v2727 = vunpack.c.h.b16 %v2439
        %v2728 = vunpack.c.l.b16 %v2440
        %v2729 = vunpack.c.l.b16 %v2441
        %v2730 = vunpack.c.l.b16 %v2442
        %v2731 = vunpack.c.l.b16 %v2443
        %v2732 = vunpack.c.l.b16 %v2444
        %v2733 = vunpack.c.l.b16 %v2445
        %v2734 = vunpack.c.l.b16 %v2446
        %v2735 = vunpack.c.l.b16 %v2447
        %v2736 = vunpack.c.l.b16 %v2448
        %v2737 = vunpack.c.l.b16 %v2449
        %v2738 = vunpack.c.l.b16 %v2450
        %v2739 = vunpack.c.l.b16 %v2451
        %v2740 = vunpack.c.l.b16 %v2452
        %v2741 = vunpack.c.l.b16 %v2453
        %v2742 = vunpack.c.l.b16 %v2454
        %v2743 = vunpack.c.l.b16 %v2455
        %v2744 = vunpack.c.h.b16 %v2440
        %v2745 = vunpack.c.h.b16 %v2441
        %v2746 = vunpack.c.h.b16 %v2442
        %v2747 = vunpack.c.h.b16 %v2443
        %v2748 = vunpack.c.h.b16 %v2444
        %v2749 = vunpack.c.h.b16 %v2445
        %v2750 = vunpack.c.h.b16 %v2446
        %v2751 = vunpack.c.h.b16 %v2447
        %v2752 = vunpack.c.h.b16 %v2448
        %v2753 = vunpack.c.h.b16 %v2449
        %v2754 = vunpack.c.h.b16 %v2450
        %v2755 = vunpack.c.h.b16 %v2451
        %v2756 = vunpack.c.h.b16 %v2452
        %v2757 = vunpack.c.h.b16 %v2453
        %v2758 = vunpack.c.h.b16 %v2454
        %v2759 = vunpack.c.h.b16 %v2455
        %v2760 = vunpack.c.l.b16 %v2456
        %v2761 = vunpack.c.l.b16 %v2457
        %v2762 = vunpack.c.l.b16 %v2458
        %v2763 = vunpack.c.l.b16 %v2459
        %v2764 = vunpack.c.l.b16 %v2460
        %v2765 = vunpack.c.l.b16 %v2461
        %v2766 = vunpack.c.l.b16 %v2462
        %v2767 = vunpack.c.l.b16 %v2463
        %v2768 = vunpack.c.l.b16 %v2464
        %v2769 = vunpack.c.l.b16 %v2465
        %v2770 = vunpack.c.l.b16 %v2466
        %v2771 = vunpack.c.l.b16 %v2467
        %v2772 = vunpack.c.l.b16 %v2468
        %v2773 = vunpack.c.l.b16 %v2469
        %v2774 = vunpack.c.l.b16 %v2470
        %v2775 = vunpack.c.l.b16 %v2471
        %v2776 = vunpack.c.h.b16 %v2456
        %v2777 = vunpack.c.h.b16 %v2457
        %v2778 = vunpack.c.h.b16 %v2458
        %v2779 = vunpack.c.h.b16 %v2459
        %v2780 = vunpack.c.h.b16 %v2460
        %v2781 = vunpack.c.h.b16 %v2461
        %v2782 = vunpack.c.h.b16 %v2462
        %v2783 = vunpack.c.h.b16 %v2463
        %v2784 = vunpack.c.h.b16 %v2464
        %v2785 = vunpack.c.h.b16 %v2465
        %v2786 = vunpack.c.h.b16 %v2466
        %v2787 = vunpack.c.h.b16 %v2467
        %v2788 = vunpack.c.h.b16 %v2468
        %v2789 = vunpack.c.h.b16 %v2469
        %v2790 = vunpack.c.h.b16 %v2470
        %v2791 = vunpack.c.h.b16 %v2471
        %v2792 = vunpack.c.l.b16 %v2472
        %v2793 = vunpack.c.l.b16 %v2473
        %v2794 = vunpack.c.l.b16 %v2474
        %v2795 = vunpack.c.l.b16 %v2475
        %v2796 = vunpack.c.l.b16 %v2476
        %v2797 = vunpack.c.l.b16 %v2477
        %v2798 = vunpack.c.l.b16 %v2478
        %v2799 = vunpack.c.l.b16 %v2479
        %v2800 = vunpack.c.l.b16 %v2480
        %v2801 = vunpack.c.l.b16 %v2481
        %v2802 = vunpack.c.l.b16 %v2482
        %v2803 = vunpack.c.l.b16 %v2483
        %v2804 = vunpack.c.l.b16 %v2484
        %v2805 = vunpack.c.l.b16 %v2485
        %v2806 = vunpack.c.l.b16 %v2486
        %v2807 = vunpack.c.l.b16 %v2487
        %v2808 = vunpack.c.h.b16 %v2472
        %v2809 = vunpack.c.h.b16 %v2473
        %v2810 = vunpack.c.h.b16 %v2474
        %v2811 = vunpack.c.h.b16 %v2475
        %v2812 = vunpack.c.h.b16 %v2476
        %v2813 = vunpack.c.h.b16 %v2477
        %v2814 = vunpack.c.h.b16 %v2478
        %v2815 = vunpack.c.h.b16 %v2479
        %v2816 = vunpack.c.h.b16 %v2480
        %v2817 = vunpack.c.h.b16 %v2481
        %v2818 = vunpack.c.h.b16 %v2482
        %v2819 = vunpack.c.h.b16 %v2483
        %v2820 = vunpack.c.h.b16 %v2484
        %v2821 = vunpack.c.h.b16 %v2485
        %v2822 = vunpack.c.h.b16 %v2486
        %v2823 = vunpack.c.h.b16 %v2487
        %v2824 = vunpack.c.l.b16 %v2488
        %v2825 = vunpack.c.l.b16 %v2489
        %v2826 = vunpack.c.l.b16 %v2490
        %v2827 = vunpack.c.l.b16 %v2491
        %v2828 = vunpack.c.l.b16 %v2492
        %v2829 = vunpack.c.l.b16 %v2493
        %v2830 = vunpack.c.l.b16 %v2494
        %v2831 = vunpack.c.l.b16 %v2495
        %v2832 = vunpack.c.l.b16 %v2496
        %v2833 = vunpack.c.l.b16 %v2497
        %v2834 = vunpack.c.l.b16 %v2498
        %v2835 = vunpack.c.l.b16 %v2499
        %v2836 = vunpack.c.l.b16 %v2500
        %v2837 = vunpack.c.l.b16 %v2501
        %v2838 = vunpack.c.l.b16 %v2502
        %v2839 = vunpack.c.l.b16 %v2503
        %v2840 = vunpack.c.h.b16 %v2488
        %v2841 = vunpack.c.h.b16 %v2489
        %v2842 = vunpack.c.h.b16 %v2490
        %v2843 = vunpack.c.h.b16 %v2491
        %v2844 = vunpack.c.h.b16 %v2492
        %v2845 = vunpack.c.h.b16 %v2493
        %v2846 = vunpack.c.h.b16 %v2494
        %v2847 = vunpack.c.h.b16 %v2495
        %v2848 = vunpack.c.h.b16 %v2496
        %v2849 = vunpack.c.h.b16 %v2497
        %v2850 = vunpack.c.h.b16 %v2498
        %v2851 = vunpack.c.h.b16 %v2499
        %v2852 = vunpack.c.h.b16 %v2500
        %v2853 = vunpack.c.h.b16 %v2501
        %v2854 = vunpack.c.h.b16 %v2502
        %v2855 = vunpack.c.h.b16 %v2503
        %v2856 = vunpack.c.l.b16 %v2504
        %v2857 = vunpack.c.l.b16 %v2505
        %v2858 = vunpack.c.l.b16 %v2506
        %v2859 = vunpack.c.l.b16 %v2507
        %v2860 = vunpack.c.l.b16 %v2508
        %v2861 = vunpack.c.l.b16 %v2509
        %v2862 = vunpack.c.l.b16 %v2510
        %v2863 = vunpack.c.l.b16 %v2511
        %v2864 = vunpack.c.l.b16 %v2512
        %v2865 = vunpack.c.l.b16 %v2513
        %v2866 = vunpack.c.l.b16 %v2514
        %v2867 = vunpack.c.l.b16 %v2515
        %v2868 = vunpack.c.l.b16 %v2516
        %v2869 = vunpack.c.l.b16 %v2517
        %v2870 = vunpack.c.l.b16 %v2518
        %v2871 = vunpack.c.l.b16 %v2519
        %v2872 = vunpack.c.h.b16 %v2504
        %v2873 = vunpack.c.h.b16 %v2505
        %v2874 = vunpack.c.h.b16 %v2506
        %v2875 = vunpack.c.h.b16 %v2507
        %v2876 = vunpack.c.h.b16 %v2508
        %v2877 = vunpack.c.h.b16 %v2509
        %v2878 = vunpack.c.h.b16 %v2510
        %v2879 = vunpack.c.h.b16 %v2511
        %v2880 = vunpack.c.h.b16 %v2512
        %v2881 = vunpack.c.h.b16 %v2513
        %v2882 = vunpack.c.h.b16 %v2514
        %v2883 = vunpack.c.h.b16 %v2515
        %v2884 = vunpack.c.h.b16 %v2516
        %v2885 = vunpack.c.h.b16 %v2517
        %v2886 = vunpack.c.h.b16 %v2518
        %v2887 = vunpack.c.h.b16 %v2519
        %v2888 = vunpack.c.l.b16 %v2520
        %v2889 = vunpack.c.l.b16 %v2521
        %v2890 = vunpack.c.l.b16 %v2522
        %v2891 = vunpack.c.l.b16 %v2523
        %v2892 = vunpack.c.l.b16 %v2524
        %v2893 = vunpack.c.l.b16 %v2525
        %v2894 = vunpack.c.l.b16 %v2526
        %v2895 = vunpack.c.l.b16 %v2527
        %v2896 = vunpack.c.l.b16 %v2528
        %v2897 = vunpack.c.l.b16 %v2529
        %v2898 = vunpack.c.l.b16 %v2530
        %v2899 = vunpack.c.l.b16 %v2531
        %v2900 = vunpack.c.l.b16 %v2532
        %v2901 = vunpack.c.l.b16 %v2533
        %v2902 = vunpack.c.l.b16 %v2534
        %v2903 = vunpack.c.l.b16 %v2535
        %v2904 = vunpack.c.h.b16 %v2520
        %v2905 = vunpack.c.h.b16 %v2521
        %v2906 = vunpack.c.h.b16 %v2522
        %v2907 = vunpack.c.h.b16 %v2523
        %v2908 = vunpack.c.h.b16 %v2524
        %v2909 = vunpack.c.h.b16 %v2525
        %v2910 = vunpack.c.h.b16 %v2526
        %v2911 = vunpack.c.h.b16 %v2527
        %v2912 = vunpack.c.h.b16 %v2528
        %v2913 = vunpack.c.h.b16 %v2529
        %v2914 = vunpack.c.h.b16 %v2530
        %v2915 = vunpack.c.h.b16 %v2531
        %v2916 = vunpack.c.h.b16 %v2532
        %v2917 = vunpack.c.h.b16 %v2533
        %v2918 = vunpack.c.h.b16 %v2534
        %v2919 = vunpack.c.h.b16 %v2535
        %v2920 = vpack.c.b16 %v2665, %v2664
        %v2921 = vpack.c.b16 %v2667, %v2666
        %v2922 = vpack.c.b16 %v2669, %v2668
        %v2923 = vpack.c.b16 %v2671, %v2670
        %v2924 = vpack.c.b16 %v2673, %v2672
        %v2925 = vpack.c.b16 %v2675, %v2674
        %v2926 = vpack.c.b16 %v2677, %v2676
        %v2927 = vpack.c.b16 %v2679, %v2678
        %v2928 = vpack.c.b16 %v2681, %v2680
        %v2929 = vpack.c.b16 %v2683, %v2682
        %v2930 = vpack.c.b16 %v2685, %v2684
        %v2931 = vpack.c.b16 %v2687, %v2686
        %v2932 = vpack.c.b16 %v2689, %v2688
        %v2933 = vpack.c.b16 %v2691, %v2690
        %v2934 = vpack.c.b16 %v2693, %v2692
        %v2935 = vpack.c.b16 %v2695, %v2694
        %v2936 = vpack.c.b16 %v2697, %v2696
        %v2937 = vpack.c.b16 %v2699, %v2698
        %v2938 = vpack.c.b16 %v2701, %v2700
        %v2939 = vpack.c.b16 %v2703, %v2702
        %v2940 = vpack.c.b16 %v2705, %v2704
        %v2941 = vpack.c.b16 %v2707, %v2706
        %v2942 = vpack.c.b16 %v2709, %v2708
        %v2943 = vpack.c.b16 %v2711, %v2710
        %v2944 = vpack.c.b16 %v2713, %v2712
        %v2945 = vpack.c.b16 %v2715, %v2714
        %v2946 = vpack.c.b16 %v2717, %v2716
        %v2947 = vpack.c.b16 %v2719, %v2718
        %v2948 = vpack.c.b16 %v2721, %v2720
        %v2949 = vpack.c.b16 %v2723, %v2722
        %v2950 = vpack.c.b16 %v2725, %v2724
        %v2951 = vpack.c.b16 %v2727, %v2726
        %v2952 = vpack.c.b16 %v2729, %v2728
        %v2953 = vpack.c.b16 %v2731, %v2730
        %v2954 = vpack.c.b16 %v2733, %v2732
        %v2955 = vpack.c.b16 %v2735, %v2734
        %v2956 = vpack.c.b16 %v2737, %v2736
        %v2957 = vpack.c.b16 %v2739, %v2738
        %v2958 = vpack.c.b16 %v2741, %v2740
        %v2959 = vpack.c.b16 %v2743, %v2742
        %v2960 = vpack.c.b16 %v2745, %v2744
        %v2961 = vpack.c.b16 %v2747, %v2746
        %v2962 = vpack.c.b16 %v2749, %v2748
        %v2963 = vpack.c.b16 %v2751, %v2750
        %v2964 = vpack.c.b16 %v2753, %v2752
        %v2965 = vpack.c.b16 %v2755, %v2754
        %v2966 = vpack.c.b16 %v2757, %v2756
        %v2967 = vpack.c.b16 %v2759, %v2758
        %v2968 = vpack.c.b16 %v2761, %v2760
        %v2969 = vpack.c.b16 %v2763, %v2762
        %v2970 = vpack.c.b16 %v2765, %v2764
        %v2971 = vpack.c.b16 %v2767, %v2766
        %v2972 = vpack.c.b16 %v2769, %v2768
        %v2973 = vpack.c.b16 %v2771, %v2770
        %v2974 = vpack.c.b16 %v2773, %v2772
        %v2975 = vpack.c.b16 %v2775, %v2774
        %v2976 = vpack.c.b16 %v2777, %v2776
        %v2977 = vpack.c.b16 %v2779, %v2778
        %v2978 = vpack.c.b16 %v2781, %v2780
        %v2979 = vpack.c.b16 %v2783, %v2782
        %v2980 = vpack.c.b16 %v2785, %v2784
        %v2981 = vpack.c.b16 %v2787, %v2786
        %v2982 = vpack.c.b16 %v2789, %v2788
        %v2983 = vpack.c.b16 %v2791, %v2790
        %v2984 = vpack.c.b16 %v2793, %v2792
        %v2985 = vpack.c.b16 %v2795, %v2794
        %v2986 = vpack.c.b16 %v2797, %v2796
        %v2987 = vpack.c.b16 %v2799, %v2798
        %v2988 = vpack.c.b16 %v2801, %v2800
        %v2989 = vpack.c.b16 %v2803, %v2802
        %v2990 = vpack.c.b16 %v2805, %v2804
        %v2991 = vpack.c.b16 %v2807, %v2806
        %v2992 = vpack.c.b16 %v2809, %v2808
        %v2993 = vpack.c.b16 %v2811, %v2810
        %v2994 = vpack.c.b16 %v2813, %v2812
        %v2995 = vpack.c.b16 %v2815, %v2814
        %v2996 = vpack.c.b16 %v2817, %v2816
        %v2997 = vpack.c.b16 %v2819, %v2818
        %v2998 = vpack.c.b16 %v2821, %v2820
        %v2999 = vpack.c.b16 %v2823, %v2822
        %v3000 = vpack.c.b16 %v2825, %v2824
        %v3001 = vpack.c.b16 %v2827, %v2826
        %v3002 = vpack.c.b16 %v2829, %v2828
        %v3003 = vpack.c.b16 %v2831, %v2830
        %v3004 = vpack.c.b16 %v2833, %v2832
        %v3005 = vpack.c.b16 %v2835, %v2834
        %v3006 = vpack.c.b16 %v2837, %v2836
        %v3007 = vpack.c.b16 %v2839, %v2838
        %v3008 = vpack.c.b16 %v2841, %v2840
        %v3009 = vpack.c.b16 %v2843, %v2842
        %v3010 = vpack.c.b16 %v2845, %v2844
        %v3011 = vpack.c.b16 %v2847, %v2846
        %v3012 = vpack.c.b16 %v2849, %v2848
        %v3013 = vpack.c.b16 %v2851, %v2850
        %v3014 = vpack.c.b16 %v2853, %v2852
        %v3015 = vpack.c.b16 %v2855, %v2854
        %v3016 = vpack.c.b16 %v2857, %v2856
        %v3017 = vpack.c.b16 %v2859, %v2858
        %v3018 = vpack.c.b16 %v2861, %v2860
        %v3019 = vpack.c.b16 %v2863, %v2862
        %v3020 = vpack.c.b16 %v2865, %v2864
        %v3021 = vpack.c.b16 %v2867, %v2866
        %v3022 = vpack.c.b16 %v2869, %v2868
        %v3023 = vpack.c.b16 %v2871, %v2870
        %v3024 = vpack.c.b16 %v2873, %v2872
        %v3025 = vpack.c.b16 %v2875, %v2874
        %v3026 = vpack.c.b16 %v2877, %v2876
        %v3027 = vpack.c.b16 %v2879, %v2878
        %v3028 = vpack.c.b16 %v2881, %v2880
        %v3029 = vpack.c.b16 %v2883, %v2882
        %v3030 = vpack.c.b16 %v2885, %v2884
        %v3031 = vpack.c.b16 %v2887, %v2886
        %v3032 = vpack.c.b16 %v2889, %v2888
        %v3033 = vpack.c.b16 %v2891, %v2890
        %v3034 = vpack.c.b16 %v2893, %v2892
        %v3035 = vpack.c.b16 %v2895, %v2894
        %v3036 = vpack.c.b16 %v2897, %v2896
        %v3037 = vpack.c.b16 %v2899, %v2898
        %v3038 = vpack.c.b16 %v2901, %v2900
        %v3039 = vpack.c.b16 %v2903, %v2902
        %v3040 = vpack.c.b16 %v2905, %v2904
        %v3041 = vpack.c.b16 %v2907, %v2906
        %v3042 = vpack.c.b16 %v2909, %v2908
        %v3043 = vpack.c.b16 %v2911, %v2910
        %v3044 = vpack.c.b16 %v2913, %v2912
        %v3045 = vpack.c.b16 %v2915, %v2914
        %v3046 = vpack.c.b16 %v2917, %v2916
        %v3047 = vpack.c.b16 %v2919, %v2918
        %3176 = vst [vmem:[%s329] sm:$0xff] %v2920
        %3177 = vst [vmem:[%s329 + $0x8] sm:$0xff] %v2921
        %3178 = vst [vmem:[%s329 + $0x10] sm:$0xff] %v2922
        %3179 = vst [vmem:[%s329 + $0x18] sm:$0xff] %v2923
        %3180 = vst [vmem:[%s329 + $0x20] sm:$0xff] %v2924
        %3181 = vst [vmem:[%s329 + $0x28] sm:$0xff] %v2925
        %3182 = vst [vmem:[%s329 + $0x30] sm:$0xff] %v2926
        %3183 = vst [vmem:[%s329 + $0x38] sm:$0xff] %v2927
        %3184 = vst [vmem:[%s329 + $0x40] sm:$0xff] %v2928
        %3185 = vst [vmem:[%s329 + $0x48] sm:$0xff] %v2929
        %3186 = vst [vmem:[%s329 + $0x50] sm:$0xff] %v2930
        %3187 = vst [vmem:[%s329 + $0x58] sm:$0xff] %v2931
        %3188 = vst [vmem:[%s329 + $0x60] sm:$0xff] %v2932
        %3189 = vst [vmem:[%s329 + $0x68] sm:$0xff] %v2933
        %3190 = vst [vmem:[%s329 + $0x70] sm:$0xff] %v2934
        %3191 = vst [vmem:[%s329 + $0x78] sm:$0xff] %v2935
        %3192 = vst [vmem:[%s329 + $0x80] sm:$0xff] %v2936
        %3193 = vst [vmem:[%s329 + $0x88] sm:$0xff] %v2937
        %3194 = vst [vmem:[%s329 + $0x90] sm:$0xff] %v2938
        %3195 = vst [vmem:[%s329 + $0x98] sm:$0xff] %v2939
        %3196 = vst [vmem:[%s329 + $0xa0] sm:$0xff] %v2940
        %3197 = vst [vmem:[%s329 + $0xa8] sm:$0xff] %v2941
        %3198 = vst [vmem:[%s329 + $0xb0] sm:$0xff] %v2942
        %3199 = vst [vmem:[%s329 + $0xb8] sm:$0xff] %v2943
        %3200 = vst [vmem:[%s329 + $0xc0] sm:$0xff] %v2944
        %3201 = vst [vmem:[%s329 + $0xc8] sm:$0xff] %v2945
        %3202 = vst [vmem:[%s329 + $0xd0] sm:$0xff] %v2946
        %3203 = vst [vmem:[%s329 + $0xd8] sm:$0xff] %v2947
        %3204 = vst [vmem:[%s329 + $0xe0] sm:$0xff] %v2948
        %3205 = vst [vmem:[%s329 + $0xe8] sm:$0xff] %v2949
        %3206 = vst [vmem:[%s329 + $0xf0] sm:$0xff] %v2950
        %3207 = vst [vmem:[%s329 + $0xf8] sm:$0xff] %v2951
        %3208 = vst [vmem:[%s329 + $0x100] sm:$0xff] %v2952
        %3209 = vst [vmem:[%s329 + $0x108] sm:$0xff] %v2953
        %3210 = vst [vmem:[%s329 + $0x110] sm:$0xff] %v2954
        %3211 = vst [vmem:[%s329 + $0x118] sm:$0xff] %v2955
        %3212 = vst [vmem:[%s329 + $0x120] sm:$0xff] %v2956
        %3213 = vst [vmem:[%s329 + $0x128] sm:$0xff] %v2957
        %3214 = vst [vmem:[%s329 + $0x130] sm:$0xff] %v2958
        %3215 = vst [vmem:[%s329 + $0x138] sm:$0xff] %v2959
        %3216 = vst [vmem:[%s329 + $0x140] sm:$0xff] %v2960
        %3217 = vst [vmem:[%s329 + $0x148] sm:$0xff] %v2961
        %3218 = vst [vmem:[%s329 + $0x150] sm:$0xff] %v2962
        %3219 = vst [vmem:[%s329 + $0x158] sm:$0xff] %v2963
        %3220 = vst [vmem:[%s329 + $0x160] sm:$0xff] %v2964
        %3221 = vst [vmem:[%s329 + $0x168] sm:$0xff] %v2965
        %3222 = vst [vmem:[%s329 + $0x170] sm:$0xff] %v2966
        %3223 = vst [vmem:[%s329 + $0x178] sm:$0xff] %v2967
        %3224 = vst [vmem:[%s329 + $0x180] sm:$0xff] %v2968
        %3225 = vst [vmem:[%s329 + $0x188] sm:$0xff] %v2969
        %3226 = vst [vmem:[%s329 + $0x190] sm:$0xff] %v2970
        %3227 = vst [vmem:[%s329 + $0x198] sm:$0xff] %v2971
        %3228 = vst [vmem:[%s329 + $0x1a0] sm:$0xff] %v2972
        %3229 = vst [vmem:[%s329 + $0x1a8] sm:$0xff] %v2973
        %3230 = vst [vmem:[%s329 + $0x1b0] sm:$0xff] %v2974
        %3231 = vst [vmem:[%s329 + $0x1b8] sm:$0xff] %v2975
        %3232 = vst [vmem:[%s329 + $0x1c0] sm:$0xff] %v2976
        %3233 = vst [vmem:[%s329 + $0x1c8] sm:$0xff] %v2977
        %3234 = vst [vmem:[%s329 + $0x1d0] sm:$0xff] %v2978
        %3235 = vst [vmem:[%s329 + $0x1d8] sm:$0xff] %v2979
        %3236 = vst [vmem:[%s329 + $0x1e0] sm:$0xff] %v2980
        %3237 = vst [vmem:[%s329 + $0x1e8] sm:$0xff] %v2981
        %3238 = vst [vmem:[%s329 + $0x1f0] sm:$0xff] %v2982
        %3239 = vst [vmem:[%s329 + $0x1f8] sm:$0xff] %v2983
        %3240 = vst [vmem:[%s329 + $0x200] sm:$0xff] %v2984
        %3241 = vst [vmem:[%s329 + $0x208] sm:$0xff] %v2985
        %3242 = vst [vmem:[%s329 + $0x210] sm:$0xff] %v2986
        %3243 = vst [vmem:[%s329 + $0x218] sm:$0xff] %v2987
        %3244 = vst [vmem:[%s329 + $0x220] sm:$0xff] %v2988
        %3245 = vst [vmem:[%s329 + $0x228] sm:$0xff] %v2989
        %3246 = vst [vmem:[%s329 + $0x230] sm:$0xff] %v2990
        %3247 = vst [vmem:[%s329 + $0x238] sm:$0xff] %v2991
        %3248 = vst [vmem:[%s329 + $0x240] sm:$0xff] %v2992
        %3249 = vst [vmem:[%s329 + $0x248] sm:$0xff] %v2993
        %3250 = vst [vmem:[%s329 + $0x250] sm:$0xff] %v2994
        %3251 = vst [vmem:[%s329 + $0x258] sm:$0xff] %v2995
        %3252 = vst [vmem:[%s329 + $0x260] sm:$0xff] %v2996
        %3253 = vst [vmem:[%s329 + $0x268] sm:$0xff] %v2997
        %3254 = vst [vmem:[%s329 + $0x270] sm:$0xff] %v2998
        %3255 = vst [vmem:[%s329 + $0x278] sm:$0xff] %v2999
        %3256 = vst [vmem:[%s329 + $0x280] sm:$0xff] %v3000
        %3257 = vst [vmem:[%s329 + $0x288] sm:$0xff] %v3001
        %3258 = vst [vmem:[%s329 + $0x290] sm:$0xff] %v3002
        %3259 = vst [vmem:[%s329 + $0x298] sm:$0xff] %v3003
        %3260 = vst [vmem:[%s329 + $0x2a0] sm:$0xff] %v3004
        %3261 = vst [vmem:[%s329 + $0x2a8] sm:$0xff] %v3005
        %3262 = vst [vmem:[%s329 + $0x2b0] sm:$0xff] %v3006
        %3263 = vst [vmem:[%s329 + $0x2b8] sm:$0xff] %v3007
        %3264 = vst [vmem:[%s329 + $0x2c0] sm:$0xff] %v3008
        %3265 = vst [vmem:[%s329 + $0x2c8] sm:$0xff] %v3009
        %3266 = vst [vmem:[%s329 + $0x2d0] sm:$0xff] %v3010
        %3267 = vst [vmem:[%s329 + $0x2d8] sm:$0xff] %v3011
        %3268 = vst [vmem:[%s329 + $0x2e0] sm:$0xff] %v3012
        %3269 = vst [vmem:[%s329 + $0x2e8] sm:$0xff] %v3013
        %3270 = vst [vmem:[%s329 + $0x2f0] sm:$0xff] %v3014
        %3271 = vst [vmem:[%s329 + $0x2f8] sm:$0xff] %v3015
        %3272 = vst [vmem:[%s329 + $0x300] sm:$0xff] %v3016
        %3273 = vst [vmem:[%s329 + $0x308] sm:$0xff] %v3017
        %3274 = vst [vmem:[%s329 + $0x310] sm:$0xff] %v3018
        %3275 = vst [vmem:[%s329 + $0x318] sm:$0xff] %v3019
        %3276 = vst [vmem:[%s329 + $0x320] sm:$0xff] %v3020
        %3277 = vst [vmem:[%s329 + $0x328] sm:$0xff] %v3021
        %3278 = vst [vmem:[%s329 + $0x330] sm:$0xff] %v3022
        %3279 = vst [vmem:[%s329 + $0x338] sm:$0xff] %v3023
        %3280 = vst [vmem:[%s329 + $0x340] sm:$0xff] %v3024
        %3281 = vst [vmem:[%s329 + $0x348] sm:$0xff] %v3025
        %3282 = vst [vmem:[%s329 + $0x350] sm:$0xff] %v3026
        %3283 = vst [vmem:[%s329 + $0x358] sm:$0xff] %v3027
        %3284 = vst [vmem:[%s329 + $0x360] sm:$0xff] %v3028
        %3285 = vst [vmem:[%s329 + $0x368] sm:$0xff] %v3029
        %3286 = vst [vmem:[%s329 + $0x370] sm:$0xff] %v3030
        %3287 = vst [vmem:[%s329 + $0x378] sm:$0xff] %v3031
        %3288 = vst [vmem:[%s329 + $0x380] sm:$0xff] %v3032
        %3289 = vst [vmem:[%s329 + $0x388] sm:$0xff] %v3033
        %3290 = vst [vmem:[%s329 + $0x390] sm:$0xff] %v3034
        %3291 = vst [vmem:[%s329 + $0x398] sm:$0xff] %v3035
        %3292 = vst [vmem:[%s329 + $0x3a0] sm:$0xff] %v3036
        %3293 = vst [vmem:[%s329 + $0x3a8] sm:$0xff] %v3037
        %3294 = vst [vmem:[%s329 + $0x3b0] sm:$0xff] %v3038
        %3295 = vst [vmem:[%s329 + $0x3b8] sm:$0xff] %v3039
        %3296 = vst [vmem:[%s329 + $0x3c0] sm:$0xff] %v3040
        %3297 = vst [vmem:[%s329 + $0x3c8] sm:$0xff] %v3041
        %3298 = vst [vmem:[%s329 + $0x3d0] sm:$0xff] %v3042
        %3299 = vst [vmem:[%s329 + $0x3d8] sm:$0xff] %v3043
        %3300 = vst [vmem:[%s329 + $0x3e0] sm:$0xff] %v3044
        %3301 = vst [vmem:[%s329 + $0x3e8] sm:$0xff] %v3045
        %3302 = vst [vmem:[%s329 + $0x3f0] sm:$0xff] %v3046
        %3303 = vst [vmem:[%s329 + $0x3f8] sm:$0xff] %v3047
        %s3304 = sand.u32 %s190, 1
        %s3305 = scalar_lea.sflag [#allocation5], %s3304
        %s3306 = sand.u32 %s190, 1
        %s3307 = smul.addr %s3306, 1024
        %s3308 = scalar_lea.vmem [#allocation6], %s3307
        // Predicated region
        $region53: #{tpu_custom_call.1} parent=43 // pred_check
          %p3309 = pneg %p200
        $region54: #{tpu_custom_call.1} parent=43 // pred_check_branch
          %3311 = sbr.rel (%p3309) target = $region56
        $region55: #{tpu_custom_call.1} parent=43 // pred_region
          %s3312 = smul.u32 16, %s28
          %s3314 = ssub.s32 16384, 16384
          %3315 = vsyncadd %s3305, %s3314
          %s3316 = smul.addr %s3312, 16
          %s3317 = smul.addr %s27, 256
          %s3318 = sadd.s32 %s3316, %s3317
          %s3319 = smul.addr %s3318, 64
          %s3320 = scalar_lea.hbm %s6, %s3319
          %s3321 = sshll.u32 %s3308, 4
          %s3322 = int_to_ptr.vmem [resolvable:$true] %s3321
          %3327 = dma.vmem_to_hbm [thread:$0]  %s3322, 16384, %s3320, %s3305, 1024, 1024, 64
        $region56: #{tpu_custom_call.1} parent=43 // pred_fallthru
          _
      $region44: #{tpu_custom_call.1} parent=5 // pred_fallthru
        _
      %p3328 = scmp.le.s32.totalorder 2, %s18
      // Predicated region
      $region57: #{tpu_custom_call.1} parent=5 // pred_check
        %p3329 = pneg %p3328
      $region58: #{tpu_custom_call.1} parent=5 // pred_check_branch
        %3331 = sbr.rel (%p3329) target = $region60
      $region59: #{tpu_custom_call.1} parent=5 // pred_region
        %s3332 = ssub.s32 %s18, 2
        // Predicated region
        $region61: #{tpu_custom_call.1} parent=59 // pred_check
          %p3333 = pneg %p206
        $region62: #{tpu_custom_call.1} parent=59 // pred_check_branch
          %3335 = sbr.rel (%p3333) target = $region64
        $region63: #{tpu_custom_call.1} parent=59 // pred_region
          %s3336 = sand.u32 %s191, 1
          %s3337 = scalar_lea.sflag [#allocation5], %s3336
          %s3338 = sand.u32 %s191, 1
          %s3339 = smul.addr %s3338, 1024
          %s3340 = scalar_lea.vmem [#allocation6], %s3339
          %3341 = dma.done %s3337, 16384
        $region64: #{tpu_custom_call.1} parent=59 // pred_fallthru
          _
      $region60: #{tpu_custom_call.1} parent=5 // pred_fallthru
        _
    $region6: #{tpu_custom_call.1} parent=1 // loop_footer
      %s22 = sadd.s32 1, %s18
    $region7: #{tpu_custom_call.1} parent=1 // loop_footer_branch
      %17 = sbr.rel target = $region3
    $region8: #{tpu_custom_call.1} parent=1 // loop_exit
      _
    %3342 = vsyncpa [#allocation4], 1
    %s3343 = scalar_lea.sflag [#allocation4], 1
    %3344 = vsyncpa %s3343, 1
    %3345 = vsyncpa [#allocation5], 1
    %s3346 = scalar_lea.sflag [#allocation5], 1
    %3347 = vsyncpa %s3346, 1

</llo_original>
